<compile_context>
chip_gen: v7x
topology: tpu7x:2x2x1
jax: 0.10.0
libtpu: 0.0.40
codegen_flags: <defaults>
</compile_context>

<pallas_src>
import functools

import jax
import jax.numpy as jnp
from jax import lax
from jax.experimental import pallas as pl
from jax.experimental.pallas import tpu as pltpu


# ---------------------------------------------------------------------------
# Fused upsample + implicit-im2col conv body (shared by both passes)
# ---------------------------------------------------------------------------
def _upsample_conv_acc(x_ref, uhb_ref, uwt_ref, w_ref, *, Cin, H, W, Ho, Wo, Cout):
    """Returns the 3x3 conv accumulator (no bias), shape (Cout, Ho*Wo), f32.

    x_ref   : (1, Cin, H, W)        input image (NCHW block)
    uhb_ref : (Cin, Ho+2, H)  bf16  H-upsample matrix (zero-padded rows), per-channel
    uwt_ref : (W, Wo+2)       bf16  W-upsample matrix^T (zero-padded cols)
    w_ref   : (3, 3, Cout, Cin) bf16 conv weights per (kh, kw)
    """
    xb = x_ref[0].astype(jnp.bfloat16)                        # (Cin, H, W)

    # --- W-axis upsample (padding cols fused): (Cin*H, W) @ (W, Wo+2) ---
    a = jnp.dot(xb.reshape(Cin * H, W), uwt_ref[...],
                preferred_element_type=jnp.float32)            # (Cin*H, Wo+2)
    a = a.reshape(Cin, H, Wo + 2).astype(jnp.bfloat16)

    # --- H-axis upsample (padding rows fused) as a batched-over-Cin matmul ---
    up = jnp.einsum('cih,chw->ciw', uhb_ref[...], a,
                    preferred_element_type=jnp.float32)        # (Cin, Ho+2, Wo+2)
    up = up.astype(jnp.bfloat16)

    # --- implicit im2col: accumulate 9 shifted matmuls (K = Cin each) ---
    wts = w_ref[...]                                           # (3, 3, Cout, Cin)
    acc = jnp.zeros((Cout, Ho * Wo), jnp.float32)
    for kh in range(3):
        for kw in range(3):
            win = up[:, kh:kh + Ho, kw:kw + Wo].reshape(Cin, Ho * Wo)
            acc = acc + jnp.dot(wts[kh, kw], win,
                                preferred_element_type=jnp.float32)
    return acc                                                 # (Cout, Ho*Wo) f32


# ---------------------------------------------------------------------------
# Pass 1: per-image BN partial statistics (mean, sum of squared deviations)
# ---------------------------------------------------------------------------
def _stats_kernel(x_ref, uhb_ref, uwt_ref, w_ref, mean_ref, m2_ref, *, dims):
    Cin, H, W, Ho, Wo, Cout = dims
    acc = _upsample_conv_acc(x_ref, uhb_ref, uwt_ref, w_ref,
                             Cin=Cin, H=H, W=W, Ho=Ho, Wo=Wo, Cout=Cout)
    m = jnp.mean(acc, axis=1, keepdims=True)                   # (Cout, 1)
    d = acc - m
    mean_ref[0] = m
    m2_ref[0] = jnp.sum(d * d, axis=1, keepdims=True)


# ---------------------------------------------------------------------------
# Pass 2: fused conv (BN folded into weights/bias) + ReLU, NCHW output
# ---------------------------------------------------------------------------
def _apply_kernel(x_ref, uhb_ref, uwt_ref, w_ref, b_ref, o_ref, *, dims):
    Cin, H, W, Ho, Wo, Cout = dims
    acc = _upsample_conv_acc(x_ref, uhb_ref, uwt_ref, w_ref,
                             Cin=Cin, H=H, W=W, Ho=Ho, Wo=Wo, Cout=Cout)
    o_ref[0] = jnp.maximum(acc + b_ref[...], 0.0)              # (Cout, Ho*Wo)


# ---------------------------------------------------------------------------
# Helpers (plain-JAX glue on tiny per-channel data)
# ---------------------------------------------------------------------------
def _interp_matrix(n_in, n_out):
    """Bilinear interpolation matrix (align_corners=True), shape (n_out, n_in)."""
    if n_out == 1:
        pos = jnp.zeros((1,), jnp.float32)
    else:
        pos = jnp.arange(n_out, dtype=jnp.float32) * (n_in - 1) / (n_out - 1)
    lo = jnp.clip(jnp.floor(pos).astype(jnp.int32), 0, n_in - 1)
    hi = jnp.minimum(lo + 1, n_in - 1)
    w = pos - lo.astype(jnp.float32)
    return ((1.0 - w)[:, None] * jax.nn.one_hot(lo, n_in, dtype=jnp.float32)
            + w[:, None] * jax.nn.one_hot(hi, n_in, dtype=jnp.float32))


# ---------------------------------------------------------------------------
# Forward pass
# ---------------------------------------------------------------------------
def upsample_conv_block(x, conv_w, conv_b, gamma, beta, *, up_scale=2, eps=1e-5):
    N, Cin, H, W = x.shape
    Cout = conv_w.shape[0]
    Ho, Wo = H * up_scale, W * up_scale
    dims = (Cin, H, W, Ho, Wo, Cout)

    # Interp matrices with the conv's 1-pixel zero padding fused in.
    uh = _interp_matrix(H, Ho)                                  # (Ho, H)
    uh_pad = jnp.pad(uh, ((1, 1), (0, 0)))                      # (Ho+2, H)
    uhb = jnp.broadcast_to(uh_pad[None], (Cin, Ho + 2, H)).astype(jnp.bfloat16)
    uwt_pad = jnp.pad(_interp_matrix(W, Wo).T,
                      ((0, 0), (1, 1))).astype(jnp.bfloat16)    # (W, Wo+2)

    # Conv weights rearranged to per-(kh, kw) (Cout, Cin) matrices.
    w_k = jnp.transpose(conv_w, (2, 3, 0, 1))                   # (3, 3, Cout, Cin) f32
    w_k_b = w_k.astype(jnp.bfloat16)

    x_spec = pl.BlockSpec((1, Cin, H, W), lambda n: (n, 0, 0, 0))
    uhb_spec = pl.BlockSpec((Cin, Ho + 2, H), lambda n: (0, 0, 0))
    uwt_spec = pl.BlockSpec((W, Wo + 2), lambda n: (0, 0))
    w_spec = pl.BlockSpec((3, 3, Cout, Cin), lambda n: (0, 0, 0, 0))

    # ---- pass 1: fused upsample+conv, per-image partial BN statistics ----
    mean_n, m2_n = pl.pallas_call(
        functools.partial(_stats_kernel, dims=dims),
        out_shape=(jax.ShapeDtypeStruct((N, Cout, 1), jnp.float32),
                   jax.ShapeDtypeStruct((N, Cout, 1), jnp.float32)),
        grid=(N,),
        in_specs=[x_spec, uhb_spec, uwt_spec, w_spec],
        out_specs=(pl.BlockSpec((1, Cout, 1), lambda n: (n, 0, 0)),
                   pl.BlockSpec((1, Cout, 1), lambda n: (n, 0, 0))),
        compiler_params=pltpu.CompilerParams(dimension_semantics=("parallel",)),
    )(x, uhb, uwt_pad, w_k_b)

    # ---- combine per-image stats (parallel-variance combine, biased var) ----
    cnt = Ho * Wo
    mean_n = mean_n[:, :, 0]                                    # (N, Cout)
    m2_n = m2_n[:, :, 0]                                        # (N, Cout)
    mean_c = jnp.mean(mean_n, axis=0)                           # conv-only mean
    var_c = (jnp.sum(m2_n, axis=0)
             + cnt * jnp.sum((mean_n - mean_c) ** 2, axis=0)) / (N * cnt)
    mean_y = mean_c + conv_b                                    # bias shifts mean only
    scale = gamma * lax.rsqrt(var_c + eps)
    shift = beta - mean_y * scale

    # ---- fold BN into the conv: W' = W * scale[cout], b' = b*scale + shift ----
    w_fold = (w_k * scale[None, None, :, None]).astype(jnp.bfloat16)
    b_fold = (conv_b * scale + shift).reshape(Cout, 1).astype(jnp.float32)

    # ---- pass 2: fused upsample + BN-folded conv + ReLU, lane-dense NCHW out ----
    out = pl.pallas_call(
        functools.partial(_apply_kernel, dims=dims),
        out_shape=jax.ShapeDtypeStruct((N, Cout, Ho * Wo), jnp.float32),
        grid=(N,),
        in_specs=[x_spec, uhb_spec, uwt_spec, w_spec,
                  pl.BlockSpec((Cout, 1), lambda n: (0, 0))],
        out_specs=pl.BlockSpec((1, Cout, Ho * Wo), lambda n: (n, 0, 0)),
        compiler_params=pltpu.CompilerParams(dimension_semantics=("parallel",)),
    )(x, uhb, uwt_pad, w_fold, b_fold)

    return out.reshape(N, Cout, Ho, Wo)    # row-major contiguous -> free reshape


# ---------------------------------------------------------------------------
# Pure-JAX f32 reference (for a sanity check)
# ---------------------------------------------------------------------------
def reference(x, conv_w, conv_b, gamma, beta, up_scale=2, eps=1e-5):
    HIGH = lax.Precision.HIGHEST
    N, Cin, H, W = x.shape
    Ho, Wo = H * up_scale, W * up_scale
    uh = _interp_matrix(H, Ho)
    uw = _interp_matrix(W, Wo)
    up = jnp.einsum('oh,nchw,pw->ncop', uh, x, uw, precision=HIGH)
    y = lax.conv_general_dilated(up, conv_w, (1, 1), ((1, 1), (1, 1)),
                                 dimension_numbers=('NCHW', 'OIHW', 'NCHW'),
                                 precision=HIGH) + conv_b[None, :, None, None]
    mean = y.mean(axis=(0, 2, 3), keepdims=True)
    var = ((y - mean) ** 2).mean(axis=(0, 2, 3), keepdims=True)   # biased (train mode)
    yn = (y - mean) / jnp.sqrt(var + eps) * gamma[None, :, None, None] \
         + beta[None, :, None, None]
    return jnp.maximum(yn, 0.0)


# ---------------------------------------------------------------------------
if __name__ == "__main__":
    N, Cin, Cout, H, W = 2, 4, 8, 16, 16

    key = jax.random.PRNGKey(0)
    kx, kw, kb, kg, kbt = jax.random.split(key, 5)

    x = jax.random.normal(kx, (N, Cin, H, W), dtype=jnp.float32)
    conv_w = jax.random.normal(kw, (Cout, Cin, 3, 3), dtype=jnp.float32) \
             * (1.0 / jnp.sqrt(Cin * 9.0))
    conv_b = jax.random.normal(kb, (Cout,), dtype=jnp.float32) * 0.1
    gamma = 1.0 + 0.1 * jax.random.normal(kg, (Cout,), dtype=jnp.float32)
    beta = 0.1 * jax.random.normal(kbt, (Cout,), dtype=jnp.float32)

    out = jax.block_until_ready(
        upsample_conv_block(x, conv_w, conv_b, gamma, beta))
    assert out.shape == (N, Cout, 2 * H, 2 * W)
    assert bool(jnp.all(jnp.isfinite(out)))

    ref = jax.block_until_ready(reference(x, conv_w, conv_b, gamma, beta))
    # bf16 MXU operands (f32 accumulate) vs f32 reference -> loose tolerance.
    max_diff = float(jnp.max(jnp.abs(out - ref)))
    assert jnp.allclose(out, ref, atol=5e-2, rtol=5e-2), \
        f"max abs diff {max_diff}"

    print("KERNEL_OK")
</pallas_src>

<mosaic_0001>
module attributes {stable_mosaic.version = 11 : i64} {
  func.func @_stats_kernel(%arg0: i32, %arg1: memref<1x4x16x16xf32, #tpu.memory_space<vmem>>, %arg2: memref<4x34x16xbf16, #tpu.memory_space<vmem>>, %arg3: memref<16x34xbf16, #tpu.memory_space<vmem>>, %arg4: memref<3x3x8x4xbf16, #tpu.memory_space<vmem>>, %arg5: memref<1x8x1xf32, #tpu.memory_space<vmem>>, %arg6: memref<1x8x1xf32, #tpu.memory_space<vmem>>) attributes {dimension_semantics = [#tpu.dimension_semantics<parallel>], iteration_bounds = array<i64: 2>, scalar_prefetch = 0 : i64, scratch_operands = 0 : i64, tpu.core_type = #tpu.core_type<tc>, window_params = [{transform_indices = @transform_0, window_bounds = array<i64: 1, 4, 16, 16>}, {pipeline_mode = #tpu.pipeline_mode<synchronous>, transform_indices = @transform_1, window_bounds = array<i64: 4, 34, 16>}, {pipeline_mode = #tpu.pipeline_mode<synchronous>, transform_indices = @transform_2, window_bounds = array<i64: 16, 34>}, {pipeline_mode = #tpu.pipeline_mode<synchronous>, transform_indices = @transform_3, window_bounds = array<i64: 3, 3, 8, 4>}, {transform_indices = @transform_4, window_bounds = array<i64: 1, 8, 1>}, {transform_indices = @transform_5, window_bounds = array<i64: 1, 8, 1>}]} {
    %c0 = arith.constant 0 : index
    %c0_0 = arith.constant 0 : index
    %c0_1 = arith.constant 0 : index
    %c0_2 = arith.constant 0 : index
    %0 = vector.load %arg1[%c0, %c0_0, %c0_1, %c0_2] : memref<1x4x16x16xf32, #tpu.memory_space<vmem>>, vector<1x4x16x16xf32>
    %1 = vector.shape_cast %0 : vector<1x4x16x16xf32> to vector<4x16x16xf32>
    %2 = arith.truncf %1 : vector<4x16x16xf32> to vector<4x16x16xbf16>
    %3 = vector.shape_cast %2 : vector<4x16x16xbf16> to vector<64x16xbf16>
    %c0_3 = arith.constant 0 : index
    %c0_4 = arith.constant 0 : index
    %4 = vector.load %arg3[%c0_3, %c0_4] : memref<16x34xbf16, #tpu.memory_space<vmem>>, vector<16x34xbf16>
    %cst = arith.constant dense<0.000000e+00> : vector<64x34xf32>
    %5 = tpu.matmul %3, %4, %cst {dimension_numbers = #tpu.dot_dimension_numbers<[1], [0], [0], [1], [0, 0, 1, 1], [], []>} : vector<64x16xbf16>, vector<16x34xbf16>, vector<64x34xf32> -> vector<64x34xf32>
    %6 = vector.shape_cast %5 : vector<64x34xf32> to vector<4x16x34xf32>
    %7 = arith.truncf %6 : vector<4x16x34xf32> to vector<4x16x34xbf16>
    %c0_5 = arith.constant 0 : index
    %c0_6 = arith.constant 0 : index
    %c0_7 = arith.constant 0 : index
    %8 = vector.load %arg2[%c0_5, %c0_6, %c0_7] : memref<4x34x16xbf16, #tpu.memory_space<vmem>>, vector<4x34x16xbf16>
    "tpu.trace_start"() <{level = 10 : i32, message = "cih,chw->ciw"}> : () -> ()
    %cst_8 = arith.constant dense<0.000000e+00> : vector<4x34x34xf32>
    %9 = tpu.matmul %8, %7, %cst_8 {dimension_numbers = #tpu.dot_dimension_numbers<[2], [1], [1], [2], [0, 0, 0, 1, 1, 2], [0], [0]>} : vector<4x34x16xbf16>, vector<4x16x34xbf16>, vector<4x34x34xf32> -> vector<4x34x34xf32>
    "tpu.trace_stop"() : () -> ()
    %10 = arith.truncf %9 : vector<4x34x34xf32> to vector<4x34x34xbf16>
    %c0_9 = arith.constant 0 : index
    %c0_10 = arith.constant 0 : index
    %c0_11 = arith.constant 0 : index
    %c0_12 = arith.constant 0 : index
    %11 = vector.load %arg4[%c0_9, %c0_10, %c0_11, %c0_12] : memref<3x3x8x4xbf16, #tpu.memory_space<vmem>>, vector<3x3x8x4xbf16>
    %cst_13 = arith.constant 0.000000e+00 : f32
    %12 = vector.broadcast %cst_13 : f32 to vector<8x1024xf32>
    %13 = vector.extract_strided_slice %10 {offsets = [0, 0, 0], sizes = [4, 32, 32], strides = [1, 1, 1]} : vector<4x34x34xbf16> to vector<4x32x32xbf16>
    %14 = vector.shape_cast %13 : vector<4x32x32xbf16> to vector<4x1024xbf16>
    %15 = vector.extract_strided_slice %11 {offsets = [0, 0, 0, 0], sizes = [1, 1, 8, 4], strides = [1, 1, 1, 1]} : vector<3x3x8x4xbf16> to vector<1x1x8x4xbf16>
    %16 = vector.shape_cast %15 : vector<1x1x8x4xbf16> to vector<8x4xbf16>
    %cst_14 = arith.constant dense<0.000000e+00> : vector<8x1024xf32>
    %17 = tpu.matmul %16, %14, %cst_14 {dimension_numbers = #tpu.dot_dimension_numbers<[1], [0], [0], [1], [0, 0, 1, 1], [], []>} : vector<8x4xbf16>, vector<4x1024xbf16>, vector<8x1024xf32> -> vector<8x1024xf32>
    %18 = arith.addf %12, %17 : vector<8x1024xf32>
    %19 = vector.extract_strided_slice %10 {offsets = [0, 0, 1], sizes = [4, 32, 32], strides = [1, 1, 1]} : vector<4x34x34xbf16> to vector<4x32x32xbf16>
    %20 = vector.shape_cast %19 : vector<4x32x32xbf16> to vector<4x1024xbf16>
    %21 = vector.extract_strided_slice %11 {offsets = [0, 1, 0, 0], sizes = [1, 1, 8, 4], strides = [1, 1, 1, 1]} : vector<3x3x8x4xbf16> to vector<1x1x8x4xbf16>
    %22 = vector.shape_cast %21 : vector<1x1x8x4xbf16> to vector<8x4xbf16>
    %cst_15 = arith.constant dense<0.000000e+00> : vector<8x1024xf32>
    %23 = tpu.matmul %22, %20, %cst_15 {dimension_numbers = #tpu.dot_dimension_numbers<[1], [0], [0], [1], [0, 0, 1, 1], [], []>} : vector<8x4xbf16>, vector<4x1024xbf16>, vector<8x1024xf32> -> vector<8x1024xf32>
    %24 = arith.addf %18, %23 : vector<8x1024xf32>
    %25 = vector.extract_strided_slice %10 {offsets = [0, 0, 2], sizes = [4, 32, 32], strides = [1, 1, 1]} : vector<4x34x34xbf16> to vector<4x32x32xbf16>
    %26 = vector.shape_cast %25 : vector<4x32x32xbf16> to vector<4x1024xbf16>
    %27 = vector.extract_strided_slice %11 {offsets = [0, 2, 0, 0], sizes = [1, 1, 8, 4], strides = [1, 1, 1, 1]} : vector<3x3x8x4xbf16> to vector<1x1x8x4xbf16>
    %28 = vector.shape_cast %27 : vector<1x1x8x4xbf16> to vector<8x4xbf16>
    %cst_16 = arith.constant dense<0.000000e+00> : vector<8x1024xf32>
    %29 = tpu.matmul %28, %26, %cst_16 {dimension_numbers = #tpu.dot_dimension_numbers<[1], [0], [0], [1], [0, 0, 1, 1], [], []>} : vector<8x4xbf16>, vector<4x1024xbf16>, vector<8x1024xf32> -> vector<8x1024xf32>
    %30 = arith.addf %24, %29 : vector<8x1024xf32>
    %31 = vector.extract_strided_slice %10 {offsets = [0, 1, 0], sizes = [4, 32, 32], strides = [1, 1, 1]} : vector<4x34x34xbf16> to vector<4x32x32xbf16>
    %32 = vector.shape_cast %31 : vector<4x32x32xbf16> to vector<4x1024xbf16>
    %33 = vector.extract_strided_slice %11 {offsets = [1, 0, 0, 0], sizes = [1, 1, 8, 4], strides = [1, 1, 1, 1]} : vector<3x3x8x4xbf16> to vector<1x1x8x4xbf16>
    %34 = vector.shape_cast %33 : vector<1x1x8x4xbf16> to vector<8x4xbf16>
    %cst_17 = arith.constant dense<0.000000e+00> : vector<8x1024xf32>
    %35 = tpu.matmul %34, %32, %cst_17 {dimension_numbers = #tpu.dot_dimension_numbers<[1], [0], [0], [1], [0, 0, 1, 1], [], []>} : vector<8x4xbf16>, vector<4x1024xbf16>, vector<8x1024xf32> -> vector<8x1024xf32>
    %36 = arith.addf %30, %35 : vector<8x1024xf32>
    %37 = vector.extract_strided_slice %10 {offsets = [0, 1, 1], sizes = [4, 32, 32], strides = [1, 1, 1]} : vector<4x34x34xbf16> to vector<4x32x32xbf16>
    %38 = vector.shape_cast %37 : vector<4x32x32xbf16> to vector<4x1024xbf16>
    %39 = vector.extract_strided_slice %11 {offsets = [1, 1, 0, 0], sizes = [1, 1, 8, 4], strides = [1, 1, 1, 1]} : vector<3x3x8x4xbf16> to vector<1x1x8x4xbf16>
    %40 = vector.shape_cast %39 : vector<1x1x8x4xbf16> to vector<8x4xbf16>
    %cst_18 = arith.constant dense<0.000000e+00> : vector<8x1024xf32>
    %41 = tpu.matmul %40, %38, %cst_18 {dimension_numbers = #tpu.dot_dimension_numbers<[1], [0], [0], [1], [0, 0, 1, 1], [], []>} : vector<8x4xbf16>, vector<4x1024xbf16>, vector<8x1024xf32> -> vector<8x1024xf32>
    %42 = arith.addf %36, %41 : vector<8x1024xf32>
    %43 = vector.extract_strided_slice %10 {offsets = [0, 1, 2], sizes = [4, 32, 32], strides = [1, 1, 1]} : vector<4x34x34xbf16> to vector<4x32x32xbf16>
    %44 = vector.shape_cast %43 : vector<4x32x32xbf16> to vector<4x1024xbf16>
    %45 = vector.extract_strided_slice %11 {offsets = [1, 2, 0, 0], sizes = [1, 1, 8, 4], strides = [1, 1, 1, 1]} : vector<3x3x8x4xbf16> to vector<1x1x8x4xbf16>
    %46 = vector.shape_cast %45 : vector<1x1x8x4xbf16> to vector<8x4xbf16>
    %cst_19 = arith.constant dense<0.000000e+00> : vector<8x1024xf32>
    %47 = tpu.matmul %46, %44, %cst_19 {dimension_numbers = #tpu.dot_dimension_numbers<[1], [0], [0], [1], [0, 0, 1, 1], [], []>} : vector<8x4xbf16>, vector<4x1024xbf16>, vector<8x1024xf32> -> vector<8x1024xf32>
    %48 = arith.addf %42, %47 : vector<8x1024xf32>
    %49 = vector.extract_strided_slice %10 {offsets = [0, 2, 0], sizes = [4, 32, 32], strides = [1, 1, 1]} : vector<4x34x34xbf16> to vector<4x32x32xbf16>
    %50 = vector.shape_cast %49 : vector<4x32x32xbf16> to vector<4x1024xbf16>
    %51 = vector.extract_strided_slice %11 {offsets = [2, 0, 0, 0], sizes = [1, 1, 8, 4], strides = [1, 1, 1, 1]} : vector<3x3x8x4xbf16> to vector<1x1x8x4xbf16>
    %52 = vector.shape_cast %51 : vector<1x1x8x4xbf16> to vector<8x4xbf16>
    %cst_20 = arith.constant dense<0.000000e+00> : vector<8x1024xf32>
    %53 = tpu.matmul %52, %50, %cst_20 {dimension_numbers = #tpu.dot_dimension_numbers<[1], [0], [0], [1], [0, 0, 1, 1], [], []>} : vector<8x4xbf16>, vector<4x1024xbf16>, vector<8x1024xf32> -> vector<8x1024xf32>
    %54 = arith.addf %48, %53 : vector<8x1024xf32>
    %55 = vector.extract_strided_slice %10 {offsets = [0, 2, 1], sizes = [4, 32, 32], strides = [1, 1, 1]} : vector<4x34x34xbf16> to vector<4x32x32xbf16>
    %56 = vector.shape_cast %55 : vector<4x32x32xbf16> to vector<4x1024xbf16>
    %57 = vector.extract_strided_slice %11 {offsets = [2, 1, 0, 0], sizes = [1, 1, 8, 4], strides = [1, 1, 1, 1]} : vector<3x3x8x4xbf16> to vector<1x1x8x4xbf16>
    %58 = vector.shape_cast %57 : vector<1x1x8x4xbf16> to vector<8x4xbf16>
    %cst_21 = arith.constant dense<0.000000e+00> : vector<8x1024xf32>
    %59 = tpu.matmul %58, %56, %cst_21 {dimension_numbers = #tpu.dot_dimension_numbers<[1], [0], [0], [1], [0, 0, 1, 1], [], []>} : vector<8x4xbf16>, vector<4x1024xbf16>, vector<8x1024xf32> -> vector<8x1024xf32>
    %60 = arith.addf %54, %59 : vector<8x1024xf32>
    %61 = vector.extract_strided_slice %10 {offsets = [0, 2, 2], sizes = [4, 32, 32], strides = [1, 1, 1]} : vector<4x34x34xbf16> to vector<4x32x32xbf16>
    %62 = vector.shape_cast %61 : vector<4x32x32xbf16> to vector<4x1024xbf16>
    %63 = vector.extract_strided_slice %11 {offsets = [2, 2, 0, 0], sizes = [1, 1, 8, 4], strides = [1, 1, 1, 1]} : vector<3x3x8x4xbf16> to vector<1x1x8x4xbf16>
    %64 = vector.shape_cast %63 : vector<1x1x8x4xbf16> to vector<8x4xbf16>
    %cst_22 = arith.constant dense<0.000000e+00> : vector<8x1024xf32>
    %65 = tpu.matmul %64, %62, %cst_22 {dimension_numbers = #tpu.dot_dimension_numbers<[1], [0], [0], [1], [0, 0, 1, 1], [], []>} : vector<8x4xbf16>, vector<4x1024xbf16>, vector<8x1024xf32> -> vector<8x1024xf32>
    %66 = arith.addf %60, %65 : vector<8x1024xf32>
    %cst_23 = arith.constant dense<0.000000e+00> : vector<8xf32>
    %67 = vector.multi_reduction <add>, %66, %cst_23 [1] : vector<8x1024xf32> to vector<8xf32>
    %68 = vector.shape_cast %67 : vector<8xf32> to vector<8x1xf32>
    %cst_24 = arith.constant 1.024000e+03 : f32
    %69 = vector.broadcast %cst_24 : f32 to vector<8x1xf32>
    %70 = arith.divf %68, %69 : vector<8x1xf32>
    %71 = vector.broadcast %70 : vector<8x1xf32> to vector<8x1024xf32>
    %72 = arith.subf %66, %71 : vector<8x1024xf32>
    %c0_25 = arith.constant 0 : index
    %c0_26 = arith.constant 0 : index
    %c0_27 = arith.constant 0 : index
    %73 = vector.load %arg5[%c0_25, %c0_26, %c0_27] : memref<1x8x1xf32, #tpu.memory_space<vmem>>, vector<1x8x1xf32>
    %74 = vector.shape_cast %73 : vector<1x8x1xf32> to vector<8x1xf32>
    %75 = vector.shape_cast %70 : vector<8x1xf32> to vector<1x8x1xf32>
    tpu.vector_store %arg5[%c0_25, %c0_26, %c0_27], %75 {strides = array<i32>} : memref<1x8x1xf32, #tpu.memory_space<vmem>>, vector<1x8x1xf32>,
    %76 = arith.mulf %72, %72 : vector<8x1024xf32>
    %cst_28 = arith.constant dense<0.000000e+00> : vector<8xf32>
    %77 = vector.multi_reduction <add>, %76, %cst_28 [1] : vector<8x1024xf32> to vector<8xf32>
    %78 = vector.shape_cast %77 : vector<8xf32> to vector<8x1xf32>
    %c0_29 = arith.constant 0 : index
    %c0_30 = arith.constant 0 : index
    %c0_31 = arith.constant 0 : index
    %79 = vector.load %arg6[%c0_29, %c0_30, %c0_31] : memref<1x8x1xf32, #tpu.memory_space<vmem>>, vector<1x8x1xf32>
    %80 = vector.shape_cast %79 : vector<1x8x1xf32> to vector<8x1xf32>
    %81 = vector.shape_cast %78 : vector<8x1xf32> to vector<1x8x1xf32>
    tpu.vector_store %arg6[%c0_29, %c0_30, %c0_31], %81 {strides = array<i32>} : memref<1x8x1xf32, #tpu.memory_space<vmem>>, vector<1x8x1xf32>,
    return
  }
  func.func @transform_0(%arg0: i32) -> (i32, i32, i32, i32) {
    %c0_i32 = arith.constant 0 : i32
    %c0_i32_0 = arith.constant 0 : i32
    %c0_i32_1 = arith.constant 0 : i32
    %c0_i32_2 = arith.constant 0 : i32
    return %arg0, %c0_i32, %c0_i32_0, %c0_i32_1 : i32, i32, i32, i32
  }
  func.func @transform_1(%arg0: i32) -> (i32, i32, i32) {
    %c0_i32 = arith.constant 0 : i32
    %c0_i32_0 = arith.constant 0 : i32
    %c0_i32_1 = arith.constant 0 : i32
    %c0_i32_2 = arith.constant 0 : i32
    return %c0_i32, %c0_i32_0, %c0_i32_1 : i32, i32, i32
  }
  func.func @transform_2(%arg0: i32) -> (i32, i32) {
    %c0_i32 = arith.constant 0 : i32
    %c0_i32_0 = arith.constant 0 : i32
    %c0_i32_1 = arith.constant 0 : i32
    return %c0_i32, %c0_i32_0 : i32, i32
  }
  func.func @transform_3(%arg0: i32) -> (i32, i32, i32, i32) {
    %c0_i32 = arith.constant 0 : i32
    %c0_i32_0 = arith.constant 0 : i32
    %c0_i32_1 = arith.constant 0 : i32
    %c0_i32_2 = arith.constant 0 : i32
    %c0_i32_3 = arith.constant 0 : i32
    return %c0_i32, %c0_i32_0, %c0_i32_1, %c0_i32_2 : i32, i32, i32, i32
  }
  func.func @transform_4(%arg0: i32) -> (i32, i32, i32) {
    %c0_i32 = arith.constant 0 : i32
    %c0_i32_0 = arith.constant 0 : i32
    %c0_i32_1 = arith.constant 0 : i32
    return %arg0, %c0_i32, %c0_i32_0 : i32, i32, i32
  }
  func.func @transform_5(%arg0: i32) -> (i32, i32, i32) {
    %c0_i32 = arith.constant 0 : i32
    %c0_i32_0 = arith.constant 0 : i32
    %c0_i32_1 = arith.constant 0 : i32
    return %arg0, %c0_i32, %c0_i32_0 : i32, i32, i32
  }
}

</mosaic_0001>

<llo_original>
// kernel: tpu_custom_call.1
$region0: #{tpu_custom_call.1}
  #allocation0 [shape = 'u32[]', space=smem, size = 0x4, offset = 0x4, fixed_abs, tag = 'smem constant byte address 0x4 - core index']
  #allocation1 [shape = 'u32[144,128]{1,0:T(1,128)}', space=vmem, size = 0x12000, scoped, tag = 'internal scratch']
  %s0 = inlined_call_operand.vmem [shape: f32[2,4,16,16], index: 0, kind: input, shape index: {}]
  %s1 = inlined_call_operand.vmem [shape: bf16[4,34,16], index: 1, kind: input, shape index: {}]
  %s2 = inlined_call_operand.vmem [shape: bf16[16,34], index: 2, kind: input, shape index: {}]
  %s3 = inlined_call_operand.vmem [shape: bf16[3,3,8,4], index: 3, kind: input, shape index: {}]
  %s4 = inlined_call_operand.vmem [shape: f32[2,8,1], index: 4, kind: output, shape index: {0}]
  %s5 = inlined_call_operand.vmem [shape: f32[2,8,1], index: 5, kind: output, shape index: {1}]
  %6 = xla_tuple %s4, %s5
  %s7 = sld [smem:[#allocation0]]
  $region57: #{tpu_custom_call.1} parent=0
    _
  %s9 = ssub.s32 1, %s7
  %s10 = scalar_select 0, %s9, %s7
  loop: start=0, step=1, limit=4
  $region2: #{tpu_custom_call.1} parent=0 // loop_pre_header
    _
  $region3: #{tpu_custom_call.1} parent=0 // loop_header
    %s12 = sphi 0, %s16
    %p13 = scmp.ge.s32.totalorder %s12, 4
    %s22 = sphi 0, %s24
    %s25 = sphi 0, %s22
    %s26 = sphi 0, %s25
    %s42 = sphi 0, %s26
    %s46 = sphi 0, %s46
    %s48 = sphi 0, %s46
    %s49 = sphi 0, %s48
    %s63 = sphi 0, %s49
    %s67 = sphi 0, %s67
    %s69 = sphi 0, %s67
    %s70 = sphi 0, %s69
    %s84 = sphi 0, %s70
    %s88 = sphi 0, %s88
    %s90 = sphi 0, %s88
    %s91 = sphi 0, %s90
    %s105 = sphi 0, %s91
    %s111 = sphi 0, %s113
    %s114 = sphi 0, %s111
    %s115 = sphi 0, %s114
    %s131 = sphi 0, %s115
    %s137 = sphi 0, %s139
    %s140 = sphi 0, %s137
    %s141 = sphi 0, %s140
    %s157 = sphi 0, %s141
  $region4: #{tpu_custom_call.1} parent=0 // loop_header_branch
    %15 = sbr.rel (%p13) target = $region8
  $region5: #{tpu_custom_call.1} parent=0 // loop_body
    %s17 = ssub.s32 %s12, 1
    %s18 = ssub.s32 %s12, 2
    %s19 = sadd.s32 %s12, 1
    %s20 = ssub.s32 %s12, %s19
    %p21 = scmp.eq.s32.totalorder %s20, 0
    %s23 = sadd.s32 %s22, 1
    %s24 = scalar_select %p21, %s22, %s23
    %p27 = pneg %p21
    %p28 = scmp.eq.s32.totalorder %s12, 1
    %p29 = por %p27, %p28
    %p30 = scmp.ne.s32.totalorder %s22, %s25
    %p31 = scmp.eq.s32.totalorder %s12, 0
    %p32 = por %p30, %p31
    %p33 = scmp.ne.s32.totalorder %s22, %s25
    %p34 = scmp.eq.s32.totalorder %s17, 1
    %p35 = por %p33, %p34
    %p36 = scmp.ne.s32.totalorder %s25, %s26
    %p37 = scmp.eq.s32.totalorder %s17, 0
    %p38 = por %p36, %p37
    %p39 = scmp.ne.s32.totalorder %s25, %s26
    %p40 = scmp.eq.s32.totalorder %s18, 1
    %p41 = por %p39, %p40
    %p43 = scmp.ne.s32.totalorder %s26, %s42
    %p44 = scmp.eq.s32.totalorder %s18, 0
    %p45 = por %p43, %p44
    %s47 = sadd.s32 %s46, 1
    %p50 = scmp.eq.s32.totalorder %s12, 1
    %p51 = scmp.ne.s32.totalorder %s46, %s48
    %p52 = scmp.eq.s32.totalorder %s12, 0
    %p53 = por %p51, %p52
    %p54 = scmp.ne.s32.totalorder %s46, %s48
    %p55 = scmp.eq.s32.totalorder %s17, 1
    %p56 = por %p54, %p55
    %p57 = scmp.ne.s32.totalorder %s48, %s49
    %p58 = scmp.eq.s32.totalorder %s17, 0
    %p59 = por %p57, %p58
    %p60 = scmp.ne.s32.totalorder %s48, %s49
    %p61 = scmp.eq.s32.totalorder %s18, 1
    %p62 = por %p60, %p61
    %p64 = scmp.ne.s32.totalorder %s49, %s63
    %p65 = scmp.eq.s32.totalorder %s18, 0
    %p66 = por %p64, %p65
    %s68 = sadd.s32 %s67, 1
    %p71 = scmp.eq.s32.totalorder %s12, 1
    %p72 = scmp.ne.s32.totalorder %s67, %s69
    %p73 = scmp.eq.s32.totalorder %s12, 0
    %p74 = por %p72, %p73
    %p75 = scmp.ne.s32.totalorder %s67, %s69
    %p76 = scmp.eq.s32.totalorder %s17, 1
    %p77 = por %p75, %p76
    %p78 = scmp.ne.s32.totalorder %s69, %s70
    %p79 = scmp.eq.s32.totalorder %s17, 0
    %p80 = por %p78, %p79
    %p81 = scmp.ne.s32.totalorder %s69, %s70
    %p82 = scmp.eq.s32.totalorder %s18, 1
    %p83 = por %p81, %p82
    %p85 = scmp.ne.s32.totalorder %s70, %s84
    %p86 = scmp.eq.s32.totalorder %s18, 0
    %p87 = por %p85, %p86
    %s89 = sadd.s32 %s88, 1
    %p92 = scmp.eq.s32.totalorder %s12, 1
    %p93 = scmp.ne.s32.totalorder %s88, %s90
    %p94 = scmp.eq.s32.totalorder %s12, 0
    %p95 = por %p93, %p94
    %p96 = scmp.ne.s32.totalorder %s88, %s90
    %p97 = scmp.eq.s32.totalorder %s17, 1
    %p98 = por %p96, %p97
    %p99 = scmp.ne.s32.totalorder %s90, %s91
    %p100 = scmp.eq.s32.totalorder %s17, 0
    %p101 = por %p99, %p100
    %p102 = scmp.ne.s32.totalorder %s90, %s91
    %p103 = scmp.eq.s32.totalorder %s18, 1
    %p104 = por %p102, %p103
    %p106 = scmp.ne.s32.totalorder %s91, %s105
    %p107 = scmp.eq.s32.totalorder %s18, 0
    %p108 = por %p106, %p107
    %s109 = ssub.s32 %s12, %s19
    %p110 = scmp.eq.s32.totalorder %s109, 0
    %s112 = sadd.s32 %s111, 1
    %s113 = scalar_select %p110, %s111, %s112
    %p116 = pneg %p110
    %p117 = scmp.eq.s32.totalorder %s12, 1
    %p118 = por %p116, %p117
    %p119 = scmp.ne.s32.totalorder %s111, %s114
    %p120 = scmp.eq.s32.totalorder %s12, 0
    %p121 = por %p119, %p120
    %p122 = scmp.ne.s32.totalorder %s111, %s114
    %p123 = scmp.eq.s32.totalorder %s17, 1
    %p124 = por %p122, %p123
    %p125 = scmp.ne.s32.totalorder %s114, %s115
    %p126 = scmp.eq.s32.totalorder %s17, 0
    %p127 = por %p125, %p126
    %p128 = scmp.ne.s32.totalorder %s114, %s115
    %p129 = scmp.eq.s32.totalorder %s18, 1
    %p130 = por %p128, %p129
    %p132 = scmp.ne.s32.totalorder %s115, %s131
    %p133 = scmp.eq.s32.totalorder %s18, 0
    %p134 = por %p132, %p133
    %s135 = ssub.s32 %s12, %s19
    %p136 = scmp.eq.s32.totalorder %s135, 0
    %s138 = sadd.s32 %s137, 1
    %s139 = scalar_select %p136, %s137, %s138
    %p142 = pneg %p136
    %p143 = scmp.eq.s32.totalorder %s12, 1
    %p144 = por %p142, %p143
    %p145 = scmp.ne.s32.totalorder %s137, %s140
    %p146 = scmp.eq.s32.totalorder %s12, 0
    %p147 = por %p145, %p146
    %p148 = scmp.ne.s32.totalorder %s137, %s140
    %p149 = scmp.eq.s32.totalorder %s17, 1
    %p150 = por %p148, %p149
    %p151 = scmp.ne.s32.totalorder %s140, %s141
    %p152 = scmp.eq.s32.totalorder %s17, 0
    %p153 = por %p151, %p152
    %p154 = scmp.ne.s32.totalorder %s140, %s141
    %p155 = scmp.eq.s32.totalorder %s18, 1
    %p156 = por %p154, %p155
    %p158 = scmp.ne.s32.totalorder %s141, %s157
    %p159 = scmp.eq.s32.totalorder %s18, 0
    %p160 = por %p158, %p159
    %p161 = scmp.le.s32.totalorder 1, %s12
    %p162 = scmp.lt.s32.totalorder %s12, 3
    %p163 = pnand %p161, %p162
    %p164 = pneg %p163
    // Predicated region
    $region9: #{tpu_custom_call.1} parent=5 // pred_check
      _
    $region10: #{tpu_custom_call.1} parent=5 // pred_check_branch
      %166 = sbr.rel (%p163) target = $region12
    $region11: #{tpu_custom_call.1} parent=5 // pred_region
      %s167 = ssub.s32 %s12, 1
      // Predicated region
      $region13: #{tpu_custom_call.1} parent=11 // pred_check
        %p168 = pneg %p59
      $region14: #{tpu_custom_call.1} parent=11 // pred_check_branch
        %170 = sbr.rel (%p168) target = $region16
      $region15: #{tpu_custom_call.1} parent=11 // pred_region
        _
      $region16: #{tpu_custom_call.1} parent=11 // pred_fallthru
        _
      // Predicated region
      $region17: #{tpu_custom_call.1} parent=11 // pred_check
        %p171 = pneg %p80
      $region18: #{tpu_custom_call.1} parent=11 // pred_check_branch
        %173 = sbr.rel (%p171) target = $region20
      $region19: #{tpu_custom_call.1} parent=11 // pred_region
        _
      $region20: #{tpu_custom_call.1} parent=11 // pred_fallthru
        _
      // Predicated region
      $region21: #{tpu_custom_call.1} parent=11 // pred_check
        %p174 = pneg %p101
      $region22: #{tpu_custom_call.1} parent=11 // pred_check_branch
        %176 = sbr.rel (%p174) target = $region24
      $region23: #{tpu_custom_call.1} parent=11 // pred_region
        _
      $region24: #{tpu_custom_call.1} parent=11 // pred_fallthru
        _
    $region12: #{tpu_custom_call.1} parent=5 // pred_fallthru
      _
    %p177 = scmp.lt.s32.totalorder %s12, 2
    // Predicated region
    $region25: #{tpu_custom_call.1} parent=5 // pred_check
      %p178 = pneg %p177
    $region26: #{tpu_custom_call.1} parent=5 // pred_check_branch
      %180 = sbr.rel (%p178) target = $region28
    $region27: #{tpu_custom_call.1} parent=5 // pred_region
      // Predicated region
      $region29: #{tpu_custom_call.1} parent=27 // pred_check
        %p181 = pneg %p32
      $region30: #{tpu_custom_call.1} parent=27 // pred_check_branch
        %183 = sbr.rel (%p181) target = $region32
      $region31: #{tpu_custom_call.1} parent=27 // pred_region
        %p184 = scmp.lt.s32.totalorder %s12, 1
        %s185 = scalar_select %p184, %s12, 1
        %s186 = smul.addr %s185, 8
        %s187 = smul.addr %s186, 8
        %s188 = scalar_lea.vmem %s0, %s187
      $region32: #{tpu_custom_call.1} parent=27 // pred_fallthru
        _
    $region28: #{tpu_custom_call.1} parent=5 // pred_fallthru
      _
    %p189 = scmp.le.s32.totalorder 1, %s12
    %p190 = scmp.lt.s32.totalorder %s12, 3
    %p191 = pnand %p189, %p190
    %p192 = pneg %p191
    // Predicated region
    $region33: #{tpu_custom_call.1} parent=5 // pred_check
      _
    $region34: #{tpu_custom_call.1} parent=5 // pred_check_branch
      %194 = sbr.rel (%p191) target = $region36
    $region35: #{tpu_custom_call.1} parent=5 // pred_region
      %s195 = ssub.s32 %s12, 1
      %p196 = scmp.lt.s32.totalorder %s17, 1
      %s197 = scalar_select %p196, %s17, 1
      %s198 = smul.addr %s197, 8
      %s199 = smul.addr %s198, 8
      %s200 = scalar_lea.vmem %s0, %s199
      %p201 = pneg %p38
      %p202 = pneg %p35
      %p203 = pneg %p59
      %p204 = pneg %p56
      %p205 = pneg %p80
      %p206 = pneg %p77
      %p207 = pneg %p101
      %p208 = pneg %p98
      %p209 = pneg %p127
      %p210 = pneg %p124
      %p211 = scmp.lt.s32.totalorder %s17, 1
      %s212 = scalar_select %p211, %s17, 1
      %s213 = smul.addr %s212, 8
      %s214 = scalar_lea.vmem %s4, %s213
      %p215 = pneg %p153
      %p216 = pneg %p150
      %p217 = scmp.lt.s32.totalorder %s17, 1
      %s218 = scalar_select %p217, %s17, 1
      %s219 = smul.addr %s218, 8
      %s220 = scalar_lea.vmem %s5, %s219
      %p221 = scmp.lt.s32.totalorder %s17, 1
      %s222 = scalar_select %p221, %s17, 1
      %s223 = smul.addr %s222, 8
      %s224 = smul.addr %s223, 8
      %s225 = scalar_lea.vmem %s0, %s224
      %p226 = scmp.lt.s32.totalorder %s17, 1
      %s227 = scalar_select %p226, %s17, 1
      %s228 = smul.addr %s227, 8
      %s229 = scalar_lea.vmem %s4, %s228
      %p230 = scmp.lt.s32.totalorder %s17, 1
      %s231 = scalar_select %p230, %s17, 1
      %s232 = smul.addr %s231, 8
      %s233 = scalar_lea.vmem %s5, %s232
      %v235 = vld [vmem:[%s225] sm:$0xff]
      %v236 = vld [vmem:[%s225 + $0x8] sm:$0xff]
      %v237 = vld [vmem:[%s225 + $0x10] sm:$0xff]
      %v238 = vld [vmem:[%s225 + $0x18] sm:$0xff]
      %v239 = vld [vmem:[%s225 + $0x20] sm:$0xff]
      %v240 = vld [vmem:[%s225 + $0x28] sm:$0xff]
      %v241 = vld [vmem:[%s225 + $0x30] sm:$0xff]
      %v242 = vld [vmem:[%s225 + $0x38] sm:$0xff]
      %v243 = vpack.c.bf16 %v236, %v235
      %v244 = vpack.c.bf16 %v238, %v237
      %v245 = vpack.c.bf16 %v240, %v239
      %v246 = vpack.c.bf16 %v242, %v241
      %v247 = vld [vmem:[%s2] sm:$0xf]
      %v248 = vld [vmem:[%s2 + $0x4] sm:$0xf]
      %v251 = vunpack.c.l.b16 %v247
      %v252 = vunpack.c.l.b16 %v248
      %v253 = vpack.c.b16 %v252, %v251
      %vm255 = vcmask 130048
      %v257 = vsel %vm255, %v243, 0
      %v260 = vsel %vm255, %v244, 0
      %v263 = vsel %vm255, %v245, 0
      %v266 = vsel %vm255, %v246, 0
      %268 = vmatprep.subr.bf16.mxu0 0
      %269 = vmatpush1.bf16.msra.mxu0 %v253
      %270 = vmatprep.subr.bf16.mxu0 0
      %271 = vmatpush1.bf16.msra.mxu0 0
      %272 = vmatprep.subr.bf16.mxu0 0
      %273 = vmatpush1.bf16.msra.mxu0 0
      %274 = vmatprep.subr.bf16.mxu0 0
      %275 = vmatpush1.bf16.msra.mxu0 0
      %276 = vmatprep.subr.bf16.mxu0 0
      %277 = vmatpush1.bf16.msra.mxu0 0
      %278 = vmatprep.subr.bf16.mxu0 0
      %279 = vmatpush1.bf16.msra.mxu0 0
      %280 = vmatprep.subr.bf16.mxu0 0
      %281 = vmatpush1.bf16.msra.mxu0 0
      %282 = vmatprep.subr.bf16.mxu0 0
      %283 = vmatpush1.bf16.msra.mxu0 0
      %284 = vmatprep.subr.bf16.mxu0 0
      %285 = vmatpush1.bf16.msra.mxu0 0
      %286 = vmatprep.subr.bf16.mxu0 0
      %287 = vmatpush1.bf16.msra.mxu0 0
      %288 = vmatprep.subr.bf16.mxu0 0
      %289 = vmatpush1.bf16.msra.mxu0 0
      %290 = vmatprep.subr.bf16.mxu0 0
      %291 = vmatpush1.bf16.msra.mxu0 0
      %292 = vmatprep.subr.bf16.mxu0 0
      %293 = vmatpush1.bf16.msra.mxu0 0
      %294 = vmatprep.subr.bf16.mxu0 0
      %295 = vmatpush1.bf16.msra.mxu0 0
      %296 = vmatprep.subr.bf16.mxu0 0
      %297 = vmatpush1.bf16.msra.mxu0 0
      %298 = vmatprep.subr.bf16.mxu0 0
      %299 = vmatpush1.bf16.msra.mxu0 0
      %300 = vmatprep.mubr.bf16.mxu0 0
      %301 = vmatmul.mubr.bf16.gmra.mrb[0].mxu0 %v257
      %v302 = vpop.f32.mrb[0].mxu0
      %v303 = vadd.f32 0.0, %v302
      %v304 = vpop.f32.mrb[0].mxu0
      %v305 = vpop.f32.mrb[0].mxu0
      %v306 = vadd.f32 0.0, %v305
      %v307 = vpop.f32.mrb[0].mxu0
      %308 = vmatprep.mubr.bf16.mxu0 0
      %309 = vmatmul.mubr.bf16.gmra.mrb[0].mxu0 %v260
      %v310 = vpop.f32.mrb[0].mxu0
      %v311 = vadd.f32 0.0, %v310
      %v312 = vpop.f32.mrb[0].mxu0
      %v313 = vpop.f32.mrb[0].mxu0
      %v314 = vadd.f32 0.0, %v313
      %v315 = vpop.f32.mrb[0].mxu0
      %316 = vmatprep.mubr.bf16.mxu0 0
      %317 = vmatmul.mubr.bf16.gmra.mrb[0].mxu0 %v263
      %v318 = vpop.f32.mrb[0].mxu0
      %v319 = vadd.f32 0.0, %v318
      %v320 = vpop.f32.mrb[0].mxu0
      %v321 = vpop.f32.mrb[0].mxu0
      %v322 = vadd.f32 0.0, %v321
      %v323 = vpop.f32.mrb[0].mxu0
      %324 = vmatprep.mubr.bf16.mxu0 0
      %325 = vmatmul.mubr.bf16.gmra.mrb[0].mxu0 %v266
      %v326 = vpop.f32.mrb[0].mxu0
      %v327 = vadd.f32 0.0, %v326
      %v328 = vpop.f32.mrb[0].mxu0
      %v329 = vpop.f32.mrb[0].mxu0
      %v330 = vadd.f32 0.0, %v329
      %v331 = vpop.f32.mrb[0].mxu0
      %332 = vdwg.mxu0
      %v333 = vpack.c.bf16 %v306, %v303
      %v334 = vpack.c.bf16 %v314, %v311
      %v335 = vpack.c.bf16 %v322, %v319
      %v336 = vpack.c.bf16 %v330, %v327
      %v337 = vld [vmem:[%s1] sm:$0xf]
      %v338 = vld [vmem:[%s1 + $0x4] sm:$0xf]
      %v339 = vld [vmem:[%s1 + $0x8] sm:$0xf]
      %v340 = vld [vmem:[%s1 + $0xc] sm:$0xf]
      %v341 = vld [vmem:[%s1 + $0x10] sm:$0x1]
      %v342 = vld [vmem:[%s1 + $0x14] sm:$0xf]
      %v343 = vld [vmem:[%s1 + $0x18] sm:$0xf]
      %v344 = vld [vmem:[%s1 + $0x1c] sm:$0xf]
      %v345 = vld [vmem:[%s1 + $0x20] sm:$0xf]
      %v346 = vld [vmem:[%s1 + $0x24] sm:$0x1]
      %v347 = vld [vmem:[%s1 + $0x28] sm:$0xf]
      %v348 = vld [vmem:[%s1 + $0x2c] sm:$0xf]
      %v349 = vld [vmem:[%s1 + $0x30] sm:$0xf]
      %v350 = vld [vmem:[%s1 + $0x34] sm:$0xf]
      %v351 = vld [vmem:[%s1 + $0x38] sm:$0x1]
      %v352 = vld [vmem:[%s1 + $0x3c] sm:$0xf]
      %v353 = vld [vmem:[%s1 + $0x40] sm:$0xf]
      %v354 = vld [vmem:[%s1 + $0x44] sm:$0xf]
      %v355 = vld [vmem:[%s1 + $0x48] sm:$0xf]
      %v356 = vld [vmem:[%s1 + $0x4c] sm:$0x1]
      %v362 = vunpack.c.l.b16 %v337
      %v363 = vunpack.c.l.b16 %v338
      %v364 = vunpack.c.l.b16 %v339
      %v365 = vunpack.c.l.b16 %v340
      %v366 = vunpack.c.l.b16 %v341
      %v367 = vpack.c.b16 %v363, %v362
      %v368 = vpack.c.b16 %v365, %v364
      %v369 = vpack.c.b16 %v366, %v366
      %v371 = vsel %vm255, %v367, 0
      %v374 = vsel %vm255, %v368, 0
      %v377 = vsel %vm255, %v369, 0
      %379 = vmatprep.subr.bf16.mxu0 0
      %380 = vmatpush1.bf16.msra.mxu0 %v333
      %381 = vmatprep.subr.bf16.mxu0 0
      %382 = vmatpush1.bf16.msra.mxu0 0
      %383 = vmatprep.subr.bf16.mxu0 0
      %384 = vmatpush1.bf16.msra.mxu0 0
      %385 = vmatprep.subr.bf16.mxu0 0
      %386 = vmatpush1.bf16.msra.mxu0 0
      %387 = vmatprep.subr.bf16.mxu0 0
      %388 = vmatpush1.bf16.msra.mxu0 0
      %389 = vmatprep.subr.bf16.mxu0 0
      %390 = vmatpush1.bf16.msra.mxu0 0
      %391 = vmatprep.subr.bf16.mxu0 0
      %392 = vmatpush1.bf16.msra.mxu0 0
      %393 = vmatprep.subr.bf16.mxu0 0
      %394 = vmatpush1.bf16.msra.mxu0 0
      %395 = vmatprep.subr.bf16.mxu0 0
      %396 = vmatpush1.bf16.msra.mxu0 0
      %397 = vmatprep.subr.bf16.mxu0 0
      %398 = vmatpush1.bf16.msra.mxu0 0
      %399 = vmatprep.subr.bf16.mxu0 0
      %400 = vmatpush1.bf16.msra.mxu0 0
      %401 = vmatprep.subr.bf16.mxu0 0
      %402 = vmatpush1.bf16.msra.mxu0 0
      %403 = vmatprep.subr.bf16.mxu0 0
      %404 = vmatpush1.bf16.msra.mxu0 0
      %405 = vmatprep.subr.bf16.mxu0 0
      %406 = vmatpush1.bf16.msra.mxu0 0
      %407 = vmatprep.subr.bf16.mxu0 0
      %408 = vmatpush1.bf16.msra.mxu0 0
      %409 = vmatprep.subr.bf16.mxu0 0
      %410 = vmatpush1.bf16.msra.mxu0 0
      %411 = vmatprep.mubr.bf16.mxu0 0
      %412 = vmatmul.mubr.bf16.gmra.mrb[0].mxu0 %v371
      %v413 = vpop.f32.mrb[0].mxu0
      %v414 = vadd.f32 0.0, %v413
      %v415 = vpop.f32.mrb[0].mxu0
      %v416 = vpop.f32.mrb[0].mxu0
      %v417 = vadd.f32 0.0, %v416
      %v418 = vpop.f32.mrb[0].mxu0
      %419 = vmatprep.mubr.bf16.mxu0 0
      %420 = vmatmul.mubr.bf16.gmra.mrb[0].mxu0 %v374
      %v421 = vpop.f32.mrb[0].mxu0
      %v422 = vadd.f32 0.0, %v421
      %v423 = vpop.f32.mrb[0].mxu0
      %v424 = vpop.f32.mrb[0].mxu0
      %v425 = vadd.f32 0.0, %v424
      %v426 = vpop.f32.mrb[0].mxu0
      %427 = vmatprep.mubr.bf16.mxu0 0
      %428 = vmatmul.mubr.bf16.gmra.mrb[0].mxu0 %v377
      %v429 = vpop.f32.mrb[0].mxu0
      %v430 = vadd.f32 0.0, %v429
      %v431 = vpop.f32.mrb[0].mxu0
      %v432 = vpop.f32.mrb[0].mxu0
      %v433 = vpop.f32.mrb[0].mxu0
      %434 = vdwg.mxu0
      %v440 = vunpack.c.l.b16 %v342
      %v441 = vunpack.c.l.b16 %v343
      %v442 = vunpack.c.l.b16 %v344
      %v443 = vunpack.c.l.b16 %v345
      %v444 = vunpack.c.l.b16 %v346
      %v445 = vpack.c.b16 %v441, %v440
      %v446 = vpack.c.b16 %v443, %v442
      %v447 = vpack.c.b16 %v444, %v444
      %v449 = vsel %vm255, %v445, 0
      %v452 = vsel %vm255, %v446, 0
      %v455 = vsel %vm255, %v447, 0
      %457 = vmatprep.subr.bf16.mxu0 0
      %458 = vmatpush1.bf16.msra.mxu0 %v334
      %459 = vmatprep.subr.bf16.mxu0 0
      %460 = vmatpush1.bf16.msra.mxu0 0
      %461 = vmatprep.subr.bf16.mxu0 0
      %462 = vmatpush1.bf16.msra.mxu0 0
      %463 = vmatprep.subr.bf16.mxu0 0
      %464 = vmatpush1.bf16.msra.mxu0 0
      %465 = vmatprep.subr.bf16.mxu0 0
      %466 = vmatpush1.bf16.msra.mxu0 0
      %467 = vmatprep.subr.bf16.mxu0 0
      %468 = vmatpush1.bf16.msra.mxu0 0
      %469 = vmatprep.subr.bf16.mxu0 0
      %470 = vmatpush1.bf16.msra.mxu0 0
      %471 = vmatprep.subr.bf16.mxu0 0
      %472 = vmatpush1.bf16.msra.mxu0 0
      %473 = vmatprep.subr.bf16.mxu0 0
      %474 = vmatpush1.bf16.msra.mxu0 0
      %475 = vmatprep.subr.bf16.mxu0 0
      %476 = vmatpush1.bf16.msra.mxu0 0
      %477 = vmatprep.subr.bf16.mxu0 0
      %478 = vmatpush1.bf16.msra.mxu0 0
      %479 = vmatprep.subr.bf16.mxu0 0
      %480 = vmatpush1.bf16.msra.mxu0 0
      %481 = vmatprep.subr.bf16.mxu0 0
      %482 = vmatpush1.bf16.msra.mxu0 0
      %483 = vmatprep.subr.bf16.mxu0 0
      %484 = vmatpush1.bf16.msra.mxu0 0
      %485 = vmatprep.subr.bf16.mxu0 0
      %486 = vmatpush1.bf16.msra.mxu0 0
      %487 = vmatprep.subr.bf16.mxu0 0
      %488 = vmatpush1.bf16.msra.mxu0 0
      %489 = vmatprep.mubr.bf16.mxu0 0
      %490 = vmatmul.mubr.bf16.gmra.mrb[0].mxu0 %v449
      %v491 = vpop.f32.mrb[0].mxu0
      %v492 = vadd.f32 0.0, %v491
      %v493 = vpop.f32.mrb[0].mxu0
      %v494 = vpop.f32.mrb[0].mxu0
      %v495 = vadd.f32 0.0, %v494
      %v496 = vpop.f32.mrb[0].mxu0
      %497 = vmatprep.mubr.bf16.mxu0 0
      %498 = vmatmul.mubr.bf16.gmra.mrb[0].mxu0 %v452
      %v499 = vpop.f32.mrb[0].mxu0
      %v500 = vadd.f32 0.0, %v499
      %v501 = vpop.f32.mrb[0].mxu0
      %v502 = vpop.f32.mrb[0].mxu0
      %v503 = vadd.f32 0.0, %v502
      %v504 = vpop.f32.mrb[0].mxu0
      %505 = vmatprep.mubr.bf16.mxu0 0
      %506 = vmatmul.mubr.bf16.gmra.mrb[0].mxu0 %v455
      %v507 = vpop.f32.mrb[0].mxu0
      %v508 = vadd.f32 0.0, %v507
      %v509 = vpop.f32.mrb[0].mxu0
      %v510 = vpop.f32.mrb[0].mxu0
      %v511 = vpop.f32.mrb[0].mxu0
      %512 = vdwg.mxu0
      %v518 = vunpack.c.l.b16 %v347
      %v519 = vunpack.c.l.b16 %v348
      %v520 = vunpack.c.l.b16 %v349
      %v521 = vunpack.c.l.b16 %v350
      %v522 = vunpack.c.l.b16 %v351
      %v523 = vpack.c.b16 %v519, %v518
      %v524 = vpack.c.b16 %v521, %v520
      %v525 = vpack.c.b16 %v522, %v522
      %v527 = vsel %vm255, %v523, 0
      %v530 = vsel %vm255, %v524, 0
      %v533 = vsel %vm255, %v525, 0
      %535 = vmatprep.subr.bf16.mxu0 0
      %536 = vmatpush1.bf16.msra.mxu0 %v335
      %537 = vmatprep.subr.bf16.mxu0 0
      %538 = vmatpush1.bf16.msra.mxu0 0
      %539 = vmatprep.subr.bf16.mxu0 0
      %540 = vmatpush1.bf16.msra.mxu0 0
      %541 = vmatprep.subr.bf16.mxu0 0
      %542 = vmatpush1.bf16.msra.mxu0 0
      %543 = vmatprep.subr.bf16.mxu0 0
      %544 = vmatpush1.bf16.msra.mxu0 0
      %545 = vmatprep.subr.bf16.mxu0 0
      %546 = vmatpush1.bf16.msra.mxu0 0
      %547 = vmatprep.subr.bf16.mxu0 0
      %548 = vmatpush1.bf16.msra.mxu0 0
      %549 = vmatprep.subr.bf16.mxu0 0
      %550 = vmatpush1.bf16.msra.mxu0 0
      %551 = vmatprep.subr.bf16.mxu0 0
      %552 = vmatpush1.bf16.msra.mxu0 0
      %553 = vmatprep.subr.bf16.mxu0 0
      %554 = vmatpush1.bf16.msra.mxu0 0
      %555 = vmatprep.subr.bf16.mxu0 0
      %556 = vmatpush1.bf16.msra.mxu0 0
      %557 = vmatprep.subr.bf16.mxu0 0
      %558 = vmatpush1.bf16.msra.mxu0 0
      %559 = vmatprep.subr.bf16.mxu0 0
      %560 = vmatpush1.bf16.msra.mxu0 0
      %561 = vmatprep.subr.bf16.mxu0 0
      %562 = vmatpush1.bf16.msra.mxu0 0
      %563 = vmatprep.subr.bf16.mxu0 0
      %564 = vmatpush1.bf16.msra.mxu0 0
      %565 = vmatprep.subr.bf16.mxu0 0
      %566 = vmatpush1.bf16.msra.mxu0 0
      %567 = vmatprep.mubr.bf16.mxu0 0
      %568 = vmatmul.mubr.bf16.gmra.mrb[0].mxu0 %v527
      %v569 = vpop.f32.mrb[0].mxu0
      %v570 = vadd.f32 0.0, %v569
      %v571 = vpop.f32.mrb[0].mxu0
      %v572 = vpop.f32.mrb[0].mxu0
      %v573 = vadd.f32 0.0, %v572
      %v574 = vpop.f32.mrb[0].mxu0
      %575 = vmatprep.mubr.bf16.mxu0 0
      %576 = vmatmul.mubr.bf16.gmra.mrb[0].mxu0 %v530
      %v577 = vpop.f32.mrb[0].mxu0
      %v578 = vadd.f32 0.0, %v577
      %v579 = vpop.f32.mrb[0].mxu0
      %v580 = vpop.f32.mrb[0].mxu0
      %v581 = vadd.f32 0.0, %v580
      %v582 = vpop.f32.mrb[0].mxu0
      %583 = vmatprep.mubr.bf16.mxu0 0
      %584 = vmatmul.mubr.bf16.gmra.mrb[0].mxu0 %v533
      %v585 = vpop.f32.mrb[0].mxu0
      %v586 = vadd.f32 0.0, %v585
      %v587 = vpop.f32.mrb[0].mxu0
      %v588 = vpop.f32.mrb[0].mxu0
      %v589 = vpop.f32.mrb[0].mxu0
      %590 = vdwg.mxu0
      %v596 = vunpack.c.l.b16 %v352
      %v597 = vunpack.c.l.b16 %v353
      %v598 = vunpack.c.l.b16 %v354
      %v599 = vunpack.c.l.b16 %v355
      %v600 = vunpack.c.l.b16 %v356
      %v601 = vpack.c.b16 %v597, %v596
      %v602 = vpack.c.b16 %v599, %v598
      %v603 = vpack.c.b16 %v600, %v600
      %v605 = vsel %vm255, %v601, 0
      %v608 = vsel %vm255, %v602, 0
      %v611 = vsel %vm255, %v603, 0
      %613 = vmatprep.subr.bf16.mxu0 0
      %614 = vmatpush1.bf16.msra.mxu0 %v336
      %615 = vmatprep.subr.bf16.mxu0 0
      %616 = vmatpush1.bf16.msra.mxu0 0
      %617 = vmatprep.subr.bf16.mxu0 0
      %618 = vmatpush1.bf16.msra.mxu0 0
      %619 = vmatprep.subr.bf16.mxu0 0
      %620 = vmatpush1.bf16.msra.mxu0 0
      %621 = vmatprep.subr.bf16.mxu0 0
      %622 = vmatpush1.bf16.msra.mxu0 0
      %623 = vmatprep.subr.bf16.mxu0 0
      %624 = vmatpush1.bf16.msra.mxu0 0
      %625 = vmatprep.subr.bf16.mxu0 0
      %626 = vmatpush1.bf16.msra.mxu0 0
      %627 = vmatprep.subr.bf16.mxu0 0
      %628 = vmatpush1.bf16.msra.mxu0 0
      %629 = vmatprep.subr.bf16.mxu0 0
      %630 = vmatpush1.bf16.msra.mxu0 0
      %631 = vmatprep.subr.bf16.mxu0 0
      %632 = vmatpush1.bf16.msra.mxu0 0
      %633 = vmatprep.subr.bf16.mxu0 0
      %634 = vmatpush1.bf16.msra.mxu0 0
      %635 = vmatprep.subr.bf16.mxu0 0
      %636 = vmatpush1.bf16.msra.mxu0 0
      %637 = vmatprep.subr.bf16.mxu0 0
      %638 = vmatpush1.bf16.msra.mxu0 0
      %639 = vmatprep.subr.bf16.mxu0 0
      %640 = vmatpush1.bf16.msra.mxu0 0
      %641 = vmatprep.subr.bf16.mxu0 0
      %642 = vmatpush1.bf16.msra.mxu0 0
      %643 = vmatprep.subr.bf16.mxu0 0
      %644 = vmatpush1.bf16.msra.mxu0 0
      %645 = vmatprep.mubr.bf16.mxu0 0
      %646 = vmatmul.mubr.bf16.gmra.mrb[0].mxu0 %v605
      %v647 = vpop.f32.mrb[0].mxu0
      %v648 = vadd.f32 0.0, %v647
      %v649 = vpop.f32.mrb[0].mxu0
      %v650 = vpop.f32.mrb[0].mxu0
      %v651 = vadd.f32 0.0, %v650
      %v652 = vpop.f32.mrb[0].mxu0
      %653 = vmatprep.mubr.bf16.mxu0 0
      %654 = vmatmul.mubr.bf16.gmra.mrb[0].mxu0 %v608
      %v655 = vpop.f32.mrb[0].mxu0
      %v656 = vadd.f32 0.0, %v655
      %v657 = vpop.f32.mrb[0].mxu0
      %v658 = vpop.f32.mrb[0].mxu0
      %v659 = vadd.f32 0.0, %v658
      %v660 = vpop.f32.mrb[0].mxu0
      %661 = vmatprep.mubr.bf16.mxu0 0
      %662 = vmatmul.mubr.bf16.gmra.mrb[0].mxu0 %v611
      %v663 = vpop.f32.mrb[0].mxu0
      %v664 = vadd.f32 0.0, %v663
      %v665 = vpop.f32.mrb[0].mxu0
      %v666 = vpop.f32.mrb[0].mxu0
      %v667 = vpop.f32.mrb[0].mxu0
      %668 = vdwg.mxu0
      %v669 = vpack.c.bf16 %v417, %v414
      %v670 = vpack.c.bf16 %v425, %v422
      %v671 = vpack.c.bf16 %v430, %v430
      %v672 = vpack.c.bf16 %v495, %v492
      %v673 = vpack.c.bf16 %v503, %v500
      %v674 = vpack.c.bf16 %v508, %v508
      %v675 = vpack.c.bf16 %v573, %v570
      %v676 = vpack.c.bf16 %v581, %v578
      %v677 = vpack.c.bf16 %v586, %v586
      %v678 = vpack.c.bf16 %v651, %v648
      %v679 = vpack.c.bf16 %v659, %v656
      %v680 = vpack.c.bf16 %v664, %v664
      %v681 = vld [vmem:[%s3] sm:$0xf]
      %v682 = vld [vmem:[%s3 + $0x4] sm:$0xf]
      %v683 = vld [vmem:[%s3 + $0x8] sm:$0xf]
      %v684 = vld [vmem:[%s3 + $0xc] sm:$0xf]
      %v685 = vld [vmem:[%s3 + $0x10] sm:$0xf]
      %v686 = vld [vmem:[%s3 + $0x14] sm:$0xf]
      %v687 = vld [vmem:[%s3 + $0x18] sm:$0xf]
      %v688 = vld [vmem:[%s3 + $0x1c] sm:$0xf]
      %v689 = vld [vmem:[%s3 + $0x20] sm:$0xf]
      %v692 = vpack.i.b16 %v672, %v669
      %v694 = vshrl.u32 %v669, 16
      %v695 = vshrl.u32 %v672, 16
      %v696 = vpack.i.b16 %v695, %v694
      %v700 = vpack.i.b16 %v678, %v675
      %v702 = vshrl.u32 %v675, 16
      %v703 = vshrl.u32 %v678, 16
      %v704 = vpack.i.b16 %v703, %v702
      %v707 = vpack.i.b16 0, 0
      %v709 = vshrl.u32 0, 16
      %v710 = vpack.i.b16 %v709, %v709
      %v714 = vpack.i.b16 %v673, %v670
      %v716 = vshrl.u32 %v670, 16
      %v717 = vshrl.u32 %v673, 16
      %v718 = vpack.i.b16 %v717, %v716
      %v722 = vpack.i.b16 %v679, %v676
      %v724 = vshrl.u32 %v676, 16
      %v725 = vshrl.u32 %v679, 16
      %v726 = vpack.i.b16 %v725, %v724
      %v728 = vcombine.high %v692, %v707
      %v730 = vunpack.c.l.s4 1983009808
      %v731 = vunpack.c.0.s8 %v730
      %v732 = vlaneseq
      %v733 = vshrl.u32 %v732, 7
      %v734 = vsub.s32 %v731, %v733
      %v735 = vrot.slane %v692, %v734
      %v737 = vunpack.c.l.s4 1983009808
      %v738 = vunpack.c.0.s8 %v737
      %v739 = vlaneseq
      %v740 = vshrl.u32 %v739, 7
      %v741 = vsub.s32 %v738, %v740
      %v742 = vrot.slane %v728, %v741
      %v743 = vcombine.high %v700, %v707
      %v745 = vunpack.c.l.s4 1983009808
      %v746 = vunpack.c.0.s8 %v745
      %v747 = vlaneseq
      %v748 = vshrl.u32 %v747, 7
      %v749 = vsub.s32 %v746, %v748
      %v750 = vrot.slane %v700, %v749
      %v752 = vunpack.c.l.s4 1983009808
      %v753 = vunpack.c.0.s8 %v752
      %v754 = vlaneseq
      %v755 = vshrl.u32 %v754, 7
      %v756 = vsub.s32 %v753, %v755
      %v757 = vrot.slane %v743, %v756
      %v758 = vcombine.low %v735, %v750
      %v759 = vcombine.high %v735, %v750
      %v761 = vunpack.c.l.s4 1934713408
      %v762 = vunpack.c.0.s8 %v761
      %v763 = vlaneseq
      %v764 = vshrl.u32 %v763, 7
      %v765 = vsub.s32 %v762, %v764
      %v766 = vrot.slane %v758, %v765
      %v768 = vunpack.c.l.s4 1934713408
      %v769 = vunpack.c.0.s8 %v768
      %v770 = vlaneseq
      %v771 = vshrl.u32 %v770, 7
      %v772 = vsub.s32 %v769, %v771
      %v773 = vrot.slane %v759, %v772
      %v774 = vcombine.low %v742, %v757
      %v775 = vcombine.high %v742, %v757
      %v777 = vunpack.c.l.s4 1934713408
      %v778 = vunpack.c.0.s8 %v777
      %v779 = vlaneseq
      %v780 = vshrl.u32 %v779, 7
      %v781 = vsub.s32 %v778, %v780
      %v782 = vrot.slane %v774, %v781
      %v784 = vunpack.c.l.s4 1934713408
      %v785 = vunpack.c.0.s8 %v784
      %v786 = vlaneseq
      %v787 = vshrl.u32 %v786, 7
      %v788 = vsub.s32 %v785, %v787
      %v789 = vrot.slane %v775, %v788
      %v790 = vcombine.high %v766, 0
      %v791 = vcombine.high %v773, 0
      %v792 = vcombine.high %v782, 0
      %v793 = vcombine.high %v789, 0
      %v794 = vcombine.high %v696, %v710
      %v796 = vunpack.c.l.s4 1983009808
      %v797 = vunpack.c.0.s8 %v796
      %v798 = vlaneseq
      %v799 = vshrl.u32 %v798, 7
      %v800 = vsub.s32 %v797, %v799
      %v801 = vrot.slane %v696, %v800
      %v803 = vunpack.c.l.s4 1983009808
      %v804 = vunpack.c.0.s8 %v803
      %v805 = vlaneseq
      %v806 = vshrl.u32 %v805, 7
      %v807 = vsub.s32 %v804, %v806
      %v808 = vrot.slane %v794, %v807
      %v809 = vcombine.high %v704, %v710
      %v811 = vunpack.c.l.s4 1983009808
      %v812 = vunpack.c.0.s8 %v811
      %v813 = vlaneseq
      %v814 = vshrl.u32 %v813, 7
      %v815 = vsub.s32 %v812, %v814
      %v816 = vrot.slane %v704, %v815
      %v818 = vunpack.c.l.s4 1983009808
      %v819 = vunpack.c.0.s8 %v818
      %v820 = vlaneseq
      %v821 = vshrl.u32 %v820, 7
      %v822 = vsub.s32 %v819, %v821
      %v823 = vrot.slane %v809, %v822
      %v824 = vcombine.low %v801, %v816
      %v825 = vcombine.high %v801, %v816
      %v827 = vunpack.c.l.s4 1934713408
      %v828 = vunpack.c.0.s8 %v827
      %v829 = vlaneseq
      %v830 = vshrl.u32 %v829, 7
      %v831 = vsub.s32 %v828, %v830
      %v832 = vrot.slane %v824, %v831
      %v834 = vunpack.c.l.s4 1934713408
      %v835 = vunpack.c.0.s8 %v834
      %v836 = vlaneseq
      %v837 = vshrl.u32 %v836, 7
      %v838 = vsub.s32 %v835, %v837
      %v839 = vrot.slane %v825, %v838
      %v840 = vcombine.low %v808, %v823
      %v841 = vcombine.high %v808, %v823
      %v843 = vunpack.c.l.s4 1934713408
      %v844 = vunpack.c.0.s8 %v843
      %v845 = vlaneseq
      %v846 = vshrl.u32 %v845, 7
      %v847 = vsub.s32 %v844, %v846
      %v848 = vrot.slane %v840, %v847
      %v850 = vunpack.c.l.s4 1934713408
      %v851 = vunpack.c.0.s8 %v850
      %v852 = vlaneseq
      %v853 = vshrl.u32 %v852, 7
      %v854 = vsub.s32 %v851, %v853
      %v855 = vrot.slane %v841, %v854
      %v856 = vcombine.high %v832, 0
      %v857 = vcombine.high %v839, 0
      %v858 = vcombine.high %v848, 0
      %v859 = vcombine.high %v855, 0
      %v860 = vcombine.high %v714, %v707
      %v862 = vunpack.c.l.s4 1983009808
      %v863 = vunpack.c.0.s8 %v862
      %v864 = vlaneseq
      %v865 = vshrl.u32 %v864, 7
      %v866 = vsub.s32 %v863, %v865
      %v867 = vrot.slane %v714, %v866
      %v869 = vunpack.c.l.s4 1983009808
      %v870 = vunpack.c.0.s8 %v869
      %v871 = vlaneseq
      %v872 = vshrl.u32 %v871, 7
      %v873 = vsub.s32 %v870, %v872
      %v874 = vrot.slane %v860, %v873
      %v875 = vcombine.high %v722, %v707
      %v877 = vunpack.c.l.s4 1983009808
      %v878 = vunpack.c.0.s8 %v877
      %v879 = vlaneseq
      %v880 = vshrl.u32 %v879, 7
      %v881 = vsub.s32 %v878, %v880
      %v882 = vrot.slane %v722, %v881
      %v884 = vunpack.c.l.s4 1983009808
      %v885 = vunpack.c.0.s8 %v884
      %v886 = vlaneseq
      %v887 = vshrl.u32 %v886, 7
      %v888 = vsub.s32 %v885, %v887
      %v889 = vrot.slane %v875, %v888
      %v890 = vcombine.low %v867, %v882
      %v891 = vcombine.high %v867, %v882
      %v893 = vunpack.c.l.s4 1934713408
      %v894 = vunpack.c.0.s8 %v893
      %v895 = vlaneseq
      %v896 = vshrl.u32 %v895, 7
      %v897 = vsub.s32 %v894, %v896
      %v898 = vrot.slane %v890, %v897
      %v900 = vunpack.c.l.s4 1934713408
      %v901 = vunpack.c.0.s8 %v900
      %v902 = vlaneseq
      %v903 = vshrl.u32 %v902, 7
      %v904 = vsub.s32 %v901, %v903
      %v905 = vrot.slane %v891, %v904
      %v906 = vcombine.low %v874, %v889
      %v907 = vcombine.high %v874, %v889
      %v909 = vunpack.c.l.s4 1934713408
      %v910 = vunpack.c.0.s8 %v909
      %v911 = vlaneseq
      %v912 = vshrl.u32 %v911, 7
      %v913 = vsub.s32 %v910, %v912
      %v914 = vrot.slane %v906, %v913
      %v916 = vunpack.c.l.s4 1934713408
      %v917 = vunpack.c.0.s8 %v916
      %v918 = vlaneseq
      %v919 = vshrl.u32 %v918, 7
      %v920 = vsub.s32 %v917, %v919
      %v921 = vrot.slane %v907, %v920
      %v922 = vcombine.high %v898, 0
      %v923 = vcombine.high %v905, 0
      %v924 = vcombine.high %v914, 0
      %v925 = vcombine.high %v921, 0
      %v926 = vcombine.high %v718, %v710
      %v928 = vunpack.c.l.s4 1983009808
      %v929 = vunpack.c.0.s8 %v928
      %v930 = vlaneseq
      %v931 = vshrl.u32 %v930, 7
      %v932 = vsub.s32 %v929, %v931
      %v933 = vrot.slane %v718, %v932
      %v935 = vunpack.c.l.s4 1983009808
      %v936 = vunpack.c.0.s8 %v935
      %v937 = vlaneseq
      %v938 = vshrl.u32 %v937, 7
      %v939 = vsub.s32 %v936, %v938
      %v940 = vrot.slane %v926, %v939
      %v941 = vcombine.high %v726, %v710
      %v943 = vunpack.c.l.s4 1983009808
      %v944 = vunpack.c.0.s8 %v943
      %v945 = vlaneseq
      %v946 = vshrl.u32 %v945, 7
      %v947 = vsub.s32 %v944, %v946
      %v948 = vrot.slane %v726, %v947
      %v950 = vunpack.c.l.s4 1983009808
      %v951 = vunpack.c.0.s8 %v950
      %v952 = vlaneseq
      %v953 = vshrl.u32 %v952, 7
      %v954 = vsub.s32 %v951, %v953
      %v955 = vrot.slane %v941, %v954
      %v956 = vcombine.low %v933, %v948
      %v957 = vcombine.high %v933, %v948
      %v959 = vunpack.c.l.s4 1934713408
      %v960 = vunpack.c.0.s8 %v959
      %v961 = vlaneseq
      %v962 = vshrl.u32 %v961, 7
      %v963 = vsub.s32 %v960, %v962
      %v964 = vrot.slane %v956, %v963
      %v966 = vunpack.c.l.s4 1934713408
      %v967 = vunpack.c.0.s8 %v966
      %v968 = vlaneseq
      %v969 = vshrl.u32 %v968, 7
      %v970 = vsub.s32 %v967, %v969
      %v971 = vrot.slane %v957, %v970
      %v972 = vcombine.low %v940, %v955
      %v973 = vcombine.high %v940, %v955
      %v975 = vunpack.c.l.s4 1934713408
      %v976 = vunpack.c.0.s8 %v975
      %v977 = vlaneseq
      %v978 = vshrl.u32 %v977, 7
      %v979 = vsub.s32 %v976, %v978
      %v980 = vrot.slane %v972, %v979
      %v982 = vunpack.c.l.s4 1934713408
      %v983 = vunpack.c.0.s8 %v982
      %v984 = vlaneseq
      %v985 = vshrl.u32 %v984, 7
      %v986 = vsub.s32 %v983, %v985
      %v987 = vrot.slane %v973, %v986
      %v988 = vcombine.high %v964, 0
      %v989 = vcombine.high %v971, 0
      %v990 = vcombine.high %v980, 0
      %v991 = vcombine.high %v987, 0
      %993 = vrot.lane.b32.xlu0 %v832, 32
      %v994 = vpop.permute.xlu0 %993
      %996 = vrot.lane.b32.xlu0 %v790, 64
      %v997 = vpop.permute.xlu0 %996
      %999 = vrot.lane.b32.xlu0 %v856, 96
      %v1000 = vpop.permute.xlu0 %999
      %1002 = vrot.lane.b32.xlu0 %v839, 32
      %v1003 = vpop.permute.xlu0 %1002
      %1005 = vrot.lane.b32.xlu0 %v791, 64
      %v1006 = vpop.permute.xlu0 %1005
      %1008 = vrot.lane.b32.xlu0 %v857, 96
      %v1009 = vpop.permute.xlu0 %1008
      %1011 = vrot.lane.b32.xlu0 %v848, 32
      %v1012 = vpop.permute.xlu0 %1011
      %1014 = vrot.lane.b32.xlu0 %v792, 64
      %v1015 = vpop.permute.xlu0 %1014
      %1017 = vrot.lane.b32.xlu0 %v858, 96
      %v1018 = vpop.permute.xlu0 %1017
      %1020 = vrot.lane.b32.xlu0 %v855, 32
      %v1021 = vpop.permute.xlu0 %1020
      %1023 = vrot.lane.b32.xlu0 %v793, 64
      %v1024 = vpop.permute.xlu0 %1023
      %1026 = vrot.lane.b32.xlu0 %v859, 96
      %v1027 = vpop.permute.xlu0 %1026
      %1029 = vrot.lane.b32.xlu0 %v964, 32
      %v1030 = vpop.permute.xlu0 %1029
      %1032 = vrot.lane.b32.xlu0 %v922, 64
      %v1033 = vpop.permute.xlu0 %1032
      %1035 = vrot.lane.b32.xlu0 %v988, 96
      %v1036 = vpop.permute.xlu0 %1035
      %1038 = vrot.lane.b32.xlu0 %v971, 32
      %v1039 = vpop.permute.xlu0 %1038
      %1041 = vrot.lane.b32.xlu0 %v923, 64
      %v1042 = vpop.permute.xlu0 %1041
      %1044 = vrot.lane.b32.xlu0 %v989, 96
      %v1045 = vpop.permute.xlu0 %1044
      %1047 = vrot.lane.b32.xlu0 %v980, 32
      %v1048 = vpop.permute.xlu0 %1047
      %1050 = vrot.lane.b32.xlu0 %v924, 64
      %v1051 = vpop.permute.xlu0 %1050
      %1053 = vrot.lane.b32.xlu0 %v990, 96
      %v1054 = vpop.permute.xlu0 %1053
      %1056 = vrot.lane.b32.xlu0 %v987, 32
      %v1057 = vpop.permute.xlu0 %1056
      %1059 = vrot.lane.b32.xlu0 %v925, 64
      %v1060 = vpop.permute.xlu0 %1059
      %1062 = vrot.lane.b32.xlu0 %v991, 96
      %v1063 = vpop.permute.xlu0 %1062
      %vm1064 = vcmask 261120
      %v1067 = vsel %vm1064, %v766, %v994
      %vm1068 = vcmask 523264
      %v1070 = vsel %vm1068, %v1067, %v997
      %vm1071 = vcmask 785408
      %v1073 = vsel %vm1071, %v1070, %v1000
      %v1076 = vsel %vm1064, %v773, %v1003
      %v1078 = vsel %vm1068, %v1076, %v1006
      %v1080 = vsel %vm1071, %v1078, %v1009
      %v1083 = vsel %vm1064, %v782, %v1012
      %v1085 = vsel %vm1068, %v1083, %v1015
      %v1087 = vsel %vm1071, %v1085, %v1018
      %v1090 = vsel %vm1064, %v789, %v1021
      %v1092 = vsel %vm1068, %v1090, %v1024
      %v1094 = vsel %vm1071, %v1092, %v1027
      %v1097 = vsel %vm1064, %v898, %v1030
      %v1099 = vsel %vm1068, %v1097, %v1033
      %v1101 = vsel %vm1071, %v1099, %v1036
      %v1104 = vsel %vm1064, %v905, %v1039
      %v1106 = vsel %vm1068, %v1104, %v1042
      %v1108 = vsel %vm1071, %v1106, %v1045
      %v1111 = vsel %vm1064, %v914, %v1048
      %v1113 = vsel %vm1068, %v1111, %v1051
      %v1115 = vsel %vm1071, %v1113, %v1054
      %v1118 = vsel %vm1064, %v921, %v1057
      %v1120 = vsel %vm1068, %v1118, %v1060
      %v1122 = vsel %vm1071, %v1120, %v1063
      %1131 = vrot.lane.b32.xlu0 %v669, 127
      %v1132 = vpop.permute.xlu0 %1131
      %1133 = vrot.lane.b32.xlu0 %v670, 127
      %v1134 = vpop.permute.xlu0 %1133
      %1135 = vrot.lane.b32.xlu0 %v672, 127
      %v1136 = vpop.permute.xlu0 %1135
      %1137 = vrot.lane.b32.xlu0 %v673, 127
      %v1138 = vpop.permute.xlu0 %1137
      %1139 = vrot.lane.b32.xlu0 %v675, 127
      %v1140 = vpop.permute.xlu0 %1139
      %1141 = vrot.lane.b32.xlu0 %v676, 127
      %v1142 = vpop.permute.xlu0 %1141
      %1143 = vrot.lane.b32.xlu0 %v678, 127
      %v1144 = vpop.permute.xlu0 %1143
      %1145 = vrot.lane.b32.xlu0 %v679, 127
      %v1146 = vpop.permute.xlu0 %1145
      %v1149 = vpack.i.b16 %v1136, %v1132
      %v1151 = vshrl.u32 %v1132, 16
      %v1152 = vshrl.u32 %v1136, 16
      %v1153 = vpack.i.b16 %v1152, %v1151
      %v1157 = vpack.i.b16 %v1144, %v1140
      %v1159 = vshrl.u32 %v1140, 16
      %v1160 = vshrl.u32 %v1144, 16
      %v1161 = vpack.i.b16 %v1160, %v1159
      %v1165 = vpack.i.b16 %v1138, %v1134
      %v1167 = vshrl.u32 %v1134, 16
      %v1168 = vshrl.u32 %v1138, 16
      %v1169 = vpack.i.b16 %v1168, %v1167
      %v1173 = vpack.i.b16 %v1146, %v1142
      %v1175 = vshrl.u32 %v1142, 16
      %v1176 = vshrl.u32 %v1146, 16
      %v1177 = vpack.i.b16 %v1176, %v1175
      %v1179 = vcombine.high %v1149, %v707
      %v1181 = vunpack.c.l.s4 1983009808
      %v1182 = vunpack.c.0.s8 %v1181
      %v1183 = vlaneseq
      %v1184 = vshrl.u32 %v1183, 7
      %v1185 = vsub.s32 %v1182, %v1184
      %v1186 = vrot.slane %v1149, %v1185
      %v1188 = vunpack.c.l.s4 1983009808
      %v1189 = vunpack.c.0.s8 %v1188
      %v1190 = vlaneseq
      %v1191 = vshrl.u32 %v1190, 7
      %v1192 = vsub.s32 %v1189, %v1191
      %v1193 = vrot.slane %v1179, %v1192
      %v1194 = vcombine.high %v1157, %v707
      %v1196 = vunpack.c.l.s4 1983009808
      %v1197 = vunpack.c.0.s8 %v1196
      %v1198 = vlaneseq
      %v1199 = vshrl.u32 %v1198, 7
      %v1200 = vsub.s32 %v1197, %v1199
      %v1201 = vrot.slane %v1157, %v1200
      %v1203 = vunpack.c.l.s4 1983009808
      %v1204 = vunpack.c.0.s8 %v1203
      %v1205 = vlaneseq
      %v1206 = vshrl.u32 %v1205, 7
      %v1207 = vsub.s32 %v1204, %v1206
      %v1208 = vrot.slane %v1194, %v1207
      %v1209 = vcombine.low %v1186, %v1201
      %v1210 = vcombine.high %v1186, %v1201
      %v1212 = vunpack.c.l.s4 1934713408
      %v1213 = vunpack.c.0.s8 %v1212
      %v1214 = vlaneseq
      %v1215 = vshrl.u32 %v1214, 7
      %v1216 = vsub.s32 %v1213, %v1215
      %v1217 = vrot.slane %v1209, %v1216
      %v1219 = vunpack.c.l.s4 1934713408
      %v1220 = vunpack.c.0.s8 %v1219
      %v1221 = vlaneseq
      %v1222 = vshrl.u32 %v1221, 7
      %v1223 = vsub.s32 %v1220, %v1222
      %v1224 = vrot.slane %v1210, %v1223
      %v1225 = vcombine.low %v1193, %v1208
      %v1226 = vcombine.high %v1193, %v1208
      %v1228 = vunpack.c.l.s4 1934713408
      %v1229 = vunpack.c.0.s8 %v1228
      %v1230 = vlaneseq
      %v1231 = vshrl.u32 %v1230, 7
      %v1232 = vsub.s32 %v1229, %v1231
      %v1233 = vrot.slane %v1225, %v1232
      %v1235 = vunpack.c.l.s4 1934713408
      %v1236 = vunpack.c.0.s8 %v1235
      %v1237 = vlaneseq
      %v1238 = vshrl.u32 %v1237, 7
      %v1239 = vsub.s32 %v1236, %v1238
      %v1240 = vrot.slane %v1226, %v1239
      %v1241 = vcombine.high %v1217, 0
      %v1242 = vcombine.high %v1224, 0
      %v1243 = vcombine.high %v1233, 0
      %v1244 = vcombine.high %v1240, 0
      %v1245 = vcombine.high %v1153, %v710
      %v1247 = vunpack.c.l.s4 1983009808
      %v1248 = vunpack.c.0.s8 %v1247
      %v1249 = vlaneseq
      %v1250 = vshrl.u32 %v1249, 7
      %v1251 = vsub.s32 %v1248, %v1250
      %v1252 = vrot.slane %v1153, %v1251
      %v1254 = vunpack.c.l.s4 1983009808
      %v1255 = vunpack.c.0.s8 %v1254
      %v1256 = vlaneseq
      %v1257 = vshrl.u32 %v1256, 7
      %v1258 = vsub.s32 %v1255, %v1257
      %v1259 = vrot.slane %v1245, %v1258
      %v1260 = vcombine.high %v1161, %v710
      %v1262 = vunpack.c.l.s4 1983009808
      %v1263 = vunpack.c.0.s8 %v1262
      %v1264 = vlaneseq
      %v1265 = vshrl.u32 %v1264, 7
      %v1266 = vsub.s32 %v1263, %v1265
      %v1267 = vrot.slane %v1161, %v1266
      %v1269 = vunpack.c.l.s4 1983009808
      %v1270 = vunpack.c.0.s8 %v1269
      %v1271 = vlaneseq
      %v1272 = vshrl.u32 %v1271, 7
      %v1273 = vsub.s32 %v1270, %v1272
      %v1274 = vrot.slane %v1260, %v1273
      %v1275 = vcombine.low %v1252, %v1267
      %v1276 = vcombine.high %v1252, %v1267
      %v1278 = vunpack.c.l.s4 1934713408
      %v1279 = vunpack.c.0.s8 %v1278
      %v1280 = vlaneseq
      %v1281 = vshrl.u32 %v1280, 7
      %v1282 = vsub.s32 %v1279, %v1281
      %v1283 = vrot.slane %v1275, %v1282
      %v1285 = vunpack.c.l.s4 1934713408
      %v1286 = vunpack.c.0.s8 %v1285
      %v1287 = vlaneseq
      %v1288 = vshrl.u32 %v1287, 7
      %v1289 = vsub.s32 %v1286, %v1288
      %v1290 = vrot.slane %v1276, %v1289
      %v1291 = vcombine.low %v1259, %v1274
      %v1292 = vcombine.high %v1259, %v1274
      %v1294 = vunpack.c.l.s4 1934713408
      %v1295 = vunpack.c.0.s8 %v1294
      %v1296 = vlaneseq
      %v1297 = vshrl.u32 %v1296, 7
      %v1298 = vsub.s32 %v1295, %v1297
      %v1299 = vrot.slane %v1291, %v1298
      %v1301 = vunpack.c.l.s4 1934713408
      %v1302 = vunpack.c.0.s8 %v1301
      %v1303 = vlaneseq
      %v1304 = vshrl.u32 %v1303, 7
      %v1305 = vsub.s32 %v1302, %v1304
      %v1306 = vrot.slane %v1292, %v1305
      %v1307 = vcombine.high %v1283, 0
      %v1308 = vcombine.high %v1290, 0
      %v1309 = vcombine.high %v1299, 0
      %v1310 = vcombine.high %v1306, 0
      %v1311 = vcombine.high %v1165, %v707
      %v1313 = vunpack.c.l.s4 1983009808
      %v1314 = vunpack.c.0.s8 %v1313
      %v1315 = vlaneseq
      %v1316 = vshrl.u32 %v1315, 7
      %v1317 = vsub.s32 %v1314, %v1316
      %v1318 = vrot.slane %v1165, %v1317
      %v1320 = vunpack.c.l.s4 1983009808
      %v1321 = vunpack.c.0.s8 %v1320
      %v1322 = vlaneseq
      %v1323 = vshrl.u32 %v1322, 7
      %v1324 = vsub.s32 %v1321, %v1323
      %v1325 = vrot.slane %v1311, %v1324
      %v1326 = vcombine.high %v1173, %v707
      %v1328 = vunpack.c.l.s4 1983009808
      %v1329 = vunpack.c.0.s8 %v1328
      %v1330 = vlaneseq
      %v1331 = vshrl.u32 %v1330, 7
      %v1332 = vsub.s32 %v1329, %v1331
      %v1333 = vrot.slane %v1173, %v1332
      %v1335 = vunpack.c.l.s4 1983009808
      %v1336 = vunpack.c.0.s8 %v1335
      %v1337 = vlaneseq
      %v1338 = vshrl.u32 %v1337, 7
      %v1339 = vsub.s32 %v1336, %v1338
      %v1340 = vrot.slane %v1326, %v1339
      %v1341 = vcombine.low %v1318, %v1333
      %v1342 = vcombine.high %v1318, %v1333
      %v1344 = vunpack.c.l.s4 1934713408
      %v1345 = vunpack.c.0.s8 %v1344
      %v1346 = vlaneseq
      %v1347 = vshrl.u32 %v1346, 7
      %v1348 = vsub.s32 %v1345, %v1347
      %v1349 = vrot.slane %v1341, %v1348
      %v1351 = vunpack.c.l.s4 1934713408
      %v1352 = vunpack.c.0.s8 %v1351
      %v1353 = vlaneseq
      %v1354 = vshrl.u32 %v1353, 7
      %v1355 = vsub.s32 %v1352, %v1354
      %v1356 = vrot.slane %v1342, %v1355
      %v1357 = vcombine.low %v1325, %v1340
      %v1358 = vcombine.high %v1325, %v1340
      %v1360 = vunpack.c.l.s4 1934713408
      %v1361 = vunpack.c.0.s8 %v1360
      %v1362 = vlaneseq
      %v1363 = vshrl.u32 %v1362, 7
      %v1364 = vsub.s32 %v1361, %v1363
      %v1365 = vrot.slane %v1357, %v1364
      %v1367 = vunpack.c.l.s4 1934713408
      %v1368 = vunpack.c.0.s8 %v1367
      %v1369 = vlaneseq
      %v1370 = vshrl.u32 %v1369, 7
      %v1371 = vsub.s32 %v1368, %v1370
      %v1372 = vrot.slane %v1358, %v1371
      %v1373 = vcombine.high %v1349, 0
      %v1374 = vcombine.high %v1356, 0
      %v1375 = vcombine.high %v1365, 0
      %v1376 = vcombine.high %v1372, 0
      %v1377 = vcombine.high %v1169, %v710
      %v1379 = vunpack.c.l.s4 1983009808
      %v1380 = vunpack.c.0.s8 %v1379
      %v1381 = vlaneseq
      %v1382 = vshrl.u32 %v1381, 7
      %v1383 = vsub.s32 %v1380, %v1382
      %v1384 = vrot.slane %v1169, %v1383
      %v1386 = vunpack.c.l.s4 1983009808
      %v1387 = vunpack.c.0.s8 %v1386
      %v1388 = vlaneseq
      %v1389 = vshrl.u32 %v1388, 7
      %v1390 = vsub.s32 %v1387, %v1389
      %v1391 = vrot.slane %v1377, %v1390
      %v1392 = vcombine.high %v1177, %v710
      %v1394 = vunpack.c.l.s4 1983009808
      %v1395 = vunpack.c.0.s8 %v1394
      %v1396 = vlaneseq
      %v1397 = vshrl.u32 %v1396, 7
      %v1398 = vsub.s32 %v1395, %v1397
      %v1399 = vrot.slane %v1177, %v1398
      %v1401 = vunpack.c.l.s4 1983009808
      %v1402 = vunpack.c.0.s8 %v1401
      %v1403 = vlaneseq
      %v1404 = vshrl.u32 %v1403, 7
      %v1405 = vsub.s32 %v1402, %v1404
      %v1406 = vrot.slane %v1392, %v1405
      %v1407 = vcombine.low %v1384, %v1399
      %v1408 = vcombine.high %v1384, %v1399
      %v1410 = vunpack.c.l.s4 1934713408
      %v1411 = vunpack.c.0.s8 %v1410
      %v1412 = vlaneseq
      %v1413 = vshrl.u32 %v1412, 7
      %v1414 = vsub.s32 %v1411, %v1413
      %v1415 = vrot.slane %v1407, %v1414
      %v1417 = vunpack.c.l.s4 1934713408
      %v1418 = vunpack.c.0.s8 %v1417
      %v1419 = vlaneseq
      %v1420 = vshrl.u32 %v1419, 7
      %v1421 = vsub.s32 %v1418, %v1420
      %v1422 = vrot.slane %v1408, %v1421
      %v1423 = vcombine.low %v1391, %v1406
      %v1424 = vcombine.high %v1391, %v1406
      %v1426 = vunpack.c.l.s4 1934713408
      %v1427 = vunpack.c.0.s8 %v1426
      %v1428 = vlaneseq
      %v1429 = vshrl.u32 %v1428, 7
      %v1430 = vsub.s32 %v1427, %v1429
      %v1431 = vrot.slane %v1423, %v1430
      %v1433 = vunpack.c.l.s4 1934713408
      %v1434 = vunpack.c.0.s8 %v1433
      %v1435 = vlaneseq
      %v1436 = vshrl.u32 %v1435, 7
      %v1437 = vsub.s32 %v1434, %v1436
      %v1438 = vrot.slane %v1424, %v1437
      %v1439 = vcombine.high %v1415, 0
      %v1440 = vcombine.high %v1422, 0
      %v1441 = vcombine.high %v1431, 0
      %v1442 = vcombine.high %v1438, 0
      %1444 = vrot.lane.b32.xlu0 %v1283, 32
      %v1445 = vpop.permute.xlu0 %1444
      %1447 = vrot.lane.b32.xlu0 %v1241, 64
      %v1448 = vpop.permute.xlu0 %1447
      %1450 = vrot.lane.b32.xlu0 %v1307, 96
      %v1451 = vpop.permute.xlu0 %1450
      %1453 = vrot.lane.b32.xlu0 %v1290, 32
      %v1454 = vpop.permute.xlu0 %1453
      %1456 = vrot.lane.b32.xlu0 %v1242, 64
      %v1457 = vpop.permute.xlu0 %1456
      %1459 = vrot.lane.b32.xlu0 %v1308, 96
      %v1460 = vpop.permute.xlu0 %1459
      %1462 = vrot.lane.b32.xlu0 %v1299, 32
      %v1463 = vpop.permute.xlu0 %1462
      %1465 = vrot.lane.b32.xlu0 %v1243, 64
      %v1466 = vpop.permute.xlu0 %1465
      %1468 = vrot.lane.b32.xlu0 %v1309, 96
      %v1469 = vpop.permute.xlu0 %1468
      %1471 = vrot.lane.b32.xlu0 %v1306, 32
      %v1472 = vpop.permute.xlu0 %1471
      %1474 = vrot.lane.b32.xlu0 %v1244, 64
      %v1475 = vpop.permute.xlu0 %1474
      %1477 = vrot.lane.b32.xlu0 %v1310, 96
      %v1478 = vpop.permute.xlu0 %1477
      %1480 = vrot.lane.b32.xlu0 %v1415, 32
      %v1481 = vpop.permute.xlu0 %1480
      %1483 = vrot.lane.b32.xlu0 %v1373, 64
      %v1484 = vpop.permute.xlu0 %1483
      %1486 = vrot.lane.b32.xlu0 %v1439, 96
      %v1487 = vpop.permute.xlu0 %1486
      %1489 = vrot.lane.b32.xlu0 %v1422, 32
      %v1490 = vpop.permute.xlu0 %1489
      %1492 = vrot.lane.b32.xlu0 %v1374, 64
      %v1493 = vpop.permute.xlu0 %1492
      %1495 = vrot.lane.b32.xlu0 %v1440, 96
      %v1496 = vpop.permute.xlu0 %1495
      %1498 = vrot.lane.b32.xlu0 %v1431, 32
      %v1499 = vpop.permute.xlu0 %1498
      %1501 = vrot.lane.b32.xlu0 %v1375, 64
      %v1502 = vpop.permute.xlu0 %1501
      %1504 = vrot.lane.b32.xlu0 %v1441, 96
      %v1505 = vpop.permute.xlu0 %1504
      %1507 = vrot.lane.b32.xlu0 %v1438, 32
      %v1508 = vpop.permute.xlu0 %1507
      %1510 = vrot.lane.b32.xlu0 %v1376, 64
      %v1511 = vpop.permute.xlu0 %1510
      %1513 = vrot.lane.b32.xlu0 %v1442, 96
      %v1514 = vpop.permute.xlu0 %1513
      %v1517 = vsel %vm1064, %v1217, %v1445
      %v1519 = vsel %vm1068, %v1517, %v1448
      %v1521 = vsel %vm1071, %v1519, %v1451
      %v1524 = vsel %vm1064, %v1224, %v1454
      %v1526 = vsel %vm1068, %v1524, %v1457
      %v1528 = vsel %vm1071, %v1526, %v1460
      %v1531 = vsel %vm1064, %v1233, %v1463
      %v1533 = vsel %vm1068, %v1531, %v1466
      %v1535 = vsel %vm1071, %v1533, %v1469
      %v1538 = vsel %vm1064, %v1240, %v1472
      %v1540 = vsel %vm1068, %v1538, %v1475
      %v1542 = vsel %vm1071, %v1540, %v1478
      %v1545 = vsel %vm1064, %v1349, %v1481
      %v1547 = vsel %vm1068, %v1545, %v1484
      %v1549 = vsel %vm1071, %v1547, %v1487
      %v1552 = vsel %vm1064, %v1356, %v1490
      %v1554 = vsel %vm1068, %v1552, %v1493
      %v1556 = vsel %vm1071, %v1554, %v1496
      %v1559 = vsel %vm1064, %v1365, %v1499
      %v1561 = vsel %vm1068, %v1559, %v1502
      %v1563 = vsel %vm1071, %v1561, %v1505
      %v1566 = vsel %vm1064, %v1372, %v1508
      %v1568 = vsel %vm1068, %v1566, %v1511
      %v1570 = vsel %vm1071, %v1568, %v1514
      %vm1571 = vcmask 31744
      %v1573 = vsel %vm1571, %v682, 0
      %vm1575 = vcmask 1041408
      %v1576 = vsel %vm1575, %v1521, 0
      %v1578 = vsel %vm1575, %v1528, 0
      %v1580 = vsel %vm1575, %v1535, 0
      %v1582 = vsel %vm1575, %v1542, 0
      %v1584 = vsel %vm1575, %v1549, 0
      %v1586 = vsel %vm1575, %v1556, 0
      %v1588 = vsel %vm1575, %v1563, 0
      %v1590 = vsel %vm1575, %v1570, 0
      %1592 = vmatprep.subr.bf16.mxu0 %v1578
      %1593 = vmatpush1.bf16.msra.mxu0 %v1576
      %1594 = vmatprep.subr.bf16.mxu0 0
      %1595 = vmatpush1.bf16.msra.mxu0 0
      %1596 = vmatprep.subr.bf16.mxu0 0
      %1597 = vmatpush1.bf16.msra.mxu0 0
      %1598 = vmatprep.subr.bf16.mxu0 0
      %1599 = vmatpush1.bf16.msra.mxu0 0
      %1600 = vmatprep.subr.bf16.mxu0 0
      %1601 = vmatpush1.bf16.msra.mxu0 0
      %1602 = vmatprep.subr.bf16.mxu0 0
      %1603 = vmatpush1.bf16.msra.mxu0 0
      %1604 = vmatprep.subr.bf16.mxu0 0
      %1605 = vmatpush1.bf16.msra.mxu0 0
      %1606 = vmatprep.subr.bf16.mxu0 0
      %1607 = vmatpush1.bf16.msra.mxu0 0
      %1608 = vmatprep.subr.bf16.mxu0 0
      %1609 = vmatpush1.bf16.msra.mxu0 0
      %1610 = vmatprep.subr.bf16.mxu0 0
      %1611 = vmatpush1.bf16.msra.mxu0 0
      %1612 = vmatprep.subr.bf16.mxu0 0
      %1613 = vmatpush1.bf16.msra.mxu0 0
      %1614 = vmatprep.subr.bf16.mxu0 0
      %1615 = vmatpush1.bf16.msra.mxu0 0
      %1616 = vmatprep.subr.bf16.mxu0 0
      %1617 = vmatpush1.bf16.msra.mxu0 0
      %1618 = vmatprep.subr.bf16.mxu0 0
      %1619 = vmatpush1.bf16.msra.mxu0 0
      %1620 = vmatprep.subr.bf16.mxu0 0
      %1621 = vmatpush1.bf16.msra.mxu0 0
      %1622 = vmatprep.subr.bf16.mxu0 0
      %1623 = vmatpush1.bf16.msra.mxu0 0
      %1624 = vmatprep.mubr.bf16.mxu0 0
      %1625 = vmatmul.mubr.bf16.gmra.mrb[0].mxu0 %v1573
      %v1626 = vpop.f32.mrb[0].mxu0
      %v1627 = vadd.f32 0.0, %v1626
      %v1628 = vpop.f32.mrb[0].mxu0
      %v1629 = vadd.f32 0.0, %v1628
      %v1630 = vpop.f32.mrb[0].mxu0
      %v1631 = vpop.f32.mrb[0].mxu0
      %1632 = vdwg.mxu0
      %1633 = vmatprep.subr.bf16.mxu0 %v1582
      %1634 = vmatpush1.bf16.msra.mxu0 %v1580
      %1635 = vmatprep.subr.bf16.mxu0 0
      %1636 = vmatpush1.bf16.msra.mxu0 0
      %1637 = vmatprep.subr.bf16.mxu0 0
      %1638 = vmatpush1.bf16.msra.mxu0 0
      %1639 = vmatprep.subr.bf16.mxu0 0
      %1640 = vmatpush1.bf16.msra.mxu0 0
      %1641 = vmatprep.subr.bf16.mxu0 0
      %1642 = vmatpush1.bf16.msra.mxu0 0
      %1643 = vmatprep.subr.bf16.mxu0 0
      %1644 = vmatpush1.bf16.msra.mxu0 0
      %1645 = vmatprep.subr.bf16.mxu0 0
      %1646 = vmatpush1.bf16.msra.mxu0 0
      %1647 = vmatprep.subr.bf16.mxu0 0
      %1648 = vmatpush1.bf16.msra.mxu0 0
      %1649 = vmatprep.subr.bf16.mxu0 0
      %1650 = vmatpush1.bf16.msra.mxu0 0
      %1651 = vmatprep.subr.bf16.mxu0 0
      %1652 = vmatpush1.bf16.msra.mxu0 0
      %1653 = vmatprep.subr.bf16.mxu0 0
      %1654 = vmatpush1.bf16.msra.mxu0 0
      %1655 = vmatprep.subr.bf16.mxu0 0
      %1656 = vmatpush1.bf16.msra.mxu0 0
      %1657 = vmatprep.subr.bf16.mxu0 0
      %1658 = vmatpush1.bf16.msra.mxu0 0
      %1659 = vmatprep.subr.bf16.mxu0 0
      %1660 = vmatpush1.bf16.msra.mxu0 0
      %1661 = vmatprep.subr.bf16.mxu0 0
      %1662 = vmatpush1.bf16.msra.mxu0 0
      %1663 = vmatprep.subr.bf16.mxu0 0
      %1664 = vmatpush1.bf16.msra.mxu0 0
      %1665 = vmatprep.mubr.bf16.mxu0 0
      %1666 = vmatmul.mubr.bf16.gmra.mrb[0].mxu0 %v1573
      %v1667 = vpop.f32.mrb[0].mxu0
      %v1668 = vadd.f32 0.0, %v1667
      %v1669 = vpop.f32.mrb[0].mxu0
      %v1670 = vadd.f32 0.0, %v1669
      %v1671 = vpop.f32.mrb[0].mxu0
      %v1672 = vpop.f32.mrb[0].mxu0
      %1673 = vdwg.mxu0
      %1674 = vmatprep.subr.bf16.mxu0 %v1586
      %1675 = vmatpush1.bf16.msra.mxu0 %v1584
      %1676 = vmatprep.subr.bf16.mxu0 0
      %1677 = vmatpush1.bf16.msra.mxu0 0
      %1678 = vmatprep.subr.bf16.mxu0 0
      %1679 = vmatpush1.bf16.msra.mxu0 0
      %1680 = vmatprep.subr.bf16.mxu0 0
      %1681 = vmatpush1.bf16.msra.mxu0 0
      %1682 = vmatprep.subr.bf16.mxu0 0
      %1683 = vmatpush1.bf16.msra.mxu0 0
      %1684 = vmatprep.subr.bf16.mxu0 0
      %1685 = vmatpush1.bf16.msra.mxu0 0
      %1686 = vmatprep.subr.bf16.mxu0 0
      %1687 = vmatpush1.bf16.msra.mxu0 0
      %1688 = vmatprep.subr.bf16.mxu0 0
      %1689 = vmatpush1.bf16.msra.mxu0 0
      %1690 = vmatprep.subr.bf16.mxu0 0
      %1691 = vmatpush1.bf16.msra.mxu0 0
      %1692 = vmatprep.subr.bf16.mxu0 0
      %1693 = vmatpush1.bf16.msra.mxu0 0
      %1694 = vmatprep.subr.bf16.mxu0 0
      %1695 = vmatpush1.bf16.msra.mxu0 0
      %1696 = vmatprep.subr.bf16.mxu0 0
      %1697 = vmatpush1.bf16.msra.mxu0 0
      %1698 = vmatprep.subr.bf16.mxu0 0
      %1699 = vmatpush1.bf16.msra.mxu0 0
      %1700 = vmatprep.subr.bf16.mxu0 0
      %1701 = vmatpush1.bf16.msra.mxu0 0
      %1702 = vmatprep.subr.bf16.mxu0 0
      %1703 = vmatpush1.bf16.msra.mxu0 0
      %1704 = vmatprep.subr.bf16.mxu0 0
      %1705 = vmatpush1.bf16.msra.mxu0 0
      %1706 = vmatprep.mubr.bf16.mxu0 0
      %1707 = vmatmul.mubr.bf16.gmra.mrb[0].mxu0 %v1573
      %v1708 = vpop.f32.mrb[0].mxu0
      %v1709 = vadd.f32 0.0, %v1708
      %v1710 = vpop.f32.mrb[0].mxu0
      %v1711 = vadd.f32 0.0, %v1710
      %v1712 = vpop.f32.mrb[0].mxu0
      %v1713 = vpop.f32.mrb[0].mxu0
      %1714 = vdwg.mxu0
      %1715 = vmatprep.subr.bf16.mxu0 %v1590
      %1716 = vmatpush1.bf16.msra.mxu0 %v1588
      %1717 = vmatprep.subr.bf16.mxu0 0
      %1718 = vmatpush1.bf16.msra.mxu0 0
      %1719 = vmatprep.subr.bf16.mxu0 0
      %1720 = vmatpush1.bf16.msra.mxu0 0
      %1721 = vmatprep.subr.bf16.mxu0 0
      %1722 = vmatpush1.bf16.msra.mxu0 0
      %1723 = vmatprep.subr.bf16.mxu0 0
      %1724 = vmatpush1.bf16.msra.mxu0 0
      %1725 = vmatprep.subr.bf16.mxu0 0
      %1726 = vmatpush1.bf16.msra.mxu0 0
      %1727 = vmatprep.subr.bf16.mxu0 0
      %1728 = vmatpush1.bf16.msra.mxu0 0
      %1729 = vmatprep.subr.bf16.mxu0 0
      %1730 = vmatpush1.bf16.msra.mxu0 0
      %1731 = vmatprep.subr.bf16.mxu0 0
      %1732 = vmatpush1.bf16.msra.mxu0 0
      %1733 = vmatprep.subr.bf16.mxu0 0
      %1734 = vmatpush1.bf16.msra.mxu0 0
      %1735 = vmatprep.subr.bf16.mxu0 0
      %1736 = vmatpush1.bf16.msra.mxu0 0
      %1737 = vmatprep.subr.bf16.mxu0 0
      %1738 = vmatpush1.bf16.msra.mxu0 0
      %1739 = vmatprep.subr.bf16.mxu0 0
      %1740 = vmatpush1.bf16.msra.mxu0 0
      %1741 = vmatprep.subr.bf16.mxu0 0
      %1742 = vmatpush1.bf16.msra.mxu0 0
      %1743 = vmatprep.subr.bf16.mxu0 0
      %1744 = vmatpush1.bf16.msra.mxu0 0
      %1745 = vmatprep.subr.bf16.mxu0 0
      %1746 = vmatpush1.bf16.msra.mxu0 0
      %1747 = vmatprep.mubr.bf16.mxu0 0
      %1748 = vmatmul.mubr.bf16.gmra.mrb[0].mxu0 %v1573
      %v1749 = vpop.f32.mrb[0].mxu0
      %v1750 = vadd.f32 0.0, %v1749
      %v1751 = vpop.f32.mrb[0].mxu0
      %v1752 = vadd.f32 0.0, %v1751
      %v1753 = vpop.f32.mrb[0].mxu0
      %v1754 = vpop.f32.mrb[0].mxu0
      %1755 = vdwg.mxu0
      %v1757 = vsel %vm1571, %v681, 0
      %v1759 = vsel %vm1575, %v1073, 0
      %v1761 = vsel %vm1575, %v1080, 0
      %v1763 = vsel %vm1575, %v1087, 0
      %v1765 = vsel %vm1575, %v1094, 0
      %v1767 = vsel %vm1575, %v1101, 0
      %v1769 = vsel %vm1575, %v1108, 0
      %v1771 = vsel %vm1575, %v1115, 0
      %v1773 = vsel %vm1575, %v1122, 0
      %1775 = vmatprep.subr.bf16.mxu0 %v1761
      %1776 = vmatpush1.bf16.msra.mxu0 %v1759
      %1777 = vmatprep.subr.bf16.mxu0 0
      %1778 = vmatpush1.bf16.msra.mxu0 0
      %1779 = vmatprep.subr.bf16.mxu0 0
      %1780 = vmatpush1.bf16.msra.mxu0 0
      %1781 = vmatprep.subr.bf16.mxu0 0
      %1782 = vmatpush1.bf16.msra.mxu0 0
      %1783 = vmatprep.subr.bf16.mxu0 0
      %1784 = vmatpush1.bf16.msra.mxu0 0
      %1785 = vmatprep.subr.bf16.mxu0 0
      %1786 = vmatpush1.bf16.msra.mxu0 0
      %1787 = vmatprep.subr.bf16.mxu0 0
      %1788 = vmatpush1.bf16.msra.mxu0 0
      %1789 = vmatprep.subr.bf16.mxu0 0
      %1790 = vmatpush1.bf16.msra.mxu0 0
      %1791 = vmatprep.subr.bf16.mxu0 0
      %1792 = vmatpush1.bf16.msra.mxu0 0
      %1793 = vmatprep.subr.bf16.mxu0 0
      %1794 = vmatpush1.bf16.msra.mxu0 0
      %1795 = vmatprep.subr.bf16.mxu0 0
      %1796 = vmatpush1.bf16.msra.mxu0 0
      %1797 = vmatprep.subr.bf16.mxu0 0
      %1798 = vmatpush1.bf16.msra.mxu0 0
      %1799 = vmatprep.subr.bf16.mxu0 0
      %1800 = vmatpush1.bf16.msra.mxu0 0
      %1801 = vmatprep.subr.bf16.mxu0 0
      %1802 = vmatpush1.bf16.msra.mxu0 0
      %1803 = vmatprep.subr.bf16.mxu0 0
      %1804 = vmatpush1.bf16.msra.mxu0 0
      %1805 = vmatprep.subr.bf16.mxu0 0
      %1806 = vmatpush1.bf16.msra.mxu0 0
      %1807 = vmatprep.mubr.bf16.mxu0 0
      %1808 = vmatmul.mubr.bf16.gmra.mrb[0].mxu0 %v1757
      %v1809 = vpop.f32.mrb[0].mxu0
      %v1810 = vadd.f32 %v1627, %v1809
      %v1811 = vpop.f32.mrb[0].mxu0
      %v1812 = vadd.f32 %v1629, %v1811
      %v1813 = vpop.f32.mrb[0].mxu0
      %v1814 = vpop.f32.mrb[0].mxu0
      %1815 = vdwg.mxu0
      %1816 = vmatprep.subr.bf16.mxu0 %v1765
      %1817 = vmatpush1.bf16.msra.mxu0 %v1763
      %1818 = vmatprep.subr.bf16.mxu0 0
      %1819 = vmatpush1.bf16.msra.mxu0 0
      %1820 = vmatprep.subr.bf16.mxu0 0
      %1821 = vmatpush1.bf16.msra.mxu0 0
      %1822 = vmatprep.subr.bf16.mxu0 0
      %1823 = vmatpush1.bf16.msra.mxu0 0
      %1824 = vmatprep.subr.bf16.mxu0 0
      %1825 = vmatpush1.bf16.msra.mxu0 0
      %1826 = vmatprep.subr.bf16.mxu0 0
      %1827 = vmatpush1.bf16.msra.mxu0 0
      %1828 = vmatprep.subr.bf16.mxu0 0
      %1829 = vmatpush1.bf16.msra.mxu0 0
      %1830 = vmatprep.subr.bf16.mxu0 0
      %1831 = vmatpush1.bf16.msra.mxu0 0
      %1832 = vmatprep.subr.bf16.mxu0 0
      %1833 = vmatpush1.bf16.msra.mxu0 0
      %1834 = vmatprep.subr.bf16.mxu0 0
      %1835 = vmatpush1.bf16.msra.mxu0 0
      %1836 = vmatprep.subr.bf16.mxu0 0
      %1837 = vmatpush1.bf16.msra.mxu0 0
      %1838 = vmatprep.subr.bf16.mxu0 0
      %1839 = vmatpush1.bf16.msra.mxu0 0
      %1840 = vmatprep.subr.bf16.mxu0 0
      %1841 = vmatpush1.bf16.msra.mxu0 0
      %1842 = vmatprep.subr.bf16.mxu0 0
      %1843 = vmatpush1.bf16.msra.mxu0 0
      %1844 = vmatprep.subr.bf16.mxu0 0
      %1845 = vmatpush1.bf16.msra.mxu0 0
      %1846 = vmatprep.subr.bf16.mxu0 0
      %1847 = vmatpush1.bf16.msra.mxu0 0
      %1848 = vmatprep.mubr.bf16.mxu0 0
      %1849 = vmatmul.mubr.bf16.gmra.mrb[0].mxu0 %v1757
      %v1850 = vpop.f32.mrb[0].mxu0
      %v1851 = vadd.f32 %v1668, %v1850
      %v1852 = vpop.f32.mrb[0].mxu0
      %v1853 = vadd.f32 %v1670, %v1852
      %v1854 = vpop.f32.mrb[0].mxu0
      %v1855 = vpop.f32.mrb[0].mxu0
      %1856 = vdwg.mxu0
      %1857 = vmatprep.subr.bf16.mxu0 %v1769
      %1858 = vmatpush1.bf16.msra.mxu0 %v1767
      %1859 = vmatprep.subr.bf16.mxu0 0
      %1860 = vmatpush1.bf16.msra.mxu0 0
      %1861 = vmatprep.subr.bf16.mxu0 0
      %1862 = vmatpush1.bf16.msra.mxu0 0
      %1863 = vmatprep.subr.bf16.mxu0 0
      %1864 = vmatpush1.bf16.msra.mxu0 0
      %1865 = vmatprep.subr.bf16.mxu0 0
      %1866 = vmatpush1.bf16.msra.mxu0 0
      %1867 = vmatprep.subr.bf16.mxu0 0
      %1868 = vmatpush1.bf16.msra.mxu0 0
      %1869 = vmatprep.subr.bf16.mxu0 0
      %1870 = vmatpush1.bf16.msra.mxu0 0
      %1871 = vmatprep.subr.bf16.mxu0 0
      %1872 = vmatpush1.bf16.msra.mxu0 0
      %1873 = vmatprep.subr.bf16.mxu0 0
      %1874 = vmatpush1.bf16.msra.mxu0 0
      %1875 = vmatprep.subr.bf16.mxu0 0
      %1876 = vmatpush1.bf16.msra.mxu0 0
      %1877 = vmatprep.subr.bf16.mxu0 0
      %1878 = vmatpush1.bf16.msra.mxu0 0
      %1879 = vmatprep.subr.bf16.mxu0 0
      %1880 = vmatpush1.bf16.msra.mxu0 0
      %1881 = vmatprep.subr.bf16.mxu0 0
      %1882 = vmatpush1.bf16.msra.mxu0 0
      %1883 = vmatprep.subr.bf16.mxu0 0
      %1884 = vmatpush1.bf16.msra.mxu0 0
      %1885 = vmatprep.subr.bf16.mxu0 0
      %1886 = vmatpush1.bf16.msra.mxu0 0
      %1887 = vmatprep.subr.bf16.mxu0 0
      %1888 = vmatpush1.bf16.msra.mxu0 0
      %1889 = vmatprep.mubr.bf16.mxu0 0
      %1890 = vmatmul.mubr.bf16.gmra.mrb[0].mxu0 %v1757
      %v1891 = vpop.f32.mrb[0].mxu0
      %v1892 = vadd.f32 %v1709, %v1891
      %v1893 = vpop.f32.mrb[0].mxu0
      %v1894 = vadd.f32 %v1711, %v1893
      %v1895 = vpop.f32.mrb[0].mxu0
      %v1896 = vpop.f32.mrb[0].mxu0
      %1897 = vdwg.mxu0
      %1898 = vmatprep.subr.bf16.mxu0 %v1773
      %1899 = vmatpush1.bf16.msra.mxu0 %v1771
      %1900 = vmatprep.subr.bf16.mxu0 0
      %1901 = vmatpush1.bf16.msra.mxu0 0
      %1902 = vmatprep.subr.bf16.mxu0 0
      %1903 = vmatpush1.bf16.msra.mxu0 0
      %1904 = vmatprep.subr.bf16.mxu0 0
      %1905 = vmatpush1.bf16.msra.mxu0 0
      %1906 = vmatprep.subr.bf16.mxu0 0
      %1907 = vmatpush1.bf16.msra.mxu0 0
      %1908 = vmatprep.subr.bf16.mxu0 0
      %1909 = vmatpush1.bf16.msra.mxu0 0
      %1910 = vmatprep.subr.bf16.mxu0 0
      %1911 = vmatpush1.bf16.msra.mxu0 0
      %1912 = vmatprep.subr.bf16.mxu0 0
      %1913 = vmatpush1.bf16.msra.mxu0 0
      %1914 = vmatprep.subr.bf16.mxu0 0
      %1915 = vmatpush1.bf16.msra.mxu0 0
      %1916 = vmatprep.subr.bf16.mxu0 0
      %1917 = vmatpush1.bf16.msra.mxu0 0
      %1918 = vmatprep.subr.bf16.mxu0 0
      %1919 = vmatpush1.bf16.msra.mxu0 0
      %1920 = vmatprep.subr.bf16.mxu0 0
      %1921 = vmatpush1.bf16.msra.mxu0 0
      %1922 = vmatprep.subr.bf16.mxu0 0
      %1923 = vmatpush1.bf16.msra.mxu0 0
      %1924 = vmatprep.subr.bf16.mxu0 0
      %1925 = vmatpush1.bf16.msra.mxu0 0
      %1926 = vmatprep.subr.bf16.mxu0 0
      %1927 = vmatpush1.bf16.msra.mxu0 0
      %1928 = vmatprep.subr.bf16.mxu0 0
      %1929 = vmatpush1.bf16.msra.mxu0 0
      %1930 = vmatprep.mubr.bf16.mxu0 0
      %1931 = vmatmul.mubr.bf16.gmra.mrb[0].mxu0 %v1757
      %v1932 = vpop.f32.mrb[0].mxu0
      %v1933 = vadd.f32 %v1750, %v1932
      %v1934 = vpop.f32.mrb[0].mxu0
      %v1935 = vadd.f32 %v1752, %v1934
      %v1936 = vpop.f32.mrb[0].mxu0
      %v1937 = vpop.f32.mrb[0].mxu0
      %1938 = vdwg.mxu0
      %1939 = vrot.lane.b32.xlu0 %v669, 126
      %v1940 = vpop.permute.xlu0 %1939
      %1941 = vrot.lane.b32.xlu0 %v670, 126
      %v1942 = vpop.permute.xlu0 %1941
      %1943 = vrot.lane.b32.xlu0 %v672, 126
      %v1944 = vpop.permute.xlu0 %1943
      %1945 = vrot.lane.b32.xlu0 %v673, 126
      %v1946 = vpop.permute.xlu0 %1945
      %1947 = vrot.lane.b32.xlu0 %v675, 126
      %v1948 = vpop.permute.xlu0 %1947
      %1949 = vrot.lane.b32.xlu0 %v676, 126
      %v1950 = vpop.permute.xlu0 %1949
      %1951 = vrot.lane.b32.xlu0 %v678, 126
      %v1952 = vpop.permute.xlu0 %1951
      %1953 = vrot.lane.b32.xlu0 %v679, 126
      %v1954 = vpop.permute.xlu0 %1953
      %v1957 = vpack.i.b16 %v1944, %v1940
      %v1959 = vshrl.u32 %v1940, 16
      %v1960 = vshrl.u32 %v1944, 16
      %v1961 = vpack.i.b16 %v1960, %v1959
      %v1965 = vpack.i.b16 %v1952, %v1948
      %v1967 = vshrl.u32 %v1948, 16
      %v1968 = vshrl.u32 %v1952, 16
      %v1969 = vpack.i.b16 %v1968, %v1967
      %v1973 = vpack.i.b16 %v1946, %v1942
      %v1975 = vshrl.u32 %v1942, 16
      %v1976 = vshrl.u32 %v1946, 16
      %v1977 = vpack.i.b16 %v1976, %v1975
      %v1981 = vpack.i.b16 %v1954, %v1950
      %v1983 = vshrl.u32 %v1950, 16
      %v1984 = vshrl.u32 %v1954, 16
      %v1985 = vpack.i.b16 %v1984, %v1983
      %v1987 = vcombine.high %v1957, %v707
      %v1989 = vunpack.c.l.s4 1983009808
      %v1990 = vunpack.c.0.s8 %v1989
      %v1991 = vlaneseq
      %v1992 = vshrl.u32 %v1991, 7
      %v1993 = vsub.s32 %v1990, %v1992
      %v1994 = vrot.slane %v1957, %v1993
      %v1996 = vunpack.c.l.s4 1983009808
      %v1997 = vunpack.c.0.s8 %v1996
      %v1998 = vlaneseq
      %v1999 = vshrl.u32 %v1998, 7
      %v2000 = vsub.s32 %v1997, %v1999
      %v2001 = vrot.slane %v1987, %v2000
      %v2002 = vcombine.high %v1965, %v707
      %v2004 = vunpack.c.l.s4 1983009808
      %v2005 = vunpack.c.0.s8 %v2004
      %v2006 = vlaneseq
      %v2007 = vshrl.u32 %v2006, 7
      %v2008 = vsub.s32 %v2005, %v2007
      %v2009 = vrot.slane %v1965, %v2008
      %v2011 = vunpack.c.l.s4 1983009808
      %v2012 = vunpack.c.0.s8 %v2011
      %v2013 = vlaneseq
      %v2014 = vshrl.u32 %v2013, 7
      %v2015 = vsub.s32 %v2012, %v2014
      %v2016 = vrot.slane %v2002, %v2015
      %v2017 = vcombine.low %v1994, %v2009
      %v2018 = vcombine.high %v1994, %v2009
      %v2020 = vunpack.c.l.s4 1934713408
      %v2021 = vunpack.c.0.s8 %v2020
      %v2022 = vlaneseq
      %v2023 = vshrl.u32 %v2022, 7
      %v2024 = vsub.s32 %v2021, %v2023
      %v2025 = vrot.slane %v2017, %v2024
      %v2027 = vunpack.c.l.s4 1934713408
      %v2028 = vunpack.c.0.s8 %v2027
      %v2029 = vlaneseq
      %v2030 = vshrl.u32 %v2029, 7
      %v2031 = vsub.s32 %v2028, %v2030
      %v2032 = vrot.slane %v2018, %v2031
      %v2033 = vcombine.low %v2001, %v2016
      %v2034 = vcombine.high %v2001, %v2016
      %v2036 = vunpack.c.l.s4 1934713408
      %v2037 = vunpack.c.0.s8 %v2036
      %v2038 = vlaneseq
      %v2039 = vshrl.u32 %v2038, 7
      %v2040 = vsub.s32 %v2037, %v2039
      %v2041 = vrot.slane %v2033, %v2040
      %v2043 = vunpack.c.l.s4 1934713408
      %v2044 = vunpack.c.0.s8 %v2043
      %v2045 = vlaneseq
      %v2046 = vshrl.u32 %v2045, 7
      %v2047 = vsub.s32 %v2044, %v2046
      %v2048 = vrot.slane %v2034, %v2047
      %v2049 = vcombine.high %v2025, 0
      %v2050 = vcombine.high %v2032, 0
      %v2051 = vcombine.high %v2041, 0
      %v2052 = vcombine.high %v2048, 0
      %v2053 = vcombine.high %v1961, %v710
      %v2055 = vunpack.c.l.s4 1983009808
      %v2056 = vunpack.c.0.s8 %v2055
      %v2057 = vlaneseq
      %v2058 = vshrl.u32 %v2057, 7
      %v2059 = vsub.s32 %v2056, %v2058
      %v2060 = vrot.slane %v1961, %v2059
      %v2062 = vunpack.c.l.s4 1983009808
      %v2063 = vunpack.c.0.s8 %v2062
      %v2064 = vlaneseq
      %v2065 = vshrl.u32 %v2064, 7
      %v2066 = vsub.s32 %v2063, %v2065
      %v2067 = vrot.slane %v2053, %v2066
      %v2068 = vcombine.high %v1969, %v710
      %v2070 = vunpack.c.l.s4 1983009808
      %v2071 = vunpack.c.0.s8 %v2070
      %v2072 = vlaneseq
      %v2073 = vshrl.u32 %v2072, 7
      %v2074 = vsub.s32 %v2071, %v2073
      %v2075 = vrot.slane %v1969, %v2074
      %v2077 = vunpack.c.l.s4 1983009808
      %v2078 = vunpack.c.0.s8 %v2077
      %v2079 = vlaneseq
      %v2080 = vshrl.u32 %v2079, 7
      %v2081 = vsub.s32 %v2078, %v2080
      %v2082 = vrot.slane %v2068, %v2081
      %v2083 = vcombine.low %v2060, %v2075
      %v2084 = vcombine.high %v2060, %v2075
      %v2086 = vunpack.c.l.s4 1934713408
      %v2087 = vunpack.c.0.s8 %v2086
      %v2088 = vlaneseq
      %v2089 = vshrl.u32 %v2088, 7
      %v2090 = vsub.s32 %v2087, %v2089
      %v2091 = vrot.slane %v2083, %v2090
      %v2093 = vunpack.c.l.s4 1934713408
      %v2094 = vunpack.c.0.s8 %v2093
      %v2095 = vlaneseq
      %v2096 = vshrl.u32 %v2095, 7
      %v2097 = vsub.s32 %v2094, %v2096
      %v2098 = vrot.slane %v2084, %v2097
      %v2099 = vcombine.low %v2067, %v2082
      %v2100 = vcombine.high %v2067, %v2082
      %v2102 = vunpack.c.l.s4 1934713408
      %v2103 = vunpack.c.0.s8 %v2102
      %v2104 = vlaneseq
      %v2105 = vshrl.u32 %v2104, 7
      %v2106 = vsub.s32 %v2103, %v2105
      %v2107 = vrot.slane %v2099, %v2106
      %v2109 = vunpack.c.l.s4 1934713408
      %v2110 = vunpack.c.0.s8 %v2109
      %v2111 = vlaneseq
      %v2112 = vshrl.u32 %v2111, 7
      %v2113 = vsub.s32 %v2110, %v2112
      %v2114 = vrot.slane %v2100, %v2113
      %v2115 = vcombine.high %v2091, 0
      %v2116 = vcombine.high %v2098, 0
      %v2117 = vcombine.high %v2107, 0
      %v2118 = vcombine.high %v2114, 0
      %v2119 = vcombine.high %v1973, %v707
      %v2121 = vunpack.c.l.s4 1983009808
      %v2122 = vunpack.c.0.s8 %v2121
      %v2123 = vlaneseq
      %v2124 = vshrl.u32 %v2123, 7
      %v2125 = vsub.s32 %v2122, %v2124
      %v2126 = vrot.slane %v1973, %v2125
      %v2128 = vunpack.c.l.s4 1983009808
      %v2129 = vunpack.c.0.s8 %v2128
      %v2130 = vlaneseq
      %v2131 = vshrl.u32 %v2130, 7
      %v2132 = vsub.s32 %v2129, %v2131
      %v2133 = vrot.slane %v2119, %v2132
      %v2134 = vcombine.high %v1981, %v707
      %v2136 = vunpack.c.l.s4 1983009808
      %v2137 = vunpack.c.0.s8 %v2136
      %v2138 = vlaneseq
      %v2139 = vshrl.u32 %v2138, 7
      %v2140 = vsub.s32 %v2137, %v2139
      %v2141 = vrot.slane %v1981, %v2140
      %v2143 = vunpack.c.l.s4 1983009808
      %v2144 = vunpack.c.0.s8 %v2143
      %v2145 = vlaneseq
      %v2146 = vshrl.u32 %v2145, 7
      %v2147 = vsub.s32 %v2144, %v2146
      %v2148 = vrot.slane %v2134, %v2147
      %v2149 = vcombine.low %v2126, %v2141
      %v2150 = vcombine.high %v2126, %v2141
      %v2152 = vunpack.c.l.s4 1934713408
      %v2153 = vunpack.c.0.s8 %v2152
      %v2154 = vlaneseq
      %v2155 = vshrl.u32 %v2154, 7
      %v2156 = vsub.s32 %v2153, %v2155
      %v2157 = vrot.slane %v2149, %v2156
      %v2159 = vunpack.c.l.s4 1934713408
      %v2160 = vunpack.c.0.s8 %v2159
      %v2161 = vlaneseq
      %v2162 = vshrl.u32 %v2161, 7
      %v2163 = vsub.s32 %v2160, %v2162
      %v2164 = vrot.slane %v2150, %v2163
      %v2165 = vcombine.low %v2133, %v2148
      %v2166 = vcombine.high %v2133, %v2148
      %v2168 = vunpack.c.l.s4 1934713408
      %v2169 = vunpack.c.0.s8 %v2168
      %v2170 = vlaneseq
      %v2171 = vshrl.u32 %v2170, 7
      %v2172 = vsub.s32 %v2169, %v2171
      %v2173 = vrot.slane %v2165, %v2172
      %v2175 = vunpack.c.l.s4 1934713408
      %v2176 = vunpack.c.0.s8 %v2175
      %v2177 = vlaneseq
      %v2178 = vshrl.u32 %v2177, 7
      %v2179 = vsub.s32 %v2176, %v2178
      %v2180 = vrot.slane %v2166, %v2179
      %v2181 = vcombine.high %v2157, 0
      %v2182 = vcombine.high %v2164, 0
      %v2183 = vcombine.high %v2173, 0
      %v2184 = vcombine.high %v2180, 0
      %v2185 = vcombine.high %v1977, %v710
      %v2187 = vunpack.c.l.s4 1983009808
      %v2188 = vunpack.c.0.s8 %v2187
      %v2189 = vlaneseq
      %v2190 = vshrl.u32 %v2189, 7
      %v2191 = vsub.s32 %v2188, %v2190
      %v2192 = vrot.slane %v1977, %v2191
      %v2194 = vunpack.c.l.s4 1983009808
      %v2195 = vunpack.c.0.s8 %v2194
      %v2196 = vlaneseq
      %v2197 = vshrl.u32 %v2196, 7
      %v2198 = vsub.s32 %v2195, %v2197
      %v2199 = vrot.slane %v2185, %v2198
      %v2200 = vcombine.high %v1985, %v710
      %v2202 = vunpack.c.l.s4 1983009808
      %v2203 = vunpack.c.0.s8 %v2202
      %v2204 = vlaneseq
      %v2205 = vshrl.u32 %v2204, 7
      %v2206 = vsub.s32 %v2203, %v2205
      %v2207 = vrot.slane %v1985, %v2206
      %v2209 = vunpack.c.l.s4 1983009808
      %v2210 = vunpack.c.0.s8 %v2209
      %v2211 = vlaneseq
      %v2212 = vshrl.u32 %v2211, 7
      %v2213 = vsub.s32 %v2210, %v2212
      %v2214 = vrot.slane %v2200, %v2213
      %v2215 = vcombine.low %v2192, %v2207
      %v2216 = vcombine.high %v2192, %v2207
      %v2218 = vunpack.c.l.s4 1934713408
      %v2219 = vunpack.c.0.s8 %v2218
      %v2220 = vlaneseq
      %v2221 = vshrl.u32 %v2220, 7
      %v2222 = vsub.s32 %v2219, %v2221
      %v2223 = vrot.slane %v2215, %v2222
      %v2225 = vunpack.c.l.s4 1934713408
      %v2226 = vunpack.c.0.s8 %v2225
      %v2227 = vlaneseq
      %v2228 = vshrl.u32 %v2227, 7
      %v2229 = vsub.s32 %v2226, %v2228
      %v2230 = vrot.slane %v2216, %v2229
      %v2231 = vcombine.low %v2199, %v2214
      %v2232 = vcombine.high %v2199, %v2214
      %v2234 = vunpack.c.l.s4 1934713408
      %v2235 = vunpack.c.0.s8 %v2234
      %v2236 = vlaneseq
      %v2237 = vshrl.u32 %v2236, 7
      %v2238 = vsub.s32 %v2235, %v2237
      %v2239 = vrot.slane %v2231, %v2238
      %v2241 = vunpack.c.l.s4 1934713408
      %v2242 = vunpack.c.0.s8 %v2241
      %v2243 = vlaneseq
      %v2244 = vshrl.u32 %v2243, 7
      %v2245 = vsub.s32 %v2242, %v2244
      %v2246 = vrot.slane %v2232, %v2245
      %v2247 = vcombine.high %v2223, 0
      %v2248 = vcombine.high %v2230, 0
      %v2249 = vcombine.high %v2239, 0
      %v2250 = vcombine.high %v2246, 0
      %2252 = vrot.lane.b32.xlu0 %v2091, 32
      %v2253 = vpop.permute.xlu0 %2252
      %2255 = vrot.lane.b32.xlu0 %v2049, 64
      %v2256 = vpop.permute.xlu0 %2255
      %2258 = vrot.lane.b32.xlu0 %v2115, 96
      %v2259 = vpop.permute.xlu0 %2258
      %2261 = vrot.lane.b32.xlu0 %v2098, 32
      %v2262 = vpop.permute.xlu0 %2261
      %2264 = vrot.lane.b32.xlu0 %v2050, 64
      %v2265 = vpop.permute.xlu0 %2264
      %2267 = vrot.lane.b32.xlu0 %v2116, 96
      %v2268 = vpop.permute.xlu0 %2267
      %2270 = vrot.lane.b32.xlu0 %v2107, 32
      %v2271 = vpop.permute.xlu0 %2270
      %2273 = vrot.lane.b32.xlu0 %v2051, 64
      %v2274 = vpop.permute.xlu0 %2273
      %2276 = vrot.lane.b32.xlu0 %v2117, 96
      %v2277 = vpop.permute.xlu0 %2276
      %2279 = vrot.lane.b32.xlu0 %v2114, 32
      %v2280 = vpop.permute.xlu0 %2279
      %2282 = vrot.lane.b32.xlu0 %v2052, 64
      %v2283 = vpop.permute.xlu0 %2282
      %2285 = vrot.lane.b32.xlu0 %v2118, 96
      %v2286 = vpop.permute.xlu0 %2285
      %2288 = vrot.lane.b32.xlu0 %v2223, 32
      %v2289 = vpop.permute.xlu0 %2288
      %2291 = vrot.lane.b32.xlu0 %v2181, 64
      %v2292 = vpop.permute.xlu0 %2291
      %2294 = vrot.lane.b32.xlu0 %v2247, 96
      %v2295 = vpop.permute.xlu0 %2294
      %2297 = vrot.lane.b32.xlu0 %v2230, 32
      %v2298 = vpop.permute.xlu0 %2297
      %2300 = vrot.lane.b32.xlu0 %v2182, 64
      %v2301 = vpop.permute.xlu0 %2300
      %2303 = vrot.lane.b32.xlu0 %v2248, 96
      %v2304 = vpop.permute.xlu0 %2303
      %2306 = vrot.lane.b32.xlu0 %v2239, 32
      %v2307 = vpop.permute.xlu0 %2306
      %2309 = vrot.lane.b32.xlu0 %v2183, 64
      %v2310 = vpop.permute.xlu0 %2309
      %2312 = vrot.lane.b32.xlu0 %v2249, 96
      %v2313 = vpop.permute.xlu0 %2312
      %2315 = vrot.lane.b32.xlu0 %v2246, 32
      %v2316 = vpop.permute.xlu0 %2315
      %2318 = vrot.lane.b32.xlu0 %v2184, 64
      %v2319 = vpop.permute.xlu0 %2318
      %2321 = vrot.lane.b32.xlu0 %v2250, 96
      %v2322 = vpop.permute.xlu0 %2321
      %v2325 = vsel %vm1064, %v2025, %v2253
      %v2327 = vsel %vm1068, %v2325, %v2256
      %v2329 = vsel %vm1071, %v2327, %v2259
      %v2332 = vsel %vm1064, %v2032, %v2262
      %v2334 = vsel %vm1068, %v2332, %v2265
      %v2336 = vsel %vm1071, %v2334, %v2268
      %v2339 = vsel %vm1064, %v2041, %v2271
      %v2341 = vsel %vm1068, %v2339, %v2274
      %v2343 = vsel %vm1071, %v2341, %v2277
      %v2346 = vsel %vm1064, %v2048, %v2280
      %v2348 = vsel %vm1068, %v2346, %v2283
      %v2350 = vsel %vm1071, %v2348, %v2286
      %v2353 = vsel %vm1064, %v2157, %v2289
      %v2355 = vsel %vm1068, %v2353, %v2292
      %v2357 = vsel %vm1071, %v2355, %v2295
      %v2360 = vsel %vm1064, %v2164, %v2298
      %v2362 = vsel %vm1068, %v2360, %v2301
      %v2364 = vsel %vm1071, %v2362, %v2304
      %v2367 = vsel %vm1064, %v2173, %v2307
      %v2369 = vsel %vm1068, %v2367, %v2310
      %v2371 = vsel %vm1071, %v2369, %v2313
      %v2374 = vsel %vm1064, %v2180, %v2316
      %v2376 = vsel %vm1068, %v2374, %v2319
      %v2378 = vsel %vm1071, %v2376, %v2322
      %v2380 = vsel %vm1571, %v683, 0
      %v2382 = vsel %vm1575, %v2329, 0
      %v2384 = vsel %vm1575, %v2336, 0
      %v2386 = vsel %vm1575, %v2343, 0
      %v2388 = vsel %vm1575, %v2350, 0
      %v2390 = vsel %vm1575, %v2357, 0
      %v2392 = vsel %vm1575, %v2364, 0
      %v2394 = vsel %vm1575, %v2371, 0
      %v2396 = vsel %vm1575, %v2378, 0
      %2398 = vmatprep.subr.bf16.mxu0 %v2384
      %2399 = vmatpush1.bf16.msra.mxu0 %v2382
      %2400 = vmatprep.subr.bf16.mxu0 0
      %2401 = vmatpush1.bf16.msra.mxu0 0
      %2402 = vmatprep.subr.bf16.mxu0 0
      %2403 = vmatpush1.bf16.msra.mxu0 0
      %2404 = vmatprep.subr.bf16.mxu0 0
      %2405 = vmatpush1.bf16.msra.mxu0 0
      %2406 = vmatprep.subr.bf16.mxu0 0
      %2407 = vmatpush1.bf16.msra.mxu0 0
      %2408 = vmatprep.subr.bf16.mxu0 0
      %2409 = vmatpush1.bf16.msra.mxu0 0
      %2410 = vmatprep.subr.bf16.mxu0 0
      %2411 = vmatpush1.bf16.msra.mxu0 0
      %2412 = vmatprep.subr.bf16.mxu0 0
      %2413 = vmatpush1.bf16.msra.mxu0 0
      %2414 = vmatprep.subr.bf16.mxu0 0
      %2415 = vmatpush1.bf16.msra.mxu0 0
      %2416 = vmatprep.subr.bf16.mxu0 0
      %2417 = vmatpush1.bf16.msra.mxu0 0
      %2418 = vmatprep.subr.bf16.mxu0 0
      %2419 = vmatpush1.bf16.msra.mxu0 0
      %2420 = vmatprep.subr.bf16.mxu0 0
      %2421 = vmatpush1.bf16.msra.mxu0 0
      %2422 = vmatprep.subr.bf16.mxu0 0
      %2423 = vmatpush1.bf16.msra.mxu0 0
      %2424 = vmatprep.subr.bf16.mxu0 0
      %2425 = vmatpush1.bf16.msra.mxu0 0
      %2426 = vmatprep.subr.bf16.mxu0 0
      %2427 = vmatpush1.bf16.msra.mxu0 0
      %2428 = vmatprep.subr.bf16.mxu0 0
      %2429 = vmatpush1.bf16.msra.mxu0 0
      %2430 = vmatprep.mubr.bf16.mxu0 0
      %2431 = vmatmul.mubr.bf16.gmra.mrb[0].mxu0 %v2380
      %v2432 = vpop.f32.mrb[0].mxu0
      %v2433 = vadd.f32 0.0, %v2432
      %v2434 = vpop.f32.mrb[0].mxu0
      %v2435 = vadd.f32 0.0, %v2434
      %v2436 = vpop.f32.mrb[0].mxu0
      %v2437 = vpop.f32.mrb[0].mxu0
      %2438 = vdwg.mxu0
      %2439 = vmatprep.subr.bf16.mxu0 %v2388
      %2440 = vmatpush1.bf16.msra.mxu0 %v2386
      %2441 = vmatprep.subr.bf16.mxu0 0
      %2442 = vmatpush1.bf16.msra.mxu0 0
      %2443 = vmatprep.subr.bf16.mxu0 0
      %2444 = vmatpush1.bf16.msra.mxu0 0
      %2445 = vmatprep.subr.bf16.mxu0 0
      %2446 = vmatpush1.bf16.msra.mxu0 0
      %2447 = vmatprep.subr.bf16.mxu0 0
      %2448 = vmatpush1.bf16.msra.mxu0 0
      %2449 = vmatprep.subr.bf16.mxu0 0
      %2450 = vmatpush1.bf16.msra.mxu0 0
      %2451 = vmatprep.subr.bf16.mxu0 0
      %2452 = vmatpush1.bf16.msra.mxu0 0
      %2453 = vmatprep.subr.bf16.mxu0 0
      %2454 = vmatpush1.bf16.msra.mxu0 0
      %2455 = vmatprep.subr.bf16.mxu0 0
      %2456 = vmatpush1.bf16.msra.mxu0 0
      %2457 = vmatprep.subr.bf16.mxu0 0
      %2458 = vmatpush1.bf16.msra.mxu0 0
      %2459 = vmatprep.subr.bf16.mxu0 0
      %2460 = vmatpush1.bf16.msra.mxu0 0
      %2461 = vmatprep.subr.bf16.mxu0 0
      %2462 = vmatpush1.bf16.msra.mxu0 0
      %2463 = vmatprep.subr.bf16.mxu0 0
      %2464 = vmatpush1.bf16.msra.mxu0 0
      %2465 = vmatprep.subr.bf16.mxu0 0
      %2466 = vmatpush1.bf16.msra.mxu0 0
      %2467 = vmatprep.subr.bf16.mxu0 0
      %2468 = vmatpush1.bf16.msra.mxu0 0
      %2469 = vmatprep.subr.bf16.mxu0 0
      %2470 = vmatpush1.bf16.msra.mxu0 0
      %2471 = vmatprep.mubr.bf16.mxu0 0
      %2472 = vmatmul.mubr.bf16.gmra.mrb[0].mxu0 %v2380
      %v2473 = vpop.f32.mrb[0].mxu0
      %v2474 = vadd.f32 0.0, %v2473
      %v2475 = vpop.f32.mrb[0].mxu0
      %v2476 = vadd.f32 0.0, %v2475
      %v2477 = vpop.f32.mrb[0].mxu0
      %v2478 = vpop.f32.mrb[0].mxu0
      %2479 = vdwg.mxu0
      %2480 = vmatprep.subr.bf16.mxu0 %v2392
      %2481 = vmatpush1.bf16.msra.mxu0 %v2390
      %2482 = vmatprep.subr.bf16.mxu0 0
      %2483 = vmatpush1.bf16.msra.mxu0 0
      %2484 = vmatprep.subr.bf16.mxu0 0
      %2485 = vmatpush1.bf16.msra.mxu0 0
      %2486 = vmatprep.subr.bf16.mxu0 0
      %2487 = vmatpush1.bf16.msra.mxu0 0
      %2488 = vmatprep.subr.bf16.mxu0 0
      %2489 = vmatpush1.bf16.msra.mxu0 0
      %2490 = vmatprep.subr.bf16.mxu0 0
      %2491 = vmatpush1.bf16.msra.mxu0 0
      %2492 = vmatprep.subr.bf16.mxu0 0
      %2493 = vmatpush1.bf16.msra.mxu0 0
      %2494 = vmatprep.subr.bf16.mxu0 0
      %2495 = vmatpush1.bf16.msra.mxu0 0
      %2496 = vmatprep.subr.bf16.mxu0 0
      %2497 = vmatpush1.bf16.msra.mxu0 0
      %2498 = vmatprep.subr.bf16.mxu0 0
      %2499 = vmatpush1.bf16.msra.mxu0 0
      %2500 = vmatprep.subr.bf16.mxu0 0
      %2501 = vmatpush1.bf16.msra.mxu0 0
      %2502 = vmatprep.subr.bf16.mxu0 0
      %2503 = vmatpush1.bf16.msra.mxu0 0
      %2504 = vmatprep.subr.bf16.mxu0 0
      %2505 = vmatpush1.bf16.msra.mxu0 0
      %2506 = vmatprep.subr.bf16.mxu0 0
      %2507 = vmatpush1.bf16.msra.mxu0 0
      %2508 = vmatprep.subr.bf16.mxu0 0
      %2509 = vmatpush1.bf16.msra.mxu0 0
      %2510 = vmatprep.subr.bf16.mxu0 0
      %2511 = vmatpush1.bf16.msra.mxu0 0
      %2512 = vmatprep.mubr.bf16.mxu0 0
      %2513 = vmatmul.mubr.bf16.gmra.mrb[0].mxu0 %v2380
      %v2514 = vpop.f32.mrb[0].mxu0
      %v2515 = vadd.f32 0.0, %v2514
      %v2516 = vpop.f32.mrb[0].mxu0
      %v2517 = vadd.f32 0.0, %v2516
      %v2518 = vpop.f32.mrb[0].mxu0
      %v2519 = vpop.f32.mrb[0].mxu0
      %2520 = vdwg.mxu0
      %2521 = vmatprep.subr.bf16.mxu0 %v2396
      %2522 = vmatpush1.bf16.msra.mxu0 %v2394
      %2523 = vmatprep.subr.bf16.mxu0 0
      %2524 = vmatpush1.bf16.msra.mxu0 0
      %2525 = vmatprep.subr.bf16.mxu0 0
      %2526 = vmatpush1.bf16.msra.mxu0 0
      %2527 = vmatprep.subr.bf16.mxu0 0
      %2528 = vmatpush1.bf16.msra.mxu0 0
      %2529 = vmatprep.subr.bf16.mxu0 0
      %2530 = vmatpush1.bf16.msra.mxu0 0
      %2531 = vmatprep.subr.bf16.mxu0 0
      %2532 = vmatpush1.bf16.msra.mxu0 0
      %2533 = vmatprep.subr.bf16.mxu0 0
      %2534 = vmatpush1.bf16.msra.mxu0 0
      %2535 = vmatprep.subr.bf16.mxu0 0
      %2536 = vmatpush1.bf16.msra.mxu0 0
      %2537 = vmatprep.subr.bf16.mxu0 0
      %2538 = vmatpush1.bf16.msra.mxu0 0
      %2539 = vmatprep.subr.bf16.mxu0 0
      %2540 = vmatpush1.bf16.msra.mxu0 0
      %2541 = vmatprep.subr.bf16.mxu0 0
      %2542 = vmatpush1.bf16.msra.mxu0 0
      %2543 = vmatprep.subr.bf16.mxu0 0
      %2544 = vmatpush1.bf16.msra.mxu0 0
      %2545 = vmatprep.subr.bf16.mxu0 0
      %2546 = vmatpush1.bf16.msra.mxu0 0
      %2547 = vmatprep.subr.bf16.mxu0 0
      %2548 = vmatpush1.bf16.msra.mxu0 0
      %2549 = vmatprep.subr.bf16.mxu0 0
      %2550 = vmatpush1.bf16.msra.mxu0 0
      %2551 = vmatprep.subr.bf16.mxu0 0
      %2552 = vmatpush1.bf16.msra.mxu0 0
      %2553 = vmatprep.mubr.bf16.mxu0 0
      %2554 = vmatmul.mubr.bf16.gmra.mrb[0].mxu0 %v2380
      %v2555 = vpop.f32.mrb[0].mxu0
      %v2556 = vadd.f32 0.0, %v2555
      %v2557 = vpop.f32.mrb[0].mxu0
      %v2558 = vadd.f32 0.0, %v2557
      %v2559 = vpop.f32.mrb[0].mxu0
      %v2560 = vpop.f32.mrb[0].mxu0
      %2561 = vdwg.mxu0
      %v2562 = vadd.f32 %v1810, %v2433
      %v2563 = vadd.f32 %v1812, %v2435
      %v2564 = vadd.f32 %v1851, %v2474
      %v2565 = vadd.f32 %v1853, %v2476
      %v2566 = vadd.f32 %v1892, %v2515
      %v2567 = vadd.f32 %v1894, %v2517
      %v2568 = vadd.f32 %v1933, %v2556
      %v2569 = vadd.f32 %v1935, %v2558
      %vm2570 = vsmask.f32 7424
      %v2572 = vshll.u32 %v669, 16
      %v2574 = vrot.slane %v2572, 1
      %v2575 = vor.u32 %v694, %v2574
      %v2576 = vshll.u32 %v670, 16
      %v2578 = vrot.slane %v2576, 1
      %v2579 = vsel %vm2570, %v2575, %v2578
      %v2581 = vor.u32 %v716, %v2578
      %v2583 = vshll.u32 %v671, 16
      %v2585 = vrot.slane %v2583, 1
      %v2586 = vsel %vm2570, %v2581, %v2585
      %v2588 = vshll.u32 %v672, 16
      %v2590 = vrot.slane %v2588, 1
      %v2591 = vor.u32 %v695, %v2590
      %v2592 = vshll.u32 %v673, 16
      %v2594 = vrot.slane %v2592, 1
      %v2595 = vsel %vm2570, %v2591, %v2594
      %v2597 = vor.u32 %v717, %v2594
      %v2599 = vshll.u32 %v674, 16
      %v2601 = vrot.slane %v2599, 1
      %v2602 = vsel %vm2570, %v2597, %v2601
      %v2604 = vshll.u32 %v675, 16
      %v2606 = vrot.slane %v2604, 1
      %v2607 = vor.u32 %v702, %v2606
      %v2608 = vshll.u32 %v676, 16
      %v2610 = vrot.slane %v2608, 1
      %v2611 = vsel %vm2570, %v2607, %v2610
      %v2613 = vor.u32 %v724, %v2610
      %v2615 = vshll.u32 %v677, 16
      %v2617 = vrot.slane %v2615, 1
      %v2618 = vsel %vm2570, %v2613, %v2617
      %v2620 = vshll.u32 %v678, 16
      %v2622 = vrot.slane %v2620, 1
      %v2623 = vor.u32 %v703, %v2622
      %v2624 = vshll.u32 %v679, 16
      %v2626 = vrot.slane %v2624, 1
      %v2627 = vsel %vm2570, %v2623, %v2626
      %v2629 = vor.u32 %v725, %v2626
      %v2631 = vshll.u32 %v680, 16
      %v2633 = vrot.slane %v2631, 1
      %v2634 = vsel %vm2570, %v2629, %v2633
      %v2637 = vpack.i.b16 %v2595, %v2579
      %v2639 = vshrl.u32 %v2579, 16
      %v2640 = vshrl.u32 %v2595, 16
      %v2641 = vpack.i.b16 %v2640, %v2639
      %v2645 = vpack.i.b16 %v2627, %v2611
      %v2647 = vshrl.u32 %v2611, 16
      %v2648 = vshrl.u32 %v2627, 16
      %v2649 = vpack.i.b16 %v2648, %v2647
      %v2653 = vpack.i.b16 %v2602, %v2586
      %v2655 = vshrl.u32 %v2586, 16
      %v2656 = vshrl.u32 %v2602, 16
      %v2657 = vpack.i.b16 %v2656, %v2655
      %v2661 = vpack.i.b16 %v2634, %v2618
      %v2663 = vshrl.u32 %v2618, 16
      %v2664 = vshrl.u32 %v2634, 16
      %v2665 = vpack.i.b16 %v2664, %v2663
      %v2667 = vcombine.high %v2637, %v707
      %v2669 = vunpack.c.l.s4 1983009808
      %v2670 = vunpack.c.0.s8 %v2669
      %v2671 = vlaneseq
      %v2672 = vshrl.u32 %v2671, 7
      %v2673 = vsub.s32 %v2670, %v2672
      %v2674 = vrot.slane %v2637, %v2673
      %v2676 = vunpack.c.l.s4 1983009808
      %v2677 = vunpack.c.0.s8 %v2676
      %v2678 = vlaneseq
      %v2679 = vshrl.u32 %v2678, 7
      %v2680 = vsub.s32 %v2677, %v2679
      %v2681 = vrot.slane %v2667, %v2680
      %v2682 = vcombine.high %v2645, %v707
      %v2684 = vunpack.c.l.s4 1983009808
      %v2685 = vunpack.c.0.s8 %v2684
      %v2686 = vlaneseq
      %v2687 = vshrl.u32 %v2686, 7
      %v2688 = vsub.s32 %v2685, %v2687
      %v2689 = vrot.slane %v2645, %v2688
      %v2691 = vunpack.c.l.s4 1983009808
      %v2692 = vunpack.c.0.s8 %v2691
      %v2693 = vlaneseq
      %v2694 = vshrl.u32 %v2693, 7
      %v2695 = vsub.s32 %v2692, %v2694
      %v2696 = vrot.slane %v2682, %v2695
      %v2697 = vcombine.low %v2674, %v2689
      %v2698 = vcombine.high %v2674, %v2689
      %v2700 = vunpack.c.l.s4 1934713408
      %v2701 = vunpack.c.0.s8 %v2700
      %v2702 = vlaneseq
      %v2703 = vshrl.u32 %v2702, 7
      %v2704 = vsub.s32 %v2701, %v2703
      %v2705 = vrot.slane %v2697, %v2704
      %v2707 = vunpack.c.l.s4 1934713408
      %v2708 = vunpack.c.0.s8 %v2707
      %v2709 = vlaneseq
      %v2710 = vshrl.u32 %v2709, 7
      %v2711 = vsub.s32 %v2708, %v2710
      %v2712 = vrot.slane %v2698, %v2711
      %v2713 = vcombine.low %v2681, %v2696
      %v2714 = vcombine.high %v2681, %v2696
      %v2716 = vunpack.c.l.s4 1934713408
      %v2717 = vunpack.c.0.s8 %v2716
      %v2718 = vlaneseq
      %v2719 = vshrl.u32 %v2718, 7
      %v2720 = vsub.s32 %v2717, %v2719
      %v2721 = vrot.slane %v2713, %v2720
      %v2723 = vunpack.c.l.s4 1934713408
      %v2724 = vunpack.c.0.s8 %v2723
      %v2725 = vlaneseq
      %v2726 = vshrl.u32 %v2725, 7
      %v2727 = vsub.s32 %v2724, %v2726
      %v2728 = vrot.slane %v2714, %v2727
      %v2729 = vcombine.high %v2705, 0
      %v2730 = vcombine.high %v2712, 0
      %v2731 = vcombine.high %v2721, 0
      %v2732 = vcombine.high %v2728, 0
      %v2733 = vcombine.high %v2641, %v710
      %v2735 = vunpack.c.l.s4 1983009808
      %v2736 = vunpack.c.0.s8 %v2735
      %v2737 = vlaneseq
      %v2738 = vshrl.u32 %v2737, 7
      %v2739 = vsub.s32 %v2736, %v2738
      %v2740 = vrot.slane %v2641, %v2739
      %v2742 = vunpack.c.l.s4 1983009808
      %v2743 = vunpack.c.0.s8 %v2742
      %v2744 = vlaneseq
      %v2745 = vshrl.u32 %v2744, 7
      %v2746 = vsub.s32 %v2743, %v2745
      %v2747 = vrot.slane %v2733, %v2746
      %v2748 = vcombine.high %v2649, %v710
      %v2750 = vunpack.c.l.s4 1983009808
      %v2751 = vunpack.c.0.s8 %v2750
      %v2752 = vlaneseq
      %v2753 = vshrl.u32 %v2752, 7
      %v2754 = vsub.s32 %v2751, %v2753
      %v2755 = vrot.slane %v2649, %v2754
      %v2757 = vunpack.c.l.s4 1983009808
      %v2758 = vunpack.c.0.s8 %v2757
      %v2759 = vlaneseq
      %v2760 = vshrl.u32 %v2759, 7
      %v2761 = vsub.s32 %v2758, %v2760
      %v2762 = vrot.slane %v2748, %v2761
      %v2763 = vcombine.low %v2740, %v2755
      %v2764 = vcombine.high %v2740, %v2755
      %v2766 = vunpack.c.l.s4 1934713408
      %v2767 = vunpack.c.0.s8 %v2766
      %v2768 = vlaneseq
      %v2769 = vshrl.u32 %v2768, 7
      %v2770 = vsub.s32 %v2767, %v2769
      %v2771 = vrot.slane %v2763, %v2770
      %v2773 = vunpack.c.l.s4 1934713408
      %v2774 = vunpack.c.0.s8 %v2773
      %v2775 = vlaneseq
      %v2776 = vshrl.u32 %v2775, 7
      %v2777 = vsub.s32 %v2774, %v2776
      %v2778 = vrot.slane %v2764, %v2777
      %v2779 = vcombine.low %v2747, %v2762
      %v2780 = vcombine.high %v2747, %v2762
      %v2782 = vunpack.c.l.s4 1934713408
      %v2783 = vunpack.c.0.s8 %v2782
      %v2784 = vlaneseq
      %v2785 = vshrl.u32 %v2784, 7
      %v2786 = vsub.s32 %v2783, %v2785
      %v2787 = vrot.slane %v2779, %v2786
      %v2789 = vunpack.c.l.s4 1934713408
      %v2790 = vunpack.c.0.s8 %v2789
      %v2791 = vlaneseq
      %v2792 = vshrl.u32 %v2791, 7
      %v2793 = vsub.s32 %v2790, %v2792
      %v2794 = vrot.slane %v2780, %v2793
      %v2795 = vcombine.high %v2771, 0
      %v2796 = vcombine.high %v2778, 0
      %v2797 = vcombine.high %v2787, 0
      %v2798 = vcombine.high %v2794, 0
      %v2799 = vcombine.high %v2653, %v707
      %v2801 = vunpack.c.l.s4 1983009808
      %v2802 = vunpack.c.0.s8 %v2801
      %v2803 = vlaneseq
      %v2804 = vshrl.u32 %v2803, 7
      %v2805 = vsub.s32 %v2802, %v2804
      %v2806 = vrot.slane %v2653, %v2805
      %v2808 = vunpack.c.l.s4 1983009808
      %v2809 = vunpack.c.0.s8 %v2808
      %v2810 = vlaneseq
      %v2811 = vshrl.u32 %v2810, 7
      %v2812 = vsub.s32 %v2809, %v2811
      %v2813 = vrot.slane %v2799, %v2812
      %v2814 = vcombine.high %v2661, %v707
      %v2816 = vunpack.c.l.s4 1983009808
      %v2817 = vunpack.c.0.s8 %v2816
      %v2818 = vlaneseq
      %v2819 = vshrl.u32 %v2818, 7
      %v2820 = vsub.s32 %v2817, %v2819
      %v2821 = vrot.slane %v2661, %v2820
      %v2823 = vunpack.c.l.s4 1983009808
      %v2824 = vunpack.c.0.s8 %v2823
      %v2825 = vlaneseq
      %v2826 = vshrl.u32 %v2825, 7
      %v2827 = vsub.s32 %v2824, %v2826
      %v2828 = vrot.slane %v2814, %v2827
      %v2829 = vcombine.low %v2806, %v2821
      %v2830 = vcombine.high %v2806, %v2821
      %v2832 = vunpack.c.l.s4 1934713408
      %v2833 = vunpack.c.0.s8 %v2832
      %v2834 = vlaneseq
      %v2835 = vshrl.u32 %v2834, 7
      %v2836 = vsub.s32 %v2833, %v2835
      %v2837 = vrot.slane %v2829, %v2836
      %v2839 = vunpack.c.l.s4 1934713408
      %v2840 = vunpack.c.0.s8 %v2839
      %v2841 = vlaneseq
      %v2842 = vshrl.u32 %v2841, 7
      %v2843 = vsub.s32 %v2840, %v2842
      %v2844 = vrot.slane %v2830, %v2843
      %v2845 = vcombine.low %v2813, %v2828
      %v2846 = vcombine.high %v2813, %v2828
      %v2848 = vunpack.c.l.s4 1934713408
      %v2849 = vunpack.c.0.s8 %v2848
      %v2850 = vlaneseq
      %v2851 = vshrl.u32 %v2850, 7
      %v2852 = vsub.s32 %v2849, %v2851
      %v2853 = vrot.slane %v2845, %v2852
      %v2855 = vunpack.c.l.s4 1934713408
      %v2856 = vunpack.c.0.s8 %v2855
      %v2857 = vlaneseq
      %v2858 = vshrl.u32 %v2857, 7
      %v2859 = vsub.s32 %v2856, %v2858
      %v2860 = vrot.slane %v2846, %v2859
      %v2861 = vcombine.high %v2837, 0
      %v2862 = vcombine.high %v2844, 0
      %v2863 = vcombine.high %v2853, 0
      %v2864 = vcombine.high %v2860, 0
      %v2865 = vcombine.high %v2657, %v710
      %v2867 = vunpack.c.l.s4 1983009808
      %v2868 = vunpack.c.0.s8 %v2867
      %v2869 = vlaneseq
      %v2870 = vshrl.u32 %v2869, 7
      %v2871 = vsub.s32 %v2868, %v2870
      %v2872 = vrot.slane %v2657, %v2871
      %v2874 = vunpack.c.l.s4 1983009808
      %v2875 = vunpack.c.0.s8 %v2874
      %v2876 = vlaneseq
      %v2877 = vshrl.u32 %v2876, 7
      %v2878 = vsub.s32 %v2875, %v2877
      %v2879 = vrot.slane %v2865, %v2878
      %v2880 = vcombine.high %v2665, %v710
      %v2882 = vunpack.c.l.s4 1983009808
      %v2883 = vunpack.c.0.s8 %v2882
      %v2884 = vlaneseq
      %v2885 = vshrl.u32 %v2884, 7
      %v2886 = vsub.s32 %v2883, %v2885
      %v2887 = vrot.slane %v2665, %v2886
      %v2889 = vunpack.c.l.s4 1983009808
      %v2890 = vunpack.c.0.s8 %v2889
      %v2891 = vlaneseq
      %v2892 = vshrl.u32 %v2891, 7
      %v2893 = vsub.s32 %v2890, %v2892
      %v2894 = vrot.slane %v2880, %v2893
      %v2895 = vcombine.low %v2872, %v2887
      %v2896 = vcombine.high %v2872, %v2887
      %v2898 = vunpack.c.l.s4 1934713408
      %v2899 = vunpack.c.0.s8 %v2898
      %v2900 = vlaneseq
      %v2901 = vshrl.u32 %v2900, 7
      %v2902 = vsub.s32 %v2899, %v2901
      %v2903 = vrot.slane %v2895, %v2902
      %v2905 = vunpack.c.l.s4 1934713408
      %v2906 = vunpack.c.0.s8 %v2905
      %v2907 = vlaneseq
      %v2908 = vshrl.u32 %v2907, 7
      %v2909 = vsub.s32 %v2906, %v2908
      %v2910 = vrot.slane %v2896, %v2909
      %v2911 = vcombine.low %v2879, %v2894
      %v2912 = vcombine.high %v2879, %v2894
      %v2914 = vunpack.c.l.s4 1934713408
      %v2915 = vunpack.c.0.s8 %v2914
      %v2916 = vlaneseq
      %v2917 = vshrl.u32 %v2916, 7
      %v2918 = vsub.s32 %v2915, %v2917
      %v2919 = vrot.slane %v2911, %v2918
      %v2921 = vunpack.c.l.s4 1934713408
      %v2922 = vunpack.c.0.s8 %v2921
      %v2923 = vlaneseq
      %v2924 = vshrl.u32 %v2923, 7
      %v2925 = vsub.s32 %v2922, %v2924
      %v2926 = vrot.slane %v2912, %v2925
      %v2927 = vcombine.high %v2903, 0
      %v2928 = vcombine.high %v2910, 0
      %v2929 = vcombine.high %v2919, 0
      %v2930 = vcombine.high %v2926, 0
      %2932 = vrot.lane.b32.xlu0 %v2771, 32
      %v2933 = vpop.permute.xlu0 %2932
      %2935 = vrot.lane.b32.xlu0 %v2729, 64
      %v2936 = vpop.permute.xlu0 %2935
      %2938 = vrot.lane.b32.xlu0 %v2795, 96
      %v2939 = vpop.permute.xlu0 %2938
      %2941 = vrot.lane.b32.xlu0 %v2778, 32
      %v2942 = vpop.permute.xlu0 %2941
      %2944 = vrot.lane.b32.xlu0 %v2730, 64
      %v2945 = vpop.permute.xlu0 %2944
      %2947 = vrot.lane.b32.xlu0 %v2796, 96
      %v2948 = vpop.permute.xlu0 %2947
      %2950 = vrot.lane.b32.xlu0 %v2787, 32
      %v2951 = vpop.permute.xlu0 %2950
      %2953 = vrot.lane.b32.xlu0 %v2731, 64
      %v2954 = vpop.permute.xlu0 %2953
      %2956 = vrot.lane.b32.xlu0 %v2797, 96
      %v2957 = vpop.permute.xlu0 %2956
      %2959 = vrot.lane.b32.xlu0 %v2794, 32
      %v2960 = vpop.permute.xlu0 %2959
      %2962 = vrot.lane.b32.xlu0 %v2732, 64
      %v2963 = vpop.permute.xlu0 %2962
      %2965 = vrot.lane.b32.xlu0 %v2798, 96
      %v2966 = vpop.permute.xlu0 %2965
      %2968 = vrot.lane.b32.xlu0 %v2903, 32
      %v2969 = vpop.permute.xlu0 %2968
      %2971 = vrot.lane.b32.xlu0 %v2861, 64
      %v2972 = vpop.permute.xlu0 %2971
      %2974 = vrot.lane.b32.xlu0 %v2927, 96
      %v2975 = vpop.permute.xlu0 %2974
      %2977 = vrot.lane.b32.xlu0 %v2910, 32
      %v2978 = vpop.permute.xlu0 %2977
      %2980 = vrot.lane.b32.xlu0 %v2862, 64
      %v2981 = vpop.permute.xlu0 %2980
      %2983 = vrot.lane.b32.xlu0 %v2928, 96
      %v2984 = vpop.permute.xlu0 %2983
      %2986 = vrot.lane.b32.xlu0 %v2919, 32
      %v2987 = vpop.permute.xlu0 %2986
      %2989 = vrot.lane.b32.xlu0 %v2863, 64
      %v2990 = vpop.permute.xlu0 %2989
      %2992 = vrot.lane.b32.xlu0 %v2929, 96
      %v2993 = vpop.permute.xlu0 %2992
      %2995 = vrot.lane.b32.xlu0 %v2926, 32
      %v2996 = vpop.permute.xlu0 %2995
      %2998 = vrot.lane.b32.xlu0 %v2864, 64
      %v2999 = vpop.permute.xlu0 %2998
      %3001 = vrot.lane.b32.xlu0 %v2930, 96
      %v3002 = vpop.permute.xlu0 %3001
      %v3005 = vsel %vm1064, %v2705, %v2933
      %v3007 = vsel %vm1068, %v3005, %v2936
      %v3009 = vsel %vm1071, %v3007, %v2939
      %v3012 = vsel %vm1064, %v2712, %v2942
      %v3014 = vsel %vm1068, %v3012, %v2945
      %v3016 = vsel %vm1071, %v3014, %v2948
      %v3019 = vsel %vm1064, %v2721, %v2951
      %v3021 = vsel %vm1068, %v3019, %v2954
      %v3023 = vsel %vm1071, %v3021, %v2957
      %v3026 = vsel %vm1064, %v2728, %v2960
      %v3028 = vsel %vm1068, %v3026, %v2963
      %v3030 = vsel %vm1071, %v3028, %v2966
      %v3033 = vsel %vm1064, %v2837, %v2969
      %v3035 = vsel %vm1068, %v3033, %v2972
      %v3037 = vsel %vm1071, %v3035, %v2975
      %v3040 = vsel %vm1064, %v2844, %v2978
      %v3042 = vsel %vm1068, %v3040, %v2981
      %v3044 = vsel %vm1071, %v3042, %v2984
      %v3047 = vsel %vm1064, %v2853, %v2987
      %v3049 = vsel %vm1068, %v3047, %v2990
      %v3051 = vsel %vm1071, %v3049, %v2993
      %v3054 = vsel %vm1064, %v2860, %v2996
      %v3056 = vsel %vm1068, %v3054, %v2999
      %v3058 = vsel %vm1071, %v3056, %v3002
      %v3060 = vsel %vm1571, %v684, 0
      %v3062 = vsel %vm1575, %v3009, 0
      %v3064 = vsel %vm1575, %v3016, 0
      %v3066 = vsel %vm1575, %v3023, 0
      %v3068 = vsel %vm1575, %v3030, 0
      %v3070 = vsel %vm1575, %v3037, 0
      %v3072 = vsel %vm1575, %v3044, 0
      %v3074 = vsel %vm1575, %v3051, 0
      %v3076 = vsel %vm1575, %v3058, 0
      %3078 = vmatprep.subr.bf16.mxu0 %v3064
      %3079 = vmatpush1.bf16.msra.mxu0 %v3062
      %3080 = vmatprep.subr.bf16.mxu0 0
      %3081 = vmatpush1.bf16.msra.mxu0 0
      %3082 = vmatprep.subr.bf16.mxu0 0
      %3083 = vmatpush1.bf16.msra.mxu0 0
      %3084 = vmatprep.subr.bf16.mxu0 0
      %3085 = vmatpush1.bf16.msra.mxu0 0
      %3086 = vmatprep.subr.bf16.mxu0 0
      %3087 = vmatpush1.bf16.msra.mxu0 0
      %3088 = vmatprep.subr.bf16.mxu0 0
      %3089 = vmatpush1.bf16.msra.mxu0 0
      %3090 = vmatprep.subr.bf16.mxu0 0
      %3091 = vmatpush1.bf16.msra.mxu0 0
      %3092 = vmatprep.subr.bf16.mxu0 0
      %3093 = vmatpush1.bf16.msra.mxu0 0
      %3094 = vmatprep.subr.bf16.mxu0 0
      %3095 = vmatpush1.bf16.msra.mxu0 0
      %3096 = vmatprep.subr.bf16.mxu0 0
      %3097 = vmatpush1.bf16.msra.mxu0 0
      %3098 = vmatprep.subr.bf16.mxu0 0
      %3099 = vmatpush1.bf16.msra.mxu0 0
      %3100 = vmatprep.subr.bf16.mxu0 0
      %3101 = vmatpush1.bf16.msra.mxu0 0
      %3102 = vmatprep.subr.bf16.mxu0 0
      %3103 = vmatpush1.bf16.msra.mxu0 0
      %3104 = vmatprep.subr.bf16.mxu0 0
      %3105 = vmatpush1.bf16.msra.mxu0 0
      %3106 = vmatprep.subr.bf16.mxu0 0
      %3107 = vmatpush1.bf16.msra.mxu0 0
      %3108 = vmatprep.subr.bf16.mxu0 0
      %3109 = vmatpush1.bf16.msra.mxu0 0
      %3110 = vmatprep.mubr.bf16.mxu0 0
      %3111 = vmatmul.mubr.bf16.gmra.mrb[0].mxu0 %v3060
      %v3112 = vpop.f32.mrb[0].mxu0
      %v3113 = vadd.f32 0.0, %v3112
      %v3114 = vpop.f32.mrb[0].mxu0
      %v3115 = vadd.f32 0.0, %v3114
      %v3116 = vpop.f32.mrb[0].mxu0
      %v3117 = vpop.f32.mrb[0].mxu0
      %3118 = vdwg.mxu0
      %3119 = vmatprep.subr.bf16.mxu0 %v3068
      %3120 = vmatpush1.bf16.msra.mxu0 %v3066
      %3121 = vmatprep.subr.bf16.mxu0 0
      %3122 = vmatpush1.bf16.msra.mxu0 0
      %3123 = vmatprep.subr.bf16.mxu0 0
      %3124 = vmatpush1.bf16.msra.mxu0 0
      %3125 = vmatprep.subr.bf16.mxu0 0
      %3126 = vmatpush1.bf16.msra.mxu0 0
      %3127 = vmatprep.subr.bf16.mxu0 0
      %3128 = vmatpush1.bf16.msra.mxu0 0
      %3129 = vmatprep.subr.bf16.mxu0 0
      %3130 = vmatpush1.bf16.msra.mxu0 0
      %3131 = vmatprep.subr.bf16.mxu0 0
      %3132 = vmatpush1.bf16.msra.mxu0 0
      %3133 = vmatprep.subr.bf16.mxu0 0
      %3134 = vmatpush1.bf16.msra.mxu0 0
      %3135 = vmatprep.subr.bf16.mxu0 0
      %3136 = vmatpush1.bf16.msra.mxu0 0
      %3137 = vmatprep.subr.bf16.mxu0 0
      %3138 = vmatpush1.bf16.msra.mxu0 0
      %3139 = vmatprep.subr.bf16.mxu0 0
      %3140 = vmatpush1.bf16.msra.mxu0 0
      %3141 = vmatprep.subr.bf16.mxu0 0
      %3142 = vmatpush1.bf16.msra.mxu0 0
      %3143 = vmatprep.subr.bf16.mxu0 0
      %3144 = vmatpush1.bf16.msra.mxu0 0
      %3145 = vmatprep.subr.bf16.mxu0 0
      %3146 = vmatpush1.bf16.msra.mxu0 0
      %3147 = vmatprep.subr.bf16.mxu0 0
      %3148 = vmatpush1.bf16.msra.mxu0 0
      %3149 = vmatprep.subr.bf16.mxu0 0
      %3150 = vmatpush1.bf16.msra.mxu0 0
      %3151 = vmatprep.mubr.bf16.mxu0 0
      %3152 = vmatmul.mubr.bf16.gmra.mrb[0].mxu0 %v3060
      %v3153 = vpop.f32.mrb[0].mxu0
      %v3154 = vadd.f32 0.0, %v3153
      %v3155 = vpop.f32.mrb[0].mxu0
      %v3156 = vadd.f32 0.0, %v3155
      %v3157 = vpop.f32.mrb[0].mxu0
      %v3158 = vpop.f32.mrb[0].mxu0
      %3159 = vdwg.mxu0
      %3160 = vmatprep.subr.bf16.mxu0 %v3072
      %3161 = vmatpush1.bf16.msra.mxu0 %v3070
      %3162 = vmatprep.subr.bf16.mxu0 0
      %3163 = vmatpush1.bf16.msra.mxu0 0
      %3164 = vmatprep.subr.bf16.mxu0 0
      %3165 = vmatpush1.bf16.msra.mxu0 0
      %3166 = vmatprep.subr.bf16.mxu0 0
      %3167 = vmatpush1.bf16.msra.mxu0 0
      %3168 = vmatprep.subr.bf16.mxu0 0
      %3169 = vmatpush1.bf16.msra.mxu0 0
      %3170 = vmatprep.subr.bf16.mxu0 0
      %3171 = vmatpush1.bf16.msra.mxu0 0
      %3172 = vmatprep.subr.bf16.mxu0 0
      %3173 = vmatpush1.bf16.msra.mxu0 0
      %3174 = vmatprep.subr.bf16.mxu0 0
      %3175 = vmatpush1.bf16.msra.mxu0 0
      %3176 = vmatprep.subr.bf16.mxu0 0
      %3177 = vmatpush1.bf16.msra.mxu0 0
      %3178 = vmatprep.subr.bf16.mxu0 0
      %3179 = vmatpush1.bf16.msra.mxu0 0
      %3180 = vmatprep.subr.bf16.mxu0 0
      %3181 = vmatpush1.bf16.msra.mxu0 0
      %3182 = vmatprep.subr.bf16.mxu0 0
      %3183 = vmatpush1.bf16.msra.mxu0 0
      %3184 = vmatprep.subr.bf16.mxu0 0
      %3185 = vmatpush1.bf16.msra.mxu0 0
      %3186 = vmatprep.subr.bf16.mxu0 0
      %3187 = vmatpush1.bf16.msra.mxu0 0
      %3188 = vmatprep.subr.bf16.mxu0 0
      %3189 = vmatpush1.bf16.msra.mxu0 0
      %3190 = vmatprep.subr.bf16.mxu0 0
      %3191 = vmatpush1.bf16.msra.mxu0 0
      %3192 = vmatprep.mubr.bf16.mxu0 0
      %3193 = vmatmul.mubr.bf16.gmra.mrb[0].mxu0 %v3060
      %v3194 = vpop.f32.mrb[0].mxu0
      %v3195 = vadd.f32 0.0, %v3194
      %v3196 = vpop.f32.mrb[0].mxu0
      %v3197 = vadd.f32 0.0, %v3196
      %v3198 = vpop.f32.mrb[0].mxu0
      %v3199 = vpop.f32.mrb[0].mxu0
      %3200 = vdwg.mxu0
      %3201 = vmatprep.subr.bf16.mxu0 %v3076
      %3202 = vmatpush1.bf16.msra.mxu0 %v3074
      %3203 = vmatprep.subr.bf16.mxu0 0
      %3204 = vmatpush1.bf16.msra.mxu0 0
      %3205 = vmatprep.subr.bf16.mxu0 0
      %3206 = vmatpush1.bf16.msra.mxu0 0
      %3207 = vmatprep.subr.bf16.mxu0 0
      %3208 = vmatpush1.bf16.msra.mxu0 0
      %3209 = vmatprep.subr.bf16.mxu0 0
      %3210 = vmatpush1.bf16.msra.mxu0 0
      %3211 = vmatprep.subr.bf16.mxu0 0
      %3212 = vmatpush1.bf16.msra.mxu0 0
      %3213 = vmatprep.subr.bf16.mxu0 0
      %3214 = vmatpush1.bf16.msra.mxu0 0
      %3215 = vmatprep.subr.bf16.mxu0 0
      %3216 = vmatpush1.bf16.msra.mxu0 0
      %3217 = vmatprep.subr.bf16.mxu0 0
      %3218 = vmatpush1.bf16.msra.mxu0 0
      %3219 = vmatprep.subr.bf16.mxu0 0
      %3220 = vmatpush1.bf16.msra.mxu0 0
      %3221 = vmatprep.subr.bf16.mxu0 0
      %3222 = vmatpush1.bf16.msra.mxu0 0
      %3223 = vmatprep.subr.bf16.mxu0 0
      %3224 = vmatpush1.bf16.msra.mxu0 0
      %3225 = vmatprep.subr.bf16.mxu0 0
      %3226 = vmatpush1.bf16.msra.mxu0 0
      %3227 = vmatprep.subr.bf16.mxu0 0
      %3228 = vmatpush1.bf16.msra.mxu0 0
      %3229 = vmatprep.subr.bf16.mxu0 0
      %3230 = vmatpush1.bf16.msra.mxu0 0
      %3231 = vmatprep.subr.bf16.mxu0 0
      %3232 = vmatpush1.bf16.msra.mxu0 0
      %3233 = vmatprep.mubr.bf16.mxu0 0
      %3234 = vmatmul.mubr.bf16.gmra.mrb[0].mxu0 %v3060
      %v3235 = vpop.f32.mrb[0].mxu0
      %v3236 = vadd.f32 0.0, %v3235
      %v3237 = vpop.f32.mrb[0].mxu0
      %v3238 = vadd.f32 0.0, %v3237
      %v3239 = vpop.f32.mrb[0].mxu0
      %v3240 = vpop.f32.mrb[0].mxu0
      %3241 = vdwg.mxu0
      %v3242 = vadd.f32 %v2562, %v3113
      %v3243 = vadd.f32 %v2563, %v3115
      %v3244 = vadd.f32 %v2564, %v3154
      %v3245 = vadd.f32 %v2565, %v3156
      %v3246 = vadd.f32 %v2566, %v3195
      %v3247 = vadd.f32 %v2567, %v3197
      %v3248 = vadd.f32 %v2568, %v3236
      %v3249 = vadd.f32 %v2569, %v3238
      %3250 = vrot.lane.b32.xlu0 %v2579, 127
      %v3251 = vpop.permute.xlu0 %3250
      %3252 = vrot.lane.b32.xlu0 %v2586, 127
      %v3253 = vpop.permute.xlu0 %3252
      %3254 = vrot.lane.b32.xlu0 %v2595, 127
      %v3255 = vpop.permute.xlu0 %3254
      %3256 = vrot.lane.b32.xlu0 %v2602, 127
      %v3257 = vpop.permute.xlu0 %3256
      %3258 = vrot.lane.b32.xlu0 %v2611, 127
      %v3259 = vpop.permute.xlu0 %3258
      %3260 = vrot.lane.b32.xlu0 %v2618, 127
      %v3261 = vpop.permute.xlu0 %3260
      %3262 = vrot.lane.b32.xlu0 %v2627, 127
      %v3263 = vpop.permute.xlu0 %3262
      %3264 = vrot.lane.b32.xlu0 %v2634, 127
      %v3265 = vpop.permute.xlu0 %3264
      %v3268 = vpack.i.b16 %v3255, %v3251
      %v3270 = vshrl.u32 %v3251, 16
      %v3271 = vshrl.u32 %v3255, 16
      %v3272 = vpack.i.b16 %v3271, %v3270
      %v3276 = vpack.i.b16 %v3263, %v3259
      %v3278 = vshrl.u32 %v3259, 16
      %v3279 = vshrl.u32 %v3263, 16
      %v3280 = vpack.i.b16 %v3279, %v3278
      %v3284 = vpack.i.b16 %v3257, %v3253
      %v3286 = vshrl.u32 %v3253, 16
      %v3287 = vshrl.u32 %v3257, 16
      %v3288 = vpack.i.b16 %v3287, %v3286
      %v3292 = vpack.i.b16 %v3265, %v3261
      %v3294 = vshrl.u32 %v3261, 16
      %v3295 = vshrl.u32 %v3265, 16
      %v3296 = vpack.i.b16 %v3295, %v3294
      %v3298 = vcombine.high %v3268, %v707
      %v3300 = vunpack.c.l.s4 1983009808
      %v3301 = vunpack.c.0.s8 %v3300
      %v3302 = vlaneseq
      %v3303 = vshrl.u32 %v3302, 7
      %v3304 = vsub.s32 %v3301, %v3303
      %v3305 = vrot.slane %v3268, %v3304
      %v3307 = vunpack.c.l.s4 1983009808
      %v3308 = vunpack.c.0.s8 %v3307
      %v3309 = vlaneseq
      %v3310 = vshrl.u32 %v3309, 7
      %v3311 = vsub.s32 %v3308, %v3310
      %v3312 = vrot.slane %v3298, %v3311
      %v3313 = vcombine.high %v3276, %v707
      %v3315 = vunpack.c.l.s4 1983009808
      %v3316 = vunpack.c.0.s8 %v3315
      %v3317 = vlaneseq
      %v3318 = vshrl.u32 %v3317, 7
      %v3319 = vsub.s32 %v3316, %v3318
      %v3320 = vrot.slane %v3276, %v3319
      %v3322 = vunpack.c.l.s4 1983009808
      %v3323 = vunpack.c.0.s8 %v3322
      %v3324 = vlaneseq
      %v3325 = vshrl.u32 %v3324, 7
      %v3326 = vsub.s32 %v3323, %v3325
      %v3327 = vrot.slane %v3313, %v3326
      %v3328 = vcombine.low %v3305, %v3320
      %v3329 = vcombine.high %v3305, %v3320
      %v3331 = vunpack.c.l.s4 1934713408
      %v3332 = vunpack.c.0.s8 %v3331
      %v3333 = vlaneseq
      %v3334 = vshrl.u32 %v3333, 7
      %v3335 = vsub.s32 %v3332, %v3334
      %v3336 = vrot.slane %v3328, %v3335
      %v3338 = vunpack.c.l.s4 1934713408
      %v3339 = vunpack.c.0.s8 %v3338
      %v3340 = vlaneseq
      %v3341 = vshrl.u32 %v3340, 7
      %v3342 = vsub.s32 %v3339, %v3341
      %v3343 = vrot.slane %v3329, %v3342
      %v3344 = vcombine.low %v3312, %v3327
      %v3345 = vcombine.high %v3312, %v3327
      %v3347 = vunpack.c.l.s4 1934713408
      %v3348 = vunpack.c.0.s8 %v3347
      %v3349 = vlaneseq
      %v3350 = vshrl.u32 %v3349, 7
      %v3351 = vsub.s32 %v3348, %v3350
      %v3352 = vrot.slane %v3344, %v3351
      %v3354 = vunpack.c.l.s4 1934713408
      %v3355 = vunpack.c.0.s8 %v3354
      %v3356 = vlaneseq
      %v3357 = vshrl.u32 %v3356, 7
      %v3358 = vsub.s32 %v3355, %v3357
      %v3359 = vrot.slane %v3345, %v3358
      %v3360 = vcombine.high %v3336, 0
      %v3361 = vcombine.high %v3343, 0
      %v3362 = vcombine.high %v3352, 0
      %v3363 = vcombine.high %v3359, 0
      %v3364 = vcombine.high %v3272, %v710
      %v3366 = vunpack.c.l.s4 1983009808
      %v3367 = vunpack.c.0.s8 %v3366
      %v3368 = vlaneseq
      %v3369 = vshrl.u32 %v3368, 7
      %v3370 = vsub.s32 %v3367, %v3369
      %v3371 = vrot.slane %v3272, %v3370
      %v3373 = vunpack.c.l.s4 1983009808
      %v3374 = vunpack.c.0.s8 %v3373
      %v3375 = vlaneseq
      %v3376 = vshrl.u32 %v3375, 7
      %v3377 = vsub.s32 %v3374, %v3376
      %v3378 = vrot.slane %v3364, %v3377
      %v3379 = vcombine.high %v3280, %v710
      %v3381 = vunpack.c.l.s4 1983009808
      %v3382 = vunpack.c.0.s8 %v3381
      %v3383 = vlaneseq
      %v3384 = vshrl.u32 %v3383, 7
      %v3385 = vsub.s32 %v3382, %v3384
      %v3386 = vrot.slane %v3280, %v3385
      %v3388 = vunpack.c.l.s4 1983009808
      %v3389 = vunpack.c.0.s8 %v3388
      %v3390 = vlaneseq
      %v3391 = vshrl.u32 %v3390, 7
      %v3392 = vsub.s32 %v3389, %v3391
      %v3393 = vrot.slane %v3379, %v3392
      %v3394 = vcombine.low %v3371, %v3386
      %v3395 = vcombine.high %v3371, %v3386
      %v3397 = vunpack.c.l.s4 1934713408
      %v3398 = vunpack.c.0.s8 %v3397
      %v3399 = vlaneseq
      %v3400 = vshrl.u32 %v3399, 7
      %v3401 = vsub.s32 %v3398, %v3400
      %v3402 = vrot.slane %v3394, %v3401
      %v3404 = vunpack.c.l.s4 1934713408
      %v3405 = vunpack.c.0.s8 %v3404
      %v3406 = vlaneseq
      %v3407 = vshrl.u32 %v3406, 7
      %v3408 = vsub.s32 %v3405, %v3407
      %v3409 = vrot.slane %v3395, %v3408
      %v3410 = vcombine.low %v3378, %v3393
      %v3411 = vcombine.high %v3378, %v3393
      %v3413 = vunpack.c.l.s4 1934713408
      %v3414 = vunpack.c.0.s8 %v3413
      %v3415 = vlaneseq
      %v3416 = vshrl.u32 %v3415, 7
      %v3417 = vsub.s32 %v3414, %v3416
      %v3418 = vrot.slane %v3410, %v3417
      %v3420 = vunpack.c.l.s4 1934713408
      %v3421 = vunpack.c.0.s8 %v3420
      %v3422 = vlaneseq
      %v3423 = vshrl.u32 %v3422, 7
      %v3424 = vsub.s32 %v3421, %v3423
      %v3425 = vrot.slane %v3411, %v3424
      %v3426 = vcombine.high %v3402, 0
      %v3427 = vcombine.high %v3409, 0
      %v3428 = vcombine.high %v3418, 0
      %v3429 = vcombine.high %v3425, 0
      %v3430 = vcombine.high %v3284, %v707
      %v3432 = vunpack.c.l.s4 1983009808
      %v3433 = vunpack.c.0.s8 %v3432
      %v3434 = vlaneseq
      %v3435 = vshrl.u32 %v3434, 7
      %v3436 = vsub.s32 %v3433, %v3435
      %v3437 = vrot.slane %v3284, %v3436
      %v3439 = vunpack.c.l.s4 1983009808
      %v3440 = vunpack.c.0.s8 %v3439
      %v3441 = vlaneseq
      %v3442 = vshrl.u32 %v3441, 7
      %v3443 = vsub.s32 %v3440, %v3442
      %v3444 = vrot.slane %v3430, %v3443
      %v3445 = vcombine.high %v3292, %v707
      %v3447 = vunpack.c.l.s4 1983009808
      %v3448 = vunpack.c.0.s8 %v3447
      %v3449 = vlaneseq
      %v3450 = vshrl.u32 %v3449, 7
      %v3451 = vsub.s32 %v3448, %v3450
      %v3452 = vrot.slane %v3292, %v3451
      %v3454 = vunpack.c.l.s4 1983009808
      %v3455 = vunpack.c.0.s8 %v3454
      %v3456 = vlaneseq
      %v3457 = vshrl.u32 %v3456, 7
      %v3458 = vsub.s32 %v3455, %v3457
      %v3459 = vrot.slane %v3445, %v3458
      %v3460 = vcombine.low %v3437, %v3452
      %v3461 = vcombine.high %v3437, %v3452
      %v3463 = vunpack.c.l.s4 1934713408
      %v3464 = vunpack.c.0.s8 %v3463
      %v3465 = vlaneseq
      %v3466 = vshrl.u32 %v3465, 7
      %v3467 = vsub.s32 %v3464, %v3466
      %v3468 = vrot.slane %v3460, %v3467
      %v3470 = vunpack.c.l.s4 1934713408
      %v3471 = vunpack.c.0.s8 %v3470
      %v3472 = vlaneseq
      %v3473 = vshrl.u32 %v3472, 7
      %v3474 = vsub.s32 %v3471, %v3473
      %v3475 = vrot.slane %v3461, %v3474
      %v3476 = vcombine.low %v3444, %v3459
      %v3477 = vcombine.high %v3444, %v3459
      %v3479 = vunpack.c.l.s4 1934713408
      %v3480 = vunpack.c.0.s8 %v3479
      %v3481 = vlaneseq
      %v3482 = vshrl.u32 %v3481, 7
      %v3483 = vsub.s32 %v3480, %v3482
      %v3484 = vrot.slane %v3476, %v3483
      %v3486 = vunpack.c.l.s4 1934713408
      %v3487 = vunpack.c.0.s8 %v3486
      %v3488 = vlaneseq
      %v3489 = vshrl.u32 %v3488, 7
      %v3490 = vsub.s32 %v3487, %v3489
      %v3491 = vrot.slane %v3477, %v3490
      %v3492 = vcombine.high %v3468, 0
      %v3493 = vcombine.high %v3475, 0
      %v3494 = vcombine.high %v3484, 0
      %v3495 = vcombine.high %v3491, 0
      %v3496 = vcombine.high %v3288, %v710
      %v3498 = vunpack.c.l.s4 1983009808
      %v3499 = vunpack.c.0.s8 %v3498
      %v3500 = vlaneseq
      %v3501 = vshrl.u32 %v3500, 7
      %v3502 = vsub.s32 %v3499, %v3501
      %v3503 = vrot.slane %v3288, %v3502
      %v3505 = vunpack.c.l.s4 1983009808
      %v3506 = vunpack.c.0.s8 %v3505
      %v3507 = vlaneseq
      %v3508 = vshrl.u32 %v3507, 7
      %v3509 = vsub.s32 %v3506, %v3508
      %v3510 = vrot.slane %v3496, %v3509
      %v3511 = vcombine.high %v3296, %v710
      %v3513 = vunpack.c.l.s4 1983009808
      %v3514 = vunpack.c.0.s8 %v3513
      %v3515 = vlaneseq
      %v3516 = vshrl.u32 %v3515, 7
      %v3517 = vsub.s32 %v3514, %v3516
      %v3518 = vrot.slane %v3296, %v3517
      %v3520 = vunpack.c.l.s4 1983009808
      %v3521 = vunpack.c.0.s8 %v3520
      %v3522 = vlaneseq
      %v3523 = vshrl.u32 %v3522, 7
      %v3524 = vsub.s32 %v3521, %v3523
      %v3525 = vrot.slane %v3511, %v3524
      %v3526 = vcombine.low %v3503, %v3518
      %v3527 = vcombine.high %v3503, %v3518
      %v3529 = vunpack.c.l.s4 1934713408
      %v3530 = vunpack.c.0.s8 %v3529
      %v3531 = vlaneseq
      %v3532 = vshrl.u32 %v3531, 7
      %v3533 = vsub.s32 %v3530, %v3532
      %v3534 = vrot.slane %v3526, %v3533
      %v3536 = vunpack.c.l.s4 1934713408
      %v3537 = vunpack.c.0.s8 %v3536
      %v3538 = vlaneseq
      %v3539 = vshrl.u32 %v3538, 7
      %v3540 = vsub.s32 %v3537, %v3539
      %v3541 = vrot.slane %v3527, %v3540
      %v3542 = vcombine.low %v3510, %v3525
      %v3543 = vcombine.high %v3510, %v3525
      %v3545 = vunpack.c.l.s4 1934713408
      %v3546 = vunpack.c.0.s8 %v3545
      %v3547 = vlaneseq
      %v3548 = vshrl.u32 %v3547, 7
      %v3549 = vsub.s32 %v3546, %v3548
      %v3550 = vrot.slane %v3542, %v3549
      %v3552 = vunpack.c.l.s4 1934713408
      %v3553 = vunpack.c.0.s8 %v3552
      %v3554 = vlaneseq
      %v3555 = vshrl.u32 %v3554, 7
      %v3556 = vsub.s32 %v3553, %v3555
      %v3557 = vrot.slane %v3543, %v3556
      %v3558 = vcombine.high %v3534, 0
      %v3559 = vcombine.high %v3541, 0
      %v3560 = vcombine.high %v3550, 0
      %v3561 = vcombine.high %v3557, 0
      %3563 = vrot.lane.b32.xlu0 %v3402, 32
      %v3564 = vpop.permute.xlu0 %3563
      %3566 = vrot.lane.b32.xlu0 %v3360, 64
      %v3567 = vpop.permute.xlu0 %3566
      %3569 = vrot.lane.b32.xlu0 %v3426, 96
      %v3570 = vpop.permute.xlu0 %3569
      %3572 = vrot.lane.b32.xlu0 %v3409, 32
      %v3573 = vpop.permute.xlu0 %3572
      %3575 = vrot.lane.b32.xlu0 %v3361, 64
      %v3576 = vpop.permute.xlu0 %3575
      %3578 = vrot.lane.b32.xlu0 %v3427, 96
      %v3579 = vpop.permute.xlu0 %3578
      %3581 = vrot.lane.b32.xlu0 %v3418, 32
      %v3582 = vpop.permute.xlu0 %3581
      %3584 = vrot.lane.b32.xlu0 %v3362, 64
      %v3585 = vpop.permute.xlu0 %3584
      %3587 = vrot.lane.b32.xlu0 %v3428, 96
      %v3588 = vpop.permute.xlu0 %3587
      %3590 = vrot.lane.b32.xlu0 %v3425, 32
      %v3591 = vpop.permute.xlu0 %3590
      %3593 = vrot.lane.b32.xlu0 %v3363, 64
      %v3594 = vpop.permute.xlu0 %3593
      %3596 = vrot.lane.b32.xlu0 %v3429, 96
      %v3597 = vpop.permute.xlu0 %3596
      %3599 = vrot.lane.b32.xlu0 %v3534, 32
      %v3600 = vpop.permute.xlu0 %3599
      %3602 = vrot.lane.b32.xlu0 %v3492, 64
      %v3603 = vpop.permute.xlu0 %3602
      %3605 = vrot.lane.b32.xlu0 %v3558, 96
      %v3606 = vpop.permute.xlu0 %3605
      %3608 = vrot.lane.b32.xlu0 %v3541, 32
      %v3609 = vpop.permute.xlu0 %3608
      %3611 = vrot.lane.b32.xlu0 %v3493, 64
      %v3612 = vpop.permute.xlu0 %3611
      %3614 = vrot.lane.b32.xlu0 %v3559, 96
      %v3615 = vpop.permute.xlu0 %3614
      %3617 = vrot.lane.b32.xlu0 %v3550, 32
      %v3618 = vpop.permute.xlu0 %3617
      %3620 = vrot.lane.b32.xlu0 %v3494, 64
      %v3621 = vpop.permute.xlu0 %3620
      %3623 = vrot.lane.b32.xlu0 %v3560, 96
      %v3624 = vpop.permute.xlu0 %3623
      %3626 = vrot.lane.b32.xlu0 %v3557, 32
      %v3627 = vpop.permute.xlu0 %3626
      %3629 = vrot.lane.b32.xlu0 %v3495, 64
      %v3630 = vpop.permute.xlu0 %3629
      %3632 = vrot.lane.b32.xlu0 %v3561, 96
      %v3633 = vpop.permute.xlu0 %3632
      %v3636 = vsel %vm1064, %v3336, %v3564
      %v3638 = vsel %vm1068, %v3636, %v3567
      %v3640 = vsel %vm1071, %v3638, %v3570
      %v3643 = vsel %vm1064, %v3343, %v3573
      %v3645 = vsel %vm1068, %v3643, %v3576
      %v3647 = vsel %vm1071, %v3645, %v3579
      %v3650 = vsel %vm1064, %v3352, %v3582
      %v3652 = vsel %vm1068, %v3650, %v3585
      %v3654 = vsel %vm1071, %v3652, %v3588
      %v3657 = vsel %vm1064, %v3359, %v3591
      %v3659 = vsel %vm1068, %v3657, %v3594
      %v3661 = vsel %vm1071, %v3659, %v3597
      %v3664 = vsel %vm1064, %v3468, %v3600
      %v3666 = vsel %vm1068, %v3664, %v3603
      %v3668 = vsel %vm1071, %v3666, %v3606
      %v3671 = vsel %vm1064, %v3475, %v3609
      %v3673 = vsel %vm1068, %v3671, %v3612
      %v3675 = vsel %vm1071, %v3673, %v3615
      %v3678 = vsel %vm1064, %v3484, %v3618
      %v3680 = vsel %vm1068, %v3678, %v3621
      %v3682 = vsel %vm1071, %v3680, %v3624
      %v3685 = vsel %vm1064, %v3491, %v3627
      %v3687 = vsel %vm1068, %v3685, %v3630
      %v3689 = vsel %vm1071, %v3687, %v3633
      %v3691 = vsel %vm1571, %v685, 0
      %v3693 = vsel %vm1575, %v3640, 0
      %v3695 = vsel %vm1575, %v3647, 0
      %v3697 = vsel %vm1575, %v3654, 0
      %v3699 = vsel %vm1575, %v3661, 0
      %v3701 = vsel %vm1575, %v3668, 0
      %v3703 = vsel %vm1575, %v3675, 0
      %v3705 = vsel %vm1575, %v3682, 0
      %v3707 = vsel %vm1575, %v3689, 0
      %3709 = vmatprep.subr.bf16.mxu0 %v3695
      %3710 = vmatpush1.bf16.msra.mxu0 %v3693
      %3711 = vmatprep.subr.bf16.mxu0 0
      %3712 = vmatpush1.bf16.msra.mxu0 0
      %3713 = vmatprep.subr.bf16.mxu0 0
      %3714 = vmatpush1.bf16.msra.mxu0 0
      %3715 = vmatprep.subr.bf16.mxu0 0
      %3716 = vmatpush1.bf16.msra.mxu0 0
      %3717 = vmatprep.subr.bf16.mxu0 0
      %3718 = vmatpush1.bf16.msra.mxu0 0
      %3719 = vmatprep.subr.bf16.mxu0 0
      %3720 = vmatpush1.bf16.msra.mxu0 0
      %3721 = vmatprep.subr.bf16.mxu0 0
      %3722 = vmatpush1.bf16.msra.mxu0 0
      %3723 = vmatprep.subr.bf16.mxu0 0
      %3724 = vmatpush1.bf16.msra.mxu0 0
      %3725 = vmatprep.subr.bf16.mxu0 0
      %3726 = vmatpush1.bf16.msra.mxu0 0
      %3727 = vmatprep.subr.bf16.mxu0 0
      %3728 = vmatpush1.bf16.msra.mxu0 0
      %3729 = vmatprep.subr.bf16.mxu0 0
      %3730 = vmatpush1.bf16.msra.mxu0 0
      %3731 = vmatprep.subr.bf16.mxu0 0
      %3732 = vmatpush1.bf16.msra.mxu0 0
      %3733 = vmatprep.subr.bf16.mxu0 0
      %3734 = vmatpush1.bf16.msra.mxu0 0
      %3735 = vmatprep.subr.bf16.mxu0 0
      %3736 = vmatpush1.bf16.msra.mxu0 0
      %3737 = vmatprep.subr.bf16.mxu0 0
      %3738 = vmatpush1.bf16.msra.mxu0 0
      %3739 = vmatprep.subr.bf16.mxu0 0
      %3740 = vmatpush1.bf16.msra.mxu0 0
      %3741 = vmatprep.mubr.bf16.mxu0 0
      %3742 = vmatmul.mubr.bf16.gmra.mrb[0].mxu0 %v3691
      %v3743 = vpop.f32.mrb[0].mxu0
      %v3744 = vadd.f32 0.0, %v3743
      %v3745 = vpop.f32.mrb[0].mxu0
      %v3746 = vadd.f32 0.0, %v3745
      %v3747 = vpop.f32.mrb[0].mxu0
      %v3748 = vpop.f32.mrb[0].mxu0
      %3749 = vdwg.mxu0
      %3750 = vmatprep.subr.bf16.mxu0 %v3699
      %3751 = vmatpush1.bf16.msra.mxu0 %v3697
      %3752 = vmatprep.subr.bf16.mxu0 0
      %3753 = vmatpush1.bf16.msra.mxu0 0
      %3754 = vmatprep.subr.bf16.mxu0 0
      %3755 = vmatpush1.bf16.msra.mxu0 0
      %3756 = vmatprep.subr.bf16.mxu0 0
      %3757 = vmatpush1.bf16.msra.mxu0 0
      %3758 = vmatprep.subr.bf16.mxu0 0
      %3759 = vmatpush1.bf16.msra.mxu0 0
      %3760 = vmatprep.subr.bf16.mxu0 0
      %3761 = vmatpush1.bf16.msra.mxu0 0
      %3762 = vmatprep.subr.bf16.mxu0 0
      %3763 = vmatpush1.bf16.msra.mxu0 0
      %3764 = vmatprep.subr.bf16.mxu0 0
      %3765 = vmatpush1.bf16.msra.mxu0 0
      %3766 = vmatprep.subr.bf16.mxu0 0
      %3767 = vmatpush1.bf16.msra.mxu0 0
      %3768 = vmatprep.subr.bf16.mxu0 0
      %3769 = vmatpush1.bf16.msra.mxu0 0
      %3770 = vmatprep.subr.bf16.mxu0 0
      %3771 = vmatpush1.bf16.msra.mxu0 0
      %3772 = vmatprep.subr.bf16.mxu0 0
      %3773 = vmatpush1.bf16.msra.mxu0 0
      %3774 = vmatprep.subr.bf16.mxu0 0
      %3775 = vmatpush1.bf16.msra.mxu0 0
      %3776 = vmatprep.subr.bf16.mxu0 0
      %3777 = vmatpush1.bf16.msra.mxu0 0
      %3778 = vmatprep.subr.bf16.mxu0 0
      %3779 = vmatpush1.bf16.msra.mxu0 0
      %3780 = vmatprep.subr.bf16.mxu0 0
      %3781 = vmatpush1.bf16.msra.mxu0 0
      %3782 = vmatprep.mubr.bf16.mxu0 0
      %3783 = vmatmul.mubr.bf16.gmra.mrb[0].mxu0 %v3691
      %v3784 = vpop.f32.mrb[0].mxu0
      %v3785 = vadd.f32 0.0, %v3784
      %v3786 = vpop.f32.mrb[0].mxu0
      %v3787 = vadd.f32 0.0, %v3786
      %v3788 = vpop.f32.mrb[0].mxu0
      %v3789 = vpop.f32.mrb[0].mxu0
      %3790 = vdwg.mxu0
      %3791 = vmatprep.subr.bf16.mxu0 %v3703
      %3792 = vmatpush1.bf16.msra.mxu0 %v3701
      %3793 = vmatprep.subr.bf16.mxu0 0
      %3794 = vmatpush1.bf16.msra.mxu0 0
      %3795 = vmatprep.subr.bf16.mxu0 0
      %3796 = vmatpush1.bf16.msra.mxu0 0
      %3797 = vmatprep.subr.bf16.mxu0 0
      %3798 = vmatpush1.bf16.msra.mxu0 0
      %3799 = vmatprep.subr.bf16.mxu0 0
      %3800 = vmatpush1.bf16.msra.mxu0 0
      %3801 = vmatprep.subr.bf16.mxu0 0
      %3802 = vmatpush1.bf16.msra.mxu0 0
      %3803 = vmatprep.subr.bf16.mxu0 0
      %3804 = vmatpush1.bf16.msra.mxu0 0
      %3805 = vmatprep.subr.bf16.mxu0 0
      %3806 = vmatpush1.bf16.msra.mxu0 0
      %3807 = vmatprep.subr.bf16.mxu0 0
      %3808 = vmatpush1.bf16.msra.mxu0 0
      %3809 = vmatprep.subr.bf16.mxu0 0
      %3810 = vmatpush1.bf16.msra.mxu0 0
      %3811 = vmatprep.subr.bf16.mxu0 0
      %3812 = vmatpush1.bf16.msra.mxu0 0
      %3813 = vmatprep.subr.bf16.mxu0 0
      %3814 = vmatpush1.bf16.msra.mxu0 0
      %3815 = vmatprep.subr.bf16.mxu0 0
      %3816 = vmatpush1.bf16.msra.mxu0 0
      %3817 = vmatprep.subr.bf16.mxu0 0
      %3818 = vmatpush1.bf16.msra.mxu0 0
      %3819 = vmatprep.subr.bf16.mxu0 0
      %3820 = vmatpush1.bf16.msra.mxu0 0
      %3821 = vmatprep.subr.bf16.mxu0 0
      %3822 = vmatpush1.bf16.msra.mxu0 0
      %3823 = vmatprep.mubr.bf16.mxu0 0
      %3824 = vmatmul.mubr.bf16.gmra.mrb[0].mxu0 %v3691
      %v3825 = vpop.f32.mrb[0].mxu0
      %v3826 = vadd.f32 0.0, %v3825
      %v3827 = vpop.f32.mrb[0].mxu0
      %v3828 = vadd.f32 0.0, %v3827
      %v3829 = vpop.f32.mrb[0].mxu0
      %v3830 = vpop.f32.mrb[0].mxu0
      %3831 = vdwg.mxu0
      %3832 = vmatprep.subr.bf16.mxu0 %v3707
      %3833 = vmatpush1.bf16.msra.mxu0 %v3705
      %3834 = vmatprep.subr.bf16.mxu0 0
      %3835 = vmatpush1.bf16.msra.mxu0 0
      %3836 = vmatprep.subr.bf16.mxu0 0
      %3837 = vmatpush1.bf16.msra.mxu0 0
      %3838 = vmatprep.subr.bf16.mxu0 0
      %3839 = vmatpush1.bf16.msra.mxu0 0
      %3840 = vmatprep.subr.bf16.mxu0 0
      %3841 = vmatpush1.bf16.msra.mxu0 0
      %3842 = vmatprep.subr.bf16.mxu0 0
      %3843 = vmatpush1.bf16.msra.mxu0 0
      %3844 = vmatprep.subr.bf16.mxu0 0
      %3845 = vmatpush1.bf16.msra.mxu0 0
      %3846 = vmatprep.subr.bf16.mxu0 0
      %3847 = vmatpush1.bf16.msra.mxu0 0
      %3848 = vmatprep.subr.bf16.mxu0 0
      %3849 = vmatpush1.bf16.msra.mxu0 0
      %3850 = vmatprep.subr.bf16.mxu0 0
      %3851 = vmatpush1.bf16.msra.mxu0 0
      %3852 = vmatprep.subr.bf16.mxu0 0
      %3853 = vmatpush1.bf16.msra.mxu0 0
      %3854 = vmatprep.subr.bf16.mxu0 0
      %3855 = vmatpush1.bf16.msra.mxu0 0
      %3856 = vmatprep.subr.bf16.mxu0 0
      %3857 = vmatpush1.bf16.msra.mxu0 0
      %3858 = vmatprep.subr.bf16.mxu0 0
      %3859 = vmatpush1.bf16.msra.mxu0 0
      %3860 = vmatprep.subr.bf16.mxu0 0
      %3861 = vmatpush1.bf16.msra.mxu0 0
      %3862 = vmatprep.subr.bf16.mxu0 0
      %3863 = vmatpush1.bf16.msra.mxu0 0
      %3864 = vmatprep.mubr.bf16.mxu0 0
      %3865 = vmatmul.mubr.bf16.gmra.mrb[0].mxu0 %v3691
      %v3866 = vpop.f32.mrb[0].mxu0
      %v3867 = vadd.f32 0.0, %v3866
      %v3868 = vpop.f32.mrb[0].mxu0
      %v3869 = vadd.f32 0.0, %v3868
      %v3870 = vpop.f32.mrb[0].mxu0
      %v3871 = vpop.f32.mrb[0].mxu0
      %3872 = vdwg.mxu0
      %v3873 = vadd.f32 %v3242, %v3744
      %v3874 = vadd.f32 %v3243, %v3746
      %v3875 = vadd.f32 %v3244, %v3785
      %v3876 = vadd.f32 %v3245, %v3787
      %v3877 = vadd.f32 %v3246, %v3826
      %v3878 = vadd.f32 %v3247, %v3828
      %v3879 = vadd.f32 %v3248, %v3867
      %v3880 = vadd.f32 %v3249, %v3869
      %3881 = vrot.lane.b32.xlu0 %v2579, 126
      %v3882 = vpop.permute.xlu0 %3881
      %3883 = vrot.lane.b32.xlu0 %v2586, 126
      %v3884 = vpop.permute.xlu0 %3883
      %3885 = vrot.lane.b32.xlu0 %v2595, 126
      %v3886 = vpop.permute.xlu0 %3885
      %3887 = vrot.lane.b32.xlu0 %v2602, 126
      %v3888 = vpop.permute.xlu0 %3887
      %3889 = vrot.lane.b32.xlu0 %v2611, 126
      %v3890 = vpop.permute.xlu0 %3889
      %3891 = vrot.lane.b32.xlu0 %v2618, 126
      %v3892 = vpop.permute.xlu0 %3891
      %3893 = vrot.lane.b32.xlu0 %v2627, 126
      %v3894 = vpop.permute.xlu0 %3893
      %3895 = vrot.lane.b32.xlu0 %v2634, 126
      %v3896 = vpop.permute.xlu0 %3895
      %v3899 = vpack.i.b16 %v3886, %v3882
      %v3901 = vshrl.u32 %v3882, 16
      %v3902 = vshrl.u32 %v3886, 16
      %v3903 = vpack.i.b16 %v3902, %v3901
      %v3907 = vpack.i.b16 %v3894, %v3890
      %v3909 = vshrl.u32 %v3890, 16
      %v3910 = vshrl.u32 %v3894, 16
      %v3911 = vpack.i.b16 %v3910, %v3909
      %v3915 = vpack.i.b16 %v3888, %v3884
      %v3917 = vshrl.u32 %v3884, 16
      %v3918 = vshrl.u32 %v3888, 16
      %v3919 = vpack.i.b16 %v3918, %v3917
      %v3923 = vpack.i.b16 %v3896, %v3892
      %v3925 = vshrl.u32 %v3892, 16
      %v3926 = vshrl.u32 %v3896, 16
      %v3927 = vpack.i.b16 %v3926, %v3925
      %v3929 = vcombine.high %v3899, %v707
      %v3931 = vunpack.c.l.s4 1983009808
      %v3932 = vunpack.c.0.s8 %v3931
      %v3933 = vlaneseq
      %v3934 = vshrl.u32 %v3933, 7
      %v3935 = vsub.s32 %v3932, %v3934
      %v3936 = vrot.slane %v3899, %v3935
      %v3938 = vunpack.c.l.s4 1983009808
      %v3939 = vunpack.c.0.s8 %v3938
      %v3940 = vlaneseq
      %v3941 = vshrl.u32 %v3940, 7
      %v3942 = vsub.s32 %v3939, %v3941
      %v3943 = vrot.slane %v3929, %v3942
      %v3944 = vcombine.high %v3907, %v707
      %v3946 = vunpack.c.l.s4 1983009808
      %v3947 = vunpack.c.0.s8 %v3946
      %v3948 = vlaneseq
      %v3949 = vshrl.u32 %v3948, 7
      %v3950 = vsub.s32 %v3947, %v3949
      %v3951 = vrot.slane %v3907, %v3950
      %v3953 = vunpack.c.l.s4 1983009808
      %v3954 = vunpack.c.0.s8 %v3953
      %v3955 = vlaneseq
      %v3956 = vshrl.u32 %v3955, 7
      %v3957 = vsub.s32 %v3954, %v3956
      %v3958 = vrot.slane %v3944, %v3957
      %v3959 = vcombine.low %v3936, %v3951
      %v3960 = vcombine.high %v3936, %v3951
      %v3962 = vunpack.c.l.s4 1934713408
      %v3963 = vunpack.c.0.s8 %v3962
      %v3964 = vlaneseq
      %v3965 = vshrl.u32 %v3964, 7
      %v3966 = vsub.s32 %v3963, %v3965
      %v3967 = vrot.slane %v3959, %v3966
      %v3969 = vunpack.c.l.s4 1934713408
      %v3970 = vunpack.c.0.s8 %v3969
      %v3971 = vlaneseq
      %v3972 = vshrl.u32 %v3971, 7
      %v3973 = vsub.s32 %v3970, %v3972
      %v3974 = vrot.slane %v3960, %v3973
      %v3975 = vcombine.low %v3943, %v3958
      %v3976 = vcombine.high %v3943, %v3958
      %v3978 = vunpack.c.l.s4 1934713408
      %v3979 = vunpack.c.0.s8 %v3978
      %v3980 = vlaneseq
      %v3981 = vshrl.u32 %v3980, 7
      %v3982 = vsub.s32 %v3979, %v3981
      %v3983 = vrot.slane %v3975, %v3982
      %v3985 = vunpack.c.l.s4 1934713408
      %v3986 = vunpack.c.0.s8 %v3985
      %v3987 = vlaneseq
      %v3988 = vshrl.u32 %v3987, 7
      %v3989 = vsub.s32 %v3986, %v3988
      %v3990 = vrot.slane %v3976, %v3989
      %v3991 = vcombine.high %v3967, 0
      %v3992 = vcombine.high %v3974, 0
      %v3993 = vcombine.high %v3983, 0
      %v3994 = vcombine.high %v3990, 0
      %v3995 = vcombine.high %v3903, %v710
      %v3997 = vunpack.c.l.s4 1983009808
      %v3998 = vunpack.c.0.s8 %v3997
      %v3999 = vlaneseq
      %v4000 = vshrl.u32 %v3999, 7
      %v4001 = vsub.s32 %v3998, %v4000
      %v4002 = vrot.slane %v3903, %v4001
      %v4004 = vunpack.c.l.s4 1983009808
      %v4005 = vunpack.c.0.s8 %v4004
      %v4006 = vlaneseq
      %v4007 = vshrl.u32 %v4006, 7
      %v4008 = vsub.s32 %v4005, %v4007
      %v4009 = vrot.slane %v3995, %v4008
      %v4010 = vcombine.high %v3911, %v710
      %v4012 = vunpack.c.l.s4 1983009808
      %v4013 = vunpack.c.0.s8 %v4012
      %v4014 = vlaneseq
      %v4015 = vshrl.u32 %v4014, 7
      %v4016 = vsub.s32 %v4013, %v4015
      %v4017 = vrot.slane %v3911, %v4016
      %v4019 = vunpack.c.l.s4 1983009808
      %v4020 = vunpack.c.0.s8 %v4019
      %v4021 = vlaneseq
      %v4022 = vshrl.u32 %v4021, 7
      %v4023 = vsub.s32 %v4020, %v4022
      %v4024 = vrot.slane %v4010, %v4023
      %v4025 = vcombine.low %v4002, %v4017
      %v4026 = vcombine.high %v4002, %v4017
      %v4028 = vunpack.c.l.s4 1934713408
      %v4029 = vunpack.c.0.s8 %v4028
      %v4030 = vlaneseq
      %v4031 = vshrl.u32 %v4030, 7
      %v4032 = vsub.s32 %v4029, %v4031
      %v4033 = vrot.slane %v4025, %v4032
      %v4035 = vunpack.c.l.s4 1934713408
      %v4036 = vunpack.c.0.s8 %v4035
      %v4037 = vlaneseq
      %v4038 = vshrl.u32 %v4037, 7
      %v4039 = vsub.s32 %v4036, %v4038
      %v4040 = vrot.slane %v4026, %v4039
      %v4041 = vcombine.low %v4009, %v4024
      %v4042 = vcombine.high %v4009, %v4024
      %v4044 = vunpack.c.l.s4 1934713408
      %v4045 = vunpack.c.0.s8 %v4044
      %v4046 = vlaneseq
      %v4047 = vshrl.u32 %v4046, 7
      %v4048 = vsub.s32 %v4045, %v4047
      %v4049 = vrot.slane %v4041, %v4048
      %v4051 = vunpack.c.l.s4 1934713408
      %v4052 = vunpack.c.0.s8 %v4051
      %v4053 = vlaneseq
      %v4054 = vshrl.u32 %v4053, 7
      %v4055 = vsub.s32 %v4052, %v4054
      %v4056 = vrot.slane %v4042, %v4055
      %v4057 = vcombine.high %v4033, 0
      %v4058 = vcombine.high %v4040, 0
      %v4059 = vcombine.high %v4049, 0
      %v4060 = vcombine.high %v4056, 0
      %v4061 = vcombine.high %v3915, %v707
      %v4063 = vunpack.c.l.s4 1983009808
      %v4064 = vunpack.c.0.s8 %v4063
      %v4065 = vlaneseq
      %v4066 = vshrl.u32 %v4065, 7
      %v4067 = vsub.s32 %v4064, %v4066
      %v4068 = vrot.slane %v3915, %v4067
      %v4070 = vunpack.c.l.s4 1983009808
      %v4071 = vunpack.c.0.s8 %v4070
      %v4072 = vlaneseq
      %v4073 = vshrl.u32 %v4072, 7
      %v4074 = vsub.s32 %v4071, %v4073
      %v4075 = vrot.slane %v4061, %v4074
      %v4076 = vcombine.high %v3923, %v707
      %v4078 = vunpack.c.l.s4 1983009808
      %v4079 = vunpack.c.0.s8 %v4078
      %v4080 = vlaneseq
      %v4081 = vshrl.u32 %v4080, 7
      %v4082 = vsub.s32 %v4079, %v4081
      %v4083 = vrot.slane %v3923, %v4082
      %v4085 = vunpack.c.l.s4 1983009808
      %v4086 = vunpack.c.0.s8 %v4085
      %v4087 = vlaneseq
      %v4088 = vshrl.u32 %v4087, 7
      %v4089 = vsub.s32 %v4086, %v4088
      %v4090 = vrot.slane %v4076, %v4089
      %v4091 = vcombine.low %v4068, %v4083
      %v4092 = vcombine.high %v4068, %v4083
      %v4094 = vunpack.c.l.s4 1934713408
      %v4095 = vunpack.c.0.s8 %v4094
      %v4096 = vlaneseq
      %v4097 = vshrl.u32 %v4096, 7
      %v4098 = vsub.s32 %v4095, %v4097
      %v4099 = vrot.slane %v4091, %v4098
      %v4101 = vunpack.c.l.s4 1934713408
      %v4102 = vunpack.c.0.s8 %v4101
      %v4103 = vlaneseq
      %v4104 = vshrl.u32 %v4103, 7
      %v4105 = vsub.s32 %v4102, %v4104
      %v4106 = vrot.slane %v4092, %v4105
      %v4107 = vcombine.low %v4075, %v4090
      %v4108 = vcombine.high %v4075, %v4090
      %v4110 = vunpack.c.l.s4 1934713408
      %v4111 = vunpack.c.0.s8 %v4110
      %v4112 = vlaneseq
      %v4113 = vshrl.u32 %v4112, 7
      %v4114 = vsub.s32 %v4111, %v4113
      %v4115 = vrot.slane %v4107, %v4114
      %v4117 = vunpack.c.l.s4 1934713408
      %v4118 = vunpack.c.0.s8 %v4117
      %v4119 = vlaneseq
      %v4120 = vshrl.u32 %v4119, 7
      %v4121 = vsub.s32 %v4118, %v4120
      %v4122 = vrot.slane %v4108, %v4121
      %v4123 = vcombine.high %v4099, 0
      %v4124 = vcombine.high %v4106, 0
      %v4125 = vcombine.high %v4115, 0
      %v4126 = vcombine.high %v4122, 0
      %v4127 = vcombine.high %v3919, %v710
      %v4129 = vunpack.c.l.s4 1983009808
      %v4130 = vunpack.c.0.s8 %v4129
      %v4131 = vlaneseq
      %v4132 = vshrl.u32 %v4131, 7
      %v4133 = vsub.s32 %v4130, %v4132
      %v4134 = vrot.slane %v3919, %v4133
      %v4136 = vunpack.c.l.s4 1983009808
      %v4137 = vunpack.c.0.s8 %v4136
      %v4138 = vlaneseq
      %v4139 = vshrl.u32 %v4138, 7
      %v4140 = vsub.s32 %v4137, %v4139
      %v4141 = vrot.slane %v4127, %v4140
      %v4142 = vcombine.high %v3927, %v710
      %v4144 = vunpack.c.l.s4 1983009808
      %v4145 = vunpack.c.0.s8 %v4144
      %v4146 = vlaneseq
      %v4147 = vshrl.u32 %v4146, 7
      %v4148 = vsub.s32 %v4145, %v4147
      %v4149 = vrot.slane %v3927, %v4148
      %v4151 = vunpack.c.l.s4 1983009808
      %v4152 = vunpack.c.0.s8 %v4151
      %v4153 = vlaneseq
      %v4154 = vshrl.u32 %v4153, 7
      %v4155 = vsub.s32 %v4152, %v4154
      %v4156 = vrot.slane %v4142, %v4155
      %v4157 = vcombine.low %v4134, %v4149
      %v4158 = vcombine.high %v4134, %v4149
      %v4160 = vunpack.c.l.s4 1934713408
      %v4161 = vunpack.c.0.s8 %v4160
      %v4162 = vlaneseq
      %v4163 = vshrl.u32 %v4162, 7
      %v4164 = vsub.s32 %v4161, %v4163
      %v4165 = vrot.slane %v4157, %v4164
      %v4167 = vunpack.c.l.s4 1934713408
      %v4168 = vunpack.c.0.s8 %v4167
      %v4169 = vlaneseq
      %v4170 = vshrl.u32 %v4169, 7
      %v4171 = vsub.s32 %v4168, %v4170
      %v4172 = vrot.slane %v4158, %v4171
      %v4173 = vcombine.low %v4141, %v4156
      %v4174 = vcombine.high %v4141, %v4156
      %v4176 = vunpack.c.l.s4 1934713408
      %v4177 = vunpack.c.0.s8 %v4176
      %v4178 = vlaneseq
      %v4179 = vshrl.u32 %v4178, 7
      %v4180 = vsub.s32 %v4177, %v4179
      %v4181 = vrot.slane %v4173, %v4180
      %v4183 = vunpack.c.l.s4 1934713408
      %v4184 = vunpack.c.0.s8 %v4183
      %v4185 = vlaneseq
      %v4186 = vshrl.u32 %v4185, 7
      %v4187 = vsub.s32 %v4184, %v4186
      %v4188 = vrot.slane %v4174, %v4187
      %v4189 = vcombine.high %v4165, 0
      %v4190 = vcombine.high %v4172, 0
      %v4191 = vcombine.high %v4181, 0
      %v4192 = vcombine.high %v4188, 0
      %4194 = vrot.lane.b32.xlu0 %v4033, 32
      %v4195 = vpop.permute.xlu0 %4194
      %4197 = vrot.lane.b32.xlu0 %v3991, 64
      %v4198 = vpop.permute.xlu0 %4197
      %4200 = vrot.lane.b32.xlu0 %v4057, 96
      %v4201 = vpop.permute.xlu0 %4200
      %4203 = vrot.lane.b32.xlu0 %v4040, 32
      %v4204 = vpop.permute.xlu0 %4203
      %4206 = vrot.lane.b32.xlu0 %v3992, 64
      %v4207 = vpop.permute.xlu0 %4206
      %4209 = vrot.lane.b32.xlu0 %v4058, 96
      %v4210 = vpop.permute.xlu0 %4209
      %4212 = vrot.lane.b32.xlu0 %v4049, 32
      %v4213 = vpop.permute.xlu0 %4212
      %4215 = vrot.lane.b32.xlu0 %v3993, 64
      %v4216 = vpop.permute.xlu0 %4215
      %4218 = vrot.lane.b32.xlu0 %v4059, 96
      %v4219 = vpop.permute.xlu0 %4218
      %4221 = vrot.lane.b32.xlu0 %v4056, 32
      %v4222 = vpop.permute.xlu0 %4221
      %4224 = vrot.lane.b32.xlu0 %v3994, 64
      %v4225 = vpop.permute.xlu0 %4224
      %4227 = vrot.lane.b32.xlu0 %v4060, 96
      %v4228 = vpop.permute.xlu0 %4227
      %4230 = vrot.lane.b32.xlu0 %v4165, 32
      %v4231 = vpop.permute.xlu0 %4230
      %4233 = vrot.lane.b32.xlu0 %v4123, 64
      %v4234 = vpop.permute.xlu0 %4233
      %4236 = vrot.lane.b32.xlu0 %v4189, 96
      %v4237 = vpop.permute.xlu0 %4236
      %4239 = vrot.lane.b32.xlu0 %v4172, 32
      %v4240 = vpop.permute.xlu0 %4239
      %4242 = vrot.lane.b32.xlu0 %v4124, 64
      %v4243 = vpop.permute.xlu0 %4242
      %4245 = vrot.lane.b32.xlu0 %v4190, 96
      %v4246 = vpop.permute.xlu0 %4245
      %4248 = vrot.lane.b32.xlu0 %v4181, 32
      %v4249 = vpop.permute.xlu0 %4248
      %4251 = vrot.lane.b32.xlu0 %v4125, 64
      %v4252 = vpop.permute.xlu0 %4251
      %4254 = vrot.lane.b32.xlu0 %v4191, 96
      %v4255 = vpop.permute.xlu0 %4254
      %4257 = vrot.lane.b32.xlu0 %v4188, 32
      %v4258 = vpop.permute.xlu0 %4257
      %4260 = vrot.lane.b32.xlu0 %v4126, 64
      %v4261 = vpop.permute.xlu0 %4260
      %4263 = vrot.lane.b32.xlu0 %v4192, 96
      %v4264 = vpop.permute.xlu0 %4263
      %v4267 = vsel %vm1064, %v3967, %v4195
      %v4269 = vsel %vm1068, %v4267, %v4198
      %v4271 = vsel %vm1071, %v4269, %v4201
      %v4274 = vsel %vm1064, %v3974, %v4204
      %v4276 = vsel %vm1068, %v4274, %v4207
      %v4278 = vsel %vm1071, %v4276, %v4210
      %v4281 = vsel %vm1064, %v3983, %v4213
      %v4283 = vsel %vm1068, %v4281, %v4216
      %v4285 = vsel %vm1071, %v4283, %v4219
      %v4288 = vsel %vm1064, %v3990, %v4222
      %v4290 = vsel %vm1068, %v4288, %v4225
      %v4292 = vsel %vm1071, %v4290, %v4228
      %v4295 = vsel %vm1064, %v4099, %v4231
      %v4297 = vsel %vm1068, %v4295, %v4234
      %v4299 = vsel %vm1071, %v4297, %v4237
      %v4302 = vsel %vm1064, %v4106, %v4240
      %v4304 = vsel %vm1068, %v4302, %v4243
      %v4306 = vsel %vm1071, %v4304, %v4246
      %v4309 = vsel %vm1064, %v4115, %v4249
      %v4311 = vsel %vm1068, %v4309, %v4252
      %v4313 = vsel %vm1071, %v4311, %v4255
      %v4316 = vsel %vm1064, %v4122, %v4258
      %v4318 = vsel %vm1068, %v4316, %v4261
      %v4320 = vsel %vm1071, %v4318, %v4264
      %v4322 = vsel %vm1571, %v686, 0
      %v4324 = vsel %vm1575, %v4271, 0
      %v4326 = vsel %vm1575, %v4278, 0
      %v4328 = vsel %vm1575, %v4285, 0
      %v4330 = vsel %vm1575, %v4292, 0
      %v4332 = vsel %vm1575, %v4299, 0
      %v4334 = vsel %vm1575, %v4306, 0
      %v4336 = vsel %vm1575, %v4313, 0
      %v4338 = vsel %vm1575, %v4320, 0
      %4340 = vmatprep.subr.bf16.mxu0 %v4326
      %4341 = vmatpush1.bf16.msra.mxu0 %v4324
      %4342 = vmatprep.subr.bf16.mxu0 0
      %4343 = vmatpush1.bf16.msra.mxu0 0
      %4344 = vmatprep.subr.bf16.mxu0 0
      %4345 = vmatpush1.bf16.msra.mxu0 0
      %4346 = vmatprep.subr.bf16.mxu0 0
      %4347 = vmatpush1.bf16.msra.mxu0 0
      %4348 = vmatprep.subr.bf16.mxu0 0
      %4349 = vmatpush1.bf16.msra.mxu0 0
      %4350 = vmatprep.subr.bf16.mxu0 0
      %4351 = vmatpush1.bf16.msra.mxu0 0
      %4352 = vmatprep.subr.bf16.mxu0 0
      %4353 = vmatpush1.bf16.msra.mxu0 0
      %4354 = vmatprep.subr.bf16.mxu0 0
      %4355 = vmatpush1.bf16.msra.mxu0 0
      %4356 = vmatprep.subr.bf16.mxu0 0
      %4357 = vmatpush1.bf16.msra.mxu0 0
      %4358 = vmatprep.subr.bf16.mxu0 0
      %4359 = vmatpush1.bf16.msra.mxu0 0
      %4360 = vmatprep.subr.bf16.mxu0 0
      %4361 = vmatpush1.bf16.msra.mxu0 0
      %4362 = vmatprep.subr.bf16.mxu0 0
      %4363 = vmatpush1.bf16.msra.mxu0 0
      %4364 = vmatprep.subr.bf16.mxu0 0
      %4365 = vmatpush1.bf16.msra.mxu0 0
      %4366 = vmatprep.subr.bf16.mxu0 0
      %4367 = vmatpush1.bf16.msra.mxu0 0
      %4368 = vmatprep.subr.bf16.mxu0 0
      %4369 = vmatpush1.bf16.msra.mxu0 0
      %4370 = vmatprep.subr.bf16.mxu0 0
      %4371 = vmatpush1.bf16.msra.mxu0 0
      %4372 = vmatprep.mubr.bf16.mxu0 0
      %4373 = vmatmul.mubr.bf16.gmra.mrb[0].mxu0 %v4322
      %v4374 = vpop.f32.mrb[0].mxu0
      %v4375 = vadd.f32 0.0, %v4374
      %v4376 = vpop.f32.mrb[0].mxu0
      %v4377 = vadd.f32 0.0, %v4376
      %v4378 = vpop.f32.mrb[0].mxu0
      %v4379 = vpop.f32.mrb[0].mxu0
      %4380 = vdwg.mxu0
      %4381 = vmatprep.subr.bf16.mxu0 %v4330
      %4382 = vmatpush1.bf16.msra.mxu0 %v4328
      %4383 = vmatprep.subr.bf16.mxu0 0
      %4384 = vmatpush1.bf16.msra.mxu0 0
      %4385 = vmatprep.subr.bf16.mxu0 0
      %4386 = vmatpush1.bf16.msra.mxu0 0
      %4387 = vmatprep.subr.bf16.mxu0 0
      %4388 = vmatpush1.bf16.msra.mxu0 0
      %4389 = vmatprep.subr.bf16.mxu0 0
      %4390 = vmatpush1.bf16.msra.mxu0 0
      %4391 = vmatprep.subr.bf16.mxu0 0
      %4392 = vmatpush1.bf16.msra.mxu0 0
      %4393 = vmatprep.subr.bf16.mxu0 0
      %4394 = vmatpush1.bf16.msra.mxu0 0
      %4395 = vmatprep.subr.bf16.mxu0 0
      %4396 = vmatpush1.bf16.msra.mxu0 0
      %4397 = vmatprep.subr.bf16.mxu0 0
      %4398 = vmatpush1.bf16.msra.mxu0 0
      %4399 = vmatprep.subr.bf16.mxu0 0
      %4400 = vmatpush1.bf16.msra.mxu0 0
      %4401 = vmatprep.subr.bf16.mxu0 0
      %4402 = vmatpush1.bf16.msra.mxu0 0
      %4403 = vmatprep.subr.bf16.mxu0 0
      %4404 = vmatpush1.bf16.msra.mxu0 0
      %4405 = vmatprep.subr.bf16.mxu0 0
      %4406 = vmatpush1.bf16.msra.mxu0 0
      %4407 = vmatprep.subr.bf16.mxu0 0
      %4408 = vmatpush1.bf16.msra.mxu0 0
      %4409 = vmatprep.subr.bf16.mxu0 0
      %4410 = vmatpush1.bf16.msra.mxu0 0
      %4411 = vmatprep.subr.bf16.mxu0 0
      %4412 = vmatpush1.bf16.msra.mxu0 0
      %4413 = vmatprep.mubr.bf16.mxu0 0
      %4414 = vmatmul.mubr.bf16.gmra.mrb[0].mxu0 %v4322
      %v4415 = vpop.f32.mrb[0].mxu0
      %v4416 = vadd.f32 0.0, %v4415
      %v4417 = vpop.f32.mrb[0].mxu0
      %v4418 = vadd.f32 0.0, %v4417
      %v4419 = vpop.f32.mrb[0].mxu0
      %v4420 = vpop.f32.mrb[0].mxu0
      %4421 = vdwg.mxu0
      %4422 = vmatprep.subr.bf16.mxu0 %v4334
      %4423 = vmatpush1.bf16.msra.mxu0 %v4332
      %4424 = vmatprep.subr.bf16.mxu0 0
      %4425 = vmatpush1.bf16.msra.mxu0 0
      %4426 = vmatprep.subr.bf16.mxu0 0
      %4427 = vmatpush1.bf16.msra.mxu0 0
      %4428 = vmatprep.subr.bf16.mxu0 0
      %4429 = vmatpush1.bf16.msra.mxu0 0
      %4430 = vmatprep.subr.bf16.mxu0 0
      %4431 = vmatpush1.bf16.msra.mxu0 0
      %4432 = vmatprep.subr.bf16.mxu0 0
      %4433 = vmatpush1.bf16.msra.mxu0 0
      %4434 = vmatprep.subr.bf16.mxu0 0
      %4435 = vmatpush1.bf16.msra.mxu0 0
      %4436 = vmatprep.subr.bf16.mxu0 0
      %4437 = vmatpush1.bf16.msra.mxu0 0
      %4438 = vmatprep.subr.bf16.mxu0 0
      %4439 = vmatpush1.bf16.msra.mxu0 0
      %4440 = vmatprep.subr.bf16.mxu0 0
      %4441 = vmatpush1.bf16.msra.mxu0 0
      %4442 = vmatprep.subr.bf16.mxu0 0
      %4443 = vmatpush1.bf16.msra.mxu0 0
      %4444 = vmatprep.subr.bf16.mxu0 0
      %4445 = vmatpush1.bf16.msra.mxu0 0
      %4446 = vmatprep.subr.bf16.mxu0 0
      %4447 = vmatpush1.bf16.msra.mxu0 0
      %4448 = vmatprep.subr.bf16.mxu0 0
      %4449 = vmatpush1.bf16.msra.mxu0 0
      %4450 = vmatprep.subr.bf16.mxu0 0
      %4451 = vmatpush1.bf16.msra.mxu0 0
      %4452 = vmatprep.subr.bf16.mxu0 0
      %4453 = vmatpush1.bf16.msra.mxu0 0
      %4454 = vmatprep.mubr.bf16.mxu0 0
      %4455 = vmatmul.mubr.bf16.gmra.mrb[0].mxu0 %v4322
      %v4456 = vpop.f32.mrb[0].mxu0
      %v4457 = vadd.f32 0.0, %v4456
      %v4458 = vpop.f32.mrb[0].mxu0
      %v4459 = vadd.f32 0.0, %v4458
      %v4460 = vpop.f32.mrb[0].mxu0
      %v4461 = vpop.f32.mrb[0].mxu0
      %4462 = vdwg.mxu0
      %4463 = vmatprep.subr.bf16.mxu0 %v4338
      %4464 = vmatpush1.bf16.msra.mxu0 %v4336
      %4465 = vmatprep.subr.bf16.mxu0 0
      %4466 = vmatpush1.bf16.msra.mxu0 0
      %4467 = vmatprep.subr.bf16.mxu0 0
      %4468 = vmatpush1.bf16.msra.mxu0 0
      %4469 = vmatprep.subr.bf16.mxu0 0
      %4470 = vmatpush1.bf16.msra.mxu0 0
      %4471 = vmatprep.subr.bf16.mxu0 0
      %4472 = vmatpush1.bf16.msra.mxu0 0
      %4473 = vmatprep.subr.bf16.mxu0 0
      %4474 = vmatpush1.bf16.msra.mxu0 0
      %4475 = vmatprep.subr.bf16.mxu0 0
      %4476 = vmatpush1.bf16.msra.mxu0 0
      %4477 = vmatprep.subr.bf16.mxu0 0
      %4478 = vmatpush1.bf16.msra.mxu0 0
      %4479 = vmatprep.subr.bf16.mxu0 0
      %4480 = vmatpush1.bf16.msra.mxu0 0
      %4481 = vmatprep.subr.bf16.mxu0 0
      %4482 = vmatpush1.bf16.msra.mxu0 0
      %4483 = vmatprep.subr.bf16.mxu0 0
      %4484 = vmatpush1.bf16.msra.mxu0 0
      %4485 = vmatprep.subr.bf16.mxu0 0
      %4486 = vmatpush1.bf16.msra.mxu0 0
      %4487 = vmatprep.subr.bf16.mxu0 0
      %4488 = vmatpush1.bf16.msra.mxu0 0
      %4489 = vmatprep.subr.bf16.mxu0 0
      %4490 = vmatpush1.bf16.msra.mxu0 0
      %4491 = vmatprep.subr.bf16.mxu0 0
      %4492 = vmatpush1.bf16.msra.mxu0 0
      %4493 = vmatprep.subr.bf16.mxu0 0
      %4494 = vmatpush1.bf16.msra.mxu0 0
      %4495 = vmatprep.mubr.bf16.mxu0 0
      %4496 = vmatmul.mubr.bf16.gmra.mrb[0].mxu0 %v4322
      %v4497 = vpop.f32.mrb[0].mxu0
      %v4498 = vadd.f32 0.0, %v4497
      %v4499 = vpop.f32.mrb[0].mxu0
      %v4500 = vadd.f32 0.0, %v4499
      %v4501 = vpop.f32.mrb[0].mxu0
      %v4502 = vpop.f32.mrb[0].mxu0
      %4503 = vdwg.mxu0
      %v4504 = vadd.f32 %v3873, %v4375
      %v4505 = vadd.f32 %v3874, %v4377
      %v4506 = vadd.f32 %v3875, %v4416
      %v4507 = vadd.f32 %v3876, %v4418
      %v4508 = vadd.f32 %v3877, %v4457
      %v4509 = vadd.f32 %v3878, %v4459
      %v4510 = vadd.f32 %v3879, %v4498
      %v4511 = vadd.f32 %v3880, %v4500
      %vm4516 = vcmask 1046528
      %v4517 = vrot.slane %v669, 1
      %v4518 = vrot.slane %v670, 1
      %v4519 = vsel %vm4516, %v4517, %v4518
      %v4520 = vrot.slane %v671, 1
      %v4521 = vsel %vm4516, %v4518, %v4520
      %v4522 = vrot.slane %v672, 1
      %v4523 = vrot.slane %v673, 1
      %v4524 = vsel %vm4516, %v4522, %v4523
      %v4525 = vrot.slane %v674, 1
      %v4526 = vsel %vm4516, %v4523, %v4525
      %v4527 = vrot.slane %v675, 1
      %v4528 = vrot.slane %v676, 1
      %v4529 = vsel %vm4516, %v4527, %v4528
      %v4530 = vrot.slane %v677, 1
      %v4531 = vsel %vm4516, %v4528, %v4530
      %v4532 = vrot.slane %v678, 1
      %v4533 = vrot.slane %v679, 1
      %v4534 = vsel %vm4516, %v4532, %v4533
      %v4535 = vrot.slane %v680, 1
      %v4536 = vsel %vm4516, %v4533, %v4535
      %v4539 = vpack.i.b16 %v4524, %v4519
      %v4541 = vshrl.u32 %v4519, 16
      %v4542 = vshrl.u32 %v4524, 16
      %v4543 = vpack.i.b16 %v4542, %v4541
      %v4547 = vpack.i.b16 %v4534, %v4529
      %v4549 = vshrl.u32 %v4529, 16
      %v4550 = vshrl.u32 %v4534, 16
      %v4551 = vpack.i.b16 %v4550, %v4549
      %v4555 = vpack.i.b16 %v4526, %v4521
      %v4557 = vshrl.u32 %v4521, 16
      %v4558 = vshrl.u32 %v4526, 16
      %v4559 = vpack.i.b16 %v4558, %v4557
      %v4563 = vpack.i.b16 %v4536, %v4531
      %v4565 = vshrl.u32 %v4531, 16
      %v4566 = vshrl.u32 %v4536, 16
      %v4567 = vpack.i.b16 %v4566, %v4565
      %v4569 = vcombine.high %v4539, %v707
      %v4571 = vunpack.c.l.s4 1983009808
      %v4572 = vunpack.c.0.s8 %v4571
      %v4573 = vlaneseq
      %v4574 = vshrl.u32 %v4573, 7
      %v4575 = vsub.s32 %v4572, %v4574
      %v4576 = vrot.slane %v4539, %v4575
      %v4578 = vunpack.c.l.s4 1983009808
      %v4579 = vunpack.c.0.s8 %v4578
      %v4580 = vlaneseq
      %v4581 = vshrl.u32 %v4580, 7
      %v4582 = vsub.s32 %v4579, %v4581
      %v4583 = vrot.slane %v4569, %v4582
      %v4584 = vcombine.high %v4547, %v707
      %v4586 = vunpack.c.l.s4 1983009808
      %v4587 = vunpack.c.0.s8 %v4586
      %v4588 = vlaneseq
      %v4589 = vshrl.u32 %v4588, 7
      %v4590 = vsub.s32 %v4587, %v4589
      %v4591 = vrot.slane %v4547, %v4590
      %v4593 = vunpack.c.l.s4 1983009808
      %v4594 = vunpack.c.0.s8 %v4593
      %v4595 = vlaneseq
      %v4596 = vshrl.u32 %v4595, 7
      %v4597 = vsub.s32 %v4594, %v4596
      %v4598 = vrot.slane %v4584, %v4597
      %v4599 = vcombine.low %v4576, %v4591
      %v4600 = vcombine.high %v4576, %v4591
      %v4602 = vunpack.c.l.s4 1934713408
      %v4603 = vunpack.c.0.s8 %v4602
      %v4604 = vlaneseq
      %v4605 = vshrl.u32 %v4604, 7
      %v4606 = vsub.s32 %v4603, %v4605
      %v4607 = vrot.slane %v4599, %v4606
      %v4609 = vunpack.c.l.s4 1934713408
      %v4610 = vunpack.c.0.s8 %v4609
      %v4611 = vlaneseq
      %v4612 = vshrl.u32 %v4611, 7
      %v4613 = vsub.s32 %v4610, %v4612
      %v4614 = vrot.slane %v4600, %v4613
      %v4615 = vcombine.low %v4583, %v4598
      %v4616 = vcombine.high %v4583, %v4598
      %v4618 = vunpack.c.l.s4 1934713408
      %v4619 = vunpack.c.0.s8 %v4618
      %v4620 = vlaneseq
      %v4621 = vshrl.u32 %v4620, 7
      %v4622 = vsub.s32 %v4619, %v4621
      %v4623 = vrot.slane %v4615, %v4622
      %v4625 = vunpack.c.l.s4 1934713408
      %v4626 = vunpack.c.0.s8 %v4625
      %v4627 = vlaneseq
      %v4628 = vshrl.u32 %v4627, 7
      %v4629 = vsub.s32 %v4626, %v4628
      %v4630 = vrot.slane %v4616, %v4629
      %v4631 = vcombine.high %v4607, 0
      %v4632 = vcombine.high %v4614, 0
      %v4633 = vcombine.high %v4623, 0
      %v4634 = vcombine.high %v4630, 0
      %v4635 = vcombine.high %v4543, %v710
      %v4637 = vunpack.c.l.s4 1983009808
      %v4638 = vunpack.c.0.s8 %v4637
      %v4639 = vlaneseq
      %v4640 = vshrl.u32 %v4639, 7
      %v4641 = vsub.s32 %v4638, %v4640
      %v4642 = vrot.slane %v4543, %v4641
      %v4644 = vunpack.c.l.s4 1983009808
      %v4645 = vunpack.c.0.s8 %v4644
      %v4646 = vlaneseq
      %v4647 = vshrl.u32 %v4646, 7
      %v4648 = vsub.s32 %v4645, %v4647
      %v4649 = vrot.slane %v4635, %v4648
      %v4650 = vcombine.high %v4551, %v710
      %v4652 = vunpack.c.l.s4 1983009808
      %v4653 = vunpack.c.0.s8 %v4652
      %v4654 = vlaneseq
      %v4655 = vshrl.u32 %v4654, 7
      %v4656 = vsub.s32 %v4653, %v4655
      %v4657 = vrot.slane %v4551, %v4656
      %v4659 = vunpack.c.l.s4 1983009808
      %v4660 = vunpack.c.0.s8 %v4659
      %v4661 = vlaneseq
      %v4662 = vshrl.u32 %v4661, 7
      %v4663 = vsub.s32 %v4660, %v4662
      %v4664 = vrot.slane %v4650, %v4663
      %v4665 = vcombine.low %v4642, %v4657
      %v4666 = vcombine.high %v4642, %v4657
      %v4668 = vunpack.c.l.s4 1934713408
      %v4669 = vunpack.c.0.s8 %v4668
      %v4670 = vlaneseq
      %v4671 = vshrl.u32 %v4670, 7
      %v4672 = vsub.s32 %v4669, %v4671
      %v4673 = vrot.slane %v4665, %v4672
      %v4675 = vunpack.c.l.s4 1934713408
      %v4676 = vunpack.c.0.s8 %v4675
      %v4677 = vlaneseq
      %v4678 = vshrl.u32 %v4677, 7
      %v4679 = vsub.s32 %v4676, %v4678
      %v4680 = vrot.slane %v4666, %v4679
      %v4681 = vcombine.low %v4649, %v4664
      %v4682 = vcombine.high %v4649, %v4664
      %v4684 = vunpack.c.l.s4 1934713408
      %v4685 = vunpack.c.0.s8 %v4684
      %v4686 = vlaneseq
      %v4687 = vshrl.u32 %v4686, 7
      %v4688 = vsub.s32 %v4685, %v4687
      %v4689 = vrot.slane %v4681, %v4688
      %v4691 = vunpack.c.l.s4 1934713408
      %v4692 = vunpack.c.0.s8 %v4691
      %v4693 = vlaneseq
      %v4694 = vshrl.u32 %v4693, 7
      %v4695 = vsub.s32 %v4692, %v4694
      %v4696 = vrot.slane %v4682, %v4695
      %v4697 = vcombine.high %v4673, 0
      %v4698 = vcombine.high %v4680, 0
      %v4699 = vcombine.high %v4689, 0
      %v4700 = vcombine.high %v4696, 0
      %v4701 = vcombine.high %v4555, %v707
      %v4703 = vunpack.c.l.s4 1983009808
      %v4704 = vunpack.c.0.s8 %v4703
      %v4705 = vlaneseq
      %v4706 = vshrl.u32 %v4705, 7
      %v4707 = vsub.s32 %v4704, %v4706
      %v4708 = vrot.slane %v4555, %v4707
      %v4710 = vunpack.c.l.s4 1983009808
      %v4711 = vunpack.c.0.s8 %v4710
      %v4712 = vlaneseq
      %v4713 = vshrl.u32 %v4712, 7
      %v4714 = vsub.s32 %v4711, %v4713
      %v4715 = vrot.slane %v4701, %v4714
      %v4716 = vcombine.high %v4563, %v707
      %v4718 = vunpack.c.l.s4 1983009808
      %v4719 = vunpack.c.0.s8 %v4718
      %v4720 = vlaneseq
      %v4721 = vshrl.u32 %v4720, 7
      %v4722 = vsub.s32 %v4719, %v4721
      %v4723 = vrot.slane %v4563, %v4722
      %v4725 = vunpack.c.l.s4 1983009808
      %v4726 = vunpack.c.0.s8 %v4725
      %v4727 = vlaneseq
      %v4728 = vshrl.u32 %v4727, 7
      %v4729 = vsub.s32 %v4726, %v4728
      %v4730 = vrot.slane %v4716, %v4729
      %v4731 = vcombine.low %v4708, %v4723
      %v4732 = vcombine.high %v4708, %v4723
      %v4734 = vunpack.c.l.s4 1934713408
      %v4735 = vunpack.c.0.s8 %v4734
      %v4736 = vlaneseq
      %v4737 = vshrl.u32 %v4736, 7
      %v4738 = vsub.s32 %v4735, %v4737
      %v4739 = vrot.slane %v4731, %v4738
      %v4741 = vunpack.c.l.s4 1934713408
      %v4742 = vunpack.c.0.s8 %v4741
      %v4743 = vlaneseq
      %v4744 = vshrl.u32 %v4743, 7
      %v4745 = vsub.s32 %v4742, %v4744
      %v4746 = vrot.slane %v4732, %v4745
      %v4747 = vcombine.low %v4715, %v4730
      %v4748 = vcombine.high %v4715, %v4730
      %v4750 = vunpack.c.l.s4 1934713408
      %v4751 = vunpack.c.0.s8 %v4750
      %v4752 = vlaneseq
      %v4753 = vshrl.u32 %v4752, 7
      %v4754 = vsub.s32 %v4751, %v4753
      %v4755 = vrot.slane %v4747, %v4754
      %v4757 = vunpack.c.l.s4 1934713408
      %v4758 = vunpack.c.0.s8 %v4757
      %v4759 = vlaneseq
      %v4760 = vshrl.u32 %v4759, 7
      %v4761 = vsub.s32 %v4758, %v4760
      %v4762 = vrot.slane %v4748, %v4761
      %v4763 = vcombine.high %v4739, 0
      %v4764 = vcombine.high %v4746, 0
      %v4765 = vcombine.high %v4755, 0
      %v4766 = vcombine.high %v4762, 0
      %v4767 = vcombine.high %v4559, %v710
      %v4769 = vunpack.c.l.s4 1983009808
      %v4770 = vunpack.c.0.s8 %v4769
      %v4771 = vlaneseq
      %v4772 = vshrl.u32 %v4771, 7
      %v4773 = vsub.s32 %v4770, %v4772
      %v4774 = vrot.slane %v4559, %v4773
      %v4776 = vunpack.c.l.s4 1983009808
      %v4777 = vunpack.c.0.s8 %v4776
      %v4778 = vlaneseq
      %v4779 = vshrl.u32 %v4778, 7
      %v4780 = vsub.s32 %v4777, %v4779
      %v4781 = vrot.slane %v4767, %v4780
      %v4782 = vcombine.high %v4567, %v710
      %v4784 = vunpack.c.l.s4 1983009808
      %v4785 = vunpack.c.0.s8 %v4784
      %v4786 = vlaneseq
      %v4787 = vshrl.u32 %v4786, 7
      %v4788 = vsub.s32 %v4785, %v4787
      %v4789 = vrot.slane %v4567, %v4788
      %v4791 = vunpack.c.l.s4 1983009808
      %v4792 = vunpack.c.0.s8 %v4791
      %v4793 = vlaneseq
      %v4794 = vshrl.u32 %v4793, 7
      %v4795 = vsub.s32 %v4792, %v4794
      %v4796 = vrot.slane %v4782, %v4795
      %v4797 = vcombine.low %v4774, %v4789
      %v4798 = vcombine.high %v4774, %v4789
      %v4800 = vunpack.c.l.s4 1934713408
      %v4801 = vunpack.c.0.s8 %v4800
      %v4802 = vlaneseq
      %v4803 = vshrl.u32 %v4802, 7
      %v4804 = vsub.s32 %v4801, %v4803
      %v4805 = vrot.slane %v4797, %v4804
      %v4807 = vunpack.c.l.s4 1934713408
      %v4808 = vunpack.c.0.s8 %v4807
      %v4809 = vlaneseq
      %v4810 = vshrl.u32 %v4809, 7
      %v4811 = vsub.s32 %v4808, %v4810
      %v4812 = vrot.slane %v4798, %v4811
      %v4813 = vcombine.low %v4781, %v4796
      %v4814 = vcombine.high %v4781, %v4796
      %v4816 = vunpack.c.l.s4 1934713408
      %v4817 = vunpack.c.0.s8 %v4816
      %v4818 = vlaneseq
      %v4819 = vshrl.u32 %v4818, 7
      %v4820 = vsub.s32 %v4817, %v4819
      %v4821 = vrot.slane %v4813, %v4820
      %v4823 = vunpack.c.l.s4 1934713408
      %v4824 = vunpack.c.0.s8 %v4823
      %v4825 = vlaneseq
      %v4826 = vshrl.u32 %v4825, 7
      %v4827 = vsub.s32 %v4824, %v4826
      %v4828 = vrot.slane %v4814, %v4827
      %v4829 = vcombine.high %v4805, 0
      %v4830 = vcombine.high %v4812, 0
      %v4831 = vcombine.high %v4821, 0
      %v4832 = vcombine.high %v4828, 0
      %4834 = vrot.lane.b32.xlu0 %v4673, 32
      %v4835 = vpop.permute.xlu0 %4834
      %4837 = vrot.lane.b32.xlu0 %v4631, 64
      %v4838 = vpop.permute.xlu0 %4837
      %4840 = vrot.lane.b32.xlu0 %v4697, 96
      %v4841 = vpop.permute.xlu0 %4840
      %4843 = vrot.lane.b32.xlu0 %v4680, 32
      %v4844 = vpop.permute.xlu0 %4843
      %4846 = vrot.lane.b32.xlu0 %v4632, 64
      %v4847 = vpop.permute.xlu0 %4846
      %4849 = vrot.lane.b32.xlu0 %v4698, 96
      %v4850 = vpop.permute.xlu0 %4849
      %4852 = vrot.lane.b32.xlu0 %v4689, 32
      %v4853 = vpop.permute.xlu0 %4852
      %4855 = vrot.lane.b32.xlu0 %v4633, 64
      %v4856 = vpop.permute.xlu0 %4855
      %4858 = vrot.lane.b32.xlu0 %v4699, 96
      %v4859 = vpop.permute.xlu0 %4858
      %4861 = vrot.lane.b32.xlu0 %v4696, 32
      %v4862 = vpop.permute.xlu0 %4861
      %4864 = vrot.lane.b32.xlu0 %v4634, 64
      %v4865 = vpop.permute.xlu0 %4864
      %4867 = vrot.lane.b32.xlu0 %v4700, 96
      %v4868 = vpop.permute.xlu0 %4867
      %4870 = vrot.lane.b32.xlu0 %v4805, 32
      %v4871 = vpop.permute.xlu0 %4870
      %4873 = vrot.lane.b32.xlu0 %v4763, 64
      %v4874 = vpop.permute.xlu0 %4873
      %4876 = vrot.lane.b32.xlu0 %v4829, 96
      %v4877 = vpop.permute.xlu0 %4876
      %4879 = vrot.lane.b32.xlu0 %v4812, 32
      %v4880 = vpop.permute.xlu0 %4879
      %4882 = vrot.lane.b32.xlu0 %v4764, 64
      %v4883 = vpop.permute.xlu0 %4882
      %4885 = vrot.lane.b32.xlu0 %v4830, 96
      %v4886 = vpop.permute.xlu0 %4885
      %4888 = vrot.lane.b32.xlu0 %v4821, 32
      %v4889 = vpop.permute.xlu0 %4888
      %4891 = vrot.lane.b32.xlu0 %v4765, 64
      %v4892 = vpop.permute.xlu0 %4891
      %4894 = vrot.lane.b32.xlu0 %v4831, 96
      %v4895 = vpop.permute.xlu0 %4894
      %4897 = vrot.lane.b32.xlu0 %v4828, 32
      %v4898 = vpop.permute.xlu0 %4897
      %4900 = vrot.lane.b32.xlu0 %v4766, 64
      %v4901 = vpop.permute.xlu0 %4900
      %4903 = vrot.lane.b32.xlu0 %v4832, 96
      %v4904 = vpop.permute.xlu0 %4903
      %v4907 = vsel %vm1064, %v4607, %v4835
      %v4909 = vsel %vm1068, %v4907, %v4838
      %v4911 = vsel %vm1071, %v4909, %v4841
      %v4914 = vsel %vm1064, %v4614, %v4844
      %v4916 = vsel %vm1068, %v4914, %v4847
      %v4918 = vsel %vm1071, %v4916, %v4850
      %v4921 = vsel %vm1064, %v4623, %v4853
      %v4923 = vsel %vm1068, %v4921, %v4856
      %v4925 = vsel %vm1071, %v4923, %v4859
      %v4928 = vsel %vm1064, %v4630, %v4862
      %v4930 = vsel %vm1068, %v4928, %v4865
      %v4932 = vsel %vm1071, %v4930, %v4868
      %v4935 = vsel %vm1064, %v4739, %v4871
      %v4937 = vsel %vm1068, %v4935, %v4874
      %v4939 = vsel %vm1071, %v4937, %v4877
      %v4942 = vsel %vm1064, %v4746, %v4880
      %v4944 = vsel %vm1068, %v4942, %v4883
      %v4946 = vsel %vm1071, %v4944, %v4886
      %v4949 = vsel %vm1064, %v4755, %v4889
      %v4951 = vsel %vm1068, %v4949, %v4892
      %v4953 = vsel %vm1071, %v4951, %v4895
      %v4956 = vsel %vm1064, %v4762, %v4898
      %v4958 = vsel %vm1068, %v4956, %v4901
      %v4960 = vsel %vm1071, %v4958, %v4904
      %v4962 = vsel %vm1571, %v687, 0
      %v4964 = vsel %vm1575, %v4911, 0
      %v4966 = vsel %vm1575, %v4918, 0
      %v4968 = vsel %vm1575, %v4925, 0
      %v4970 = vsel %vm1575, %v4932, 0
      %v4972 = vsel %vm1575, %v4939, 0
      %v4974 = vsel %vm1575, %v4946, 0
      %v4976 = vsel %vm1575, %v4953, 0
      %v4978 = vsel %vm1575, %v4960, 0
      %4980 = vmatprep.subr.bf16.mxu0 %v4966
      %4981 = vmatpush1.bf16.msra.mxu0 %v4964
      %4982 = vmatprep.subr.bf16.mxu0 0
      %4983 = vmatpush1.bf16.msra.mxu0 0
      %4984 = vmatprep.subr.bf16.mxu0 0
      %4985 = vmatpush1.bf16.msra.mxu0 0
      %4986 = vmatprep.subr.bf16.mxu0 0
      %4987 = vmatpush1.bf16.msra.mxu0 0
      %4988 = vmatprep.subr.bf16.mxu0 0
      %4989 = vmatpush1.bf16.msra.mxu0 0
      %4990 = vmatprep.subr.bf16.mxu0 0
      %4991 = vmatpush1.bf16.msra.mxu0 0
      %4992 = vmatprep.subr.bf16.mxu0 0
      %4993 = vmatpush1.bf16.msra.mxu0 0
      %4994 = vmatprep.subr.bf16.mxu0 0
      %4995 = vmatpush1.bf16.msra.mxu0 0
      %4996 = vmatprep.subr.bf16.mxu0 0
      %4997 = vmatpush1.bf16.msra.mxu0 0
      %4998 = vmatprep.subr.bf16.mxu0 0
      %4999 = vmatpush1.bf16.msra.mxu0 0
      %5000 = vmatprep.subr.bf16.mxu0 0
      %5001 = vmatpush1.bf16.msra.mxu0 0
      %5002 = vmatprep.subr.bf16.mxu0 0
      %5003 = vmatpush1.bf16.msra.mxu0 0
      %5004 = vmatprep.subr.bf16.mxu0 0
      %5005 = vmatpush1.bf16.msra.mxu0 0
      %5006 = vmatprep.subr.bf16.mxu0 0
      %5007 = vmatpush1.bf16.msra.mxu0 0
      %5008 = vmatprep.subr.bf16.mxu0 0
      %5009 = vmatpush1.bf16.msra.mxu0 0
      %5010 = vmatprep.subr.bf16.mxu0 0
      %5011 = vmatpush1.bf16.msra.mxu0 0
      %5012 = vmatprep.mubr.bf16.mxu0 0
      %5013 = vmatmul.mubr.bf16.gmra.mrb[0].mxu0 %v4962
      %v5014 = vpop.f32.mrb[0].mxu0
      %v5015 = vadd.f32 0.0, %v5014
      %v5016 = vpop.f32.mrb[0].mxu0
      %v5017 = vadd.f32 0.0, %v5016
      %v5018 = vpop.f32.mrb[0].mxu0
      %v5019 = vpop.f32.mrb[0].mxu0
      %5020 = vdwg.mxu0
      %5021 = vmatprep.subr.bf16.mxu0 %v4970
      %5022 = vmatpush1.bf16.msra.mxu0 %v4968
      %5023 = vmatprep.subr.bf16.mxu0 0
      %5024 = vmatpush1.bf16.msra.mxu0 0
      %5025 = vmatprep.subr.bf16.mxu0 0
      %5026 = vmatpush1.bf16.msra.mxu0 0
      %5027 = vmatprep.subr.bf16.mxu0 0
      %5028 = vmatpush1.bf16.msra.mxu0 0
      %5029 = vmatprep.subr.bf16.mxu0 0
      %5030 = vmatpush1.bf16.msra.mxu0 0
      %5031 = vmatprep.subr.bf16.mxu0 0
      %5032 = vmatpush1.bf16.msra.mxu0 0
      %5033 = vmatprep.subr.bf16.mxu0 0
      %5034 = vmatpush1.bf16.msra.mxu0 0
      %5035 = vmatprep.subr.bf16.mxu0 0
      %5036 = vmatpush1.bf16.msra.mxu0 0
      %5037 = vmatprep.subr.bf16.mxu0 0
      %5038 = vmatpush1.bf16.msra.mxu0 0
      %5039 = vmatprep.subr.bf16.mxu0 0
      %5040 = vmatpush1.bf16.msra.mxu0 0
      %5041 = vmatprep.subr.bf16.mxu0 0
      %5042 = vmatpush1.bf16.msra.mxu0 0
      %5043 = vmatprep.subr.bf16.mxu0 0
      %5044 = vmatpush1.bf16.msra.mxu0 0
      %5045 = vmatprep.subr.bf16.mxu0 0
      %5046 = vmatpush1.bf16.msra.mxu0 0
      %5047 = vmatprep.subr.bf16.mxu0 0
      %5048 = vmatpush1.bf16.msra.mxu0 0
      %5049 = vmatprep.subr.bf16.mxu0 0
      %5050 = vmatpush1.bf16.msra.mxu0 0
      %5051 = vmatprep.subr.bf16.mxu0 0
      %5052 = vmatpush1.bf16.msra.mxu0 0
      %5053 = vmatprep.mubr.bf16.mxu0 0
      %5054 = vmatmul.mubr.bf16.gmra.mrb[0].mxu0 %v4962
      %v5055 = vpop.f32.mrb[0].mxu0
      %v5056 = vadd.f32 0.0, %v5055
      %v5057 = vpop.f32.mrb[0].mxu0
      %v5058 = vadd.f32 0.0, %v5057
      %v5059 = vpop.f32.mrb[0].mxu0
      %v5060 = vpop.f32.mrb[0].mxu0
      %5061 = vdwg.mxu0
      %5062 = vmatprep.subr.bf16.mxu0 %v4974
      %5063 = vmatpush1.bf16.msra.mxu0 %v4972
      %5064 = vmatprep.subr.bf16.mxu0 0
      %5065 = vmatpush1.bf16.msra.mxu0 0
      %5066 = vmatprep.subr.bf16.mxu0 0
      %5067 = vmatpush1.bf16.msra.mxu0 0
      %5068 = vmatprep.subr.bf16.mxu0 0
      %5069 = vmatpush1.bf16.msra.mxu0 0
      %5070 = vmatprep.subr.bf16.mxu0 0
      %5071 = vmatpush1.bf16.msra.mxu0 0
      %5072 = vmatprep.subr.bf16.mxu0 0
      %5073 = vmatpush1.bf16.msra.mxu0 0
      %5074 = vmatprep.subr.bf16.mxu0 0
      %5075 = vmatpush1.bf16.msra.mxu0 0
      %5076 = vmatprep.subr.bf16.mxu0 0
      %5077 = vmatpush1.bf16.msra.mxu0 0
      %5078 = vmatprep.subr.bf16.mxu0 0
      %5079 = vmatpush1.bf16.msra.mxu0 0
      %5080 = vmatprep.subr.bf16.mxu0 0
      %5081 = vmatpush1.bf16.msra.mxu0 0
      %5082 = vmatprep.subr.bf16.mxu0 0
      %5083 = vmatpush1.bf16.msra.mxu0 0
      %5084 = vmatprep.subr.bf16.mxu0 0
      %5085 = vmatpush1.bf16.msra.mxu0 0
      %5086 = vmatprep.subr.bf16.mxu0 0
      %5087 = vmatpush1.bf16.msra.mxu0 0
      %5088 = vmatprep.subr.bf16.mxu0 0
      %5089 = vmatpush1.bf16.msra.mxu0 0
      %5090 = vmatprep.subr.bf16.mxu0 0
      %5091 = vmatpush1.bf16.msra.mxu0 0
      %5092 = vmatprep.subr.bf16.mxu0 0
      %5093 = vmatpush1.bf16.msra.mxu0 0
      %5094 = vmatprep.mubr.bf16.mxu0 0
      %5095 = vmatmul.mubr.bf16.gmra.mrb[0].mxu0 %v4962
      %v5096 = vpop.f32.mrb[0].mxu0
      %v5097 = vadd.f32 0.0, %v5096
      %v5098 = vpop.f32.mrb[0].mxu0
      %v5099 = vadd.f32 0.0, %v5098
      %v5100 = vpop.f32.mrb[0].mxu0
      %v5101 = vpop.f32.mrb[0].mxu0
      %5102 = vdwg.mxu0
      %5103 = vmatprep.subr.bf16.mxu0 %v4978
      %5104 = vmatpush1.bf16.msra.mxu0 %v4976
      %5105 = vmatprep.subr.bf16.mxu0 0
      %5106 = vmatpush1.bf16.msra.mxu0 0
      %5107 = vmatprep.subr.bf16.mxu0 0
      %5108 = vmatpush1.bf16.msra.mxu0 0
      %5109 = vmatprep.subr.bf16.mxu0 0
      %5110 = vmatpush1.bf16.msra.mxu0 0
      %5111 = vmatprep.subr.bf16.mxu0 0
      %5112 = vmatpush1.bf16.msra.mxu0 0
      %5113 = vmatprep.subr.bf16.mxu0 0
      %5114 = vmatpush1.bf16.msra.mxu0 0
      %5115 = vmatprep.subr.bf16.mxu0 0
      %5116 = vmatpush1.bf16.msra.mxu0 0
      %5117 = vmatprep.subr.bf16.mxu0 0
      %5118 = vmatpush1.bf16.msra.mxu0 0
      %5119 = vmatprep.subr.bf16.mxu0 0
      %5120 = vmatpush1.bf16.msra.mxu0 0
      %5121 = vmatprep.subr.bf16.mxu0 0
      %5122 = vmatpush1.bf16.msra.mxu0 0
      %5123 = vmatprep.subr.bf16.mxu0 0
      %5124 = vmatpush1.bf16.msra.mxu0 0
      %5125 = vmatprep.subr.bf16.mxu0 0
      %5126 = vmatpush1.bf16.msra.mxu0 0
      %5127 = vmatprep.subr.bf16.mxu0 0
      %5128 = vmatpush1.bf16.msra.mxu0 0
      %5129 = vmatprep.subr.bf16.mxu0 0
      %5130 = vmatpush1.bf16.msra.mxu0 0
      %5131 = vmatprep.subr.bf16.mxu0 0
      %5132 = vmatpush1.bf16.msra.mxu0 0
      %5133 = vmatprep.subr.bf16.mxu0 0
      %5134 = vmatpush1.bf16.msra.mxu0 0
      %5135 = vmatprep.mubr.bf16.mxu0 0
      %5136 = vmatmul.mubr.bf16.gmra.mrb[0].mxu0 %v4962
      %v5137 = vpop.f32.mrb[0].mxu0
      %v5138 = vadd.f32 0.0, %v5137
      %v5139 = vpop.f32.mrb[0].mxu0
      %v5140 = vadd.f32 0.0, %v5139
      %v5141 = vpop.f32.mrb[0].mxu0
      %v5142 = vpop.f32.mrb[0].mxu0
      %5143 = vdwg.mxu0
      %v5144 = vadd.f32 %v4504, %v5015
      %v5145 = vadd.f32 %v4505, %v5017
      %v5146 = vadd.f32 %v4506, %v5056
      %v5147 = vadd.f32 %v4507, %v5058
      %v5148 = vadd.f32 %v4508, %v5097
      %v5149 = vadd.f32 %v4509, %v5099
      %v5150 = vadd.f32 %v4510, %v5138
      %v5151 = vadd.f32 %v4511, %v5140
      %5152 = vrot.lane.b32.xlu0 %v4519, 127
      %v5153 = vpop.permute.xlu0 %5152
      %5154 = vrot.lane.b32.xlu0 %v4521, 127
      %v5155 = vpop.permute.xlu0 %5154
      %5156 = vrot.lane.b32.xlu0 %v4524, 127
      %v5157 = vpop.permute.xlu0 %5156
      %5158 = vrot.lane.b32.xlu0 %v4526, 127
      %v5159 = vpop.permute.xlu0 %5158
      %5160 = vrot.lane.b32.xlu0 %v4529, 127
      %v5161 = vpop.permute.xlu0 %5160
      %5162 = vrot.lane.b32.xlu0 %v4531, 127
      %v5163 = vpop.permute.xlu0 %5162
      %5164 = vrot.lane.b32.xlu0 %v4534, 127
      %v5165 = vpop.permute.xlu0 %5164
      %5166 = vrot.lane.b32.xlu0 %v4536, 127
      %v5167 = vpop.permute.xlu0 %5166
      %v5170 = vpack.i.b16 %v5157, %v5153
      %v5172 = vshrl.u32 %v5153, 16
      %v5173 = vshrl.u32 %v5157, 16
      %v5174 = vpack.i.b16 %v5173, %v5172
      %v5178 = vpack.i.b16 %v5165, %v5161
      %v5180 = vshrl.u32 %v5161, 16
      %v5181 = vshrl.u32 %v5165, 16
      %v5182 = vpack.i.b16 %v5181, %v5180
      %v5186 = vpack.i.b16 %v5159, %v5155
      %v5188 = vshrl.u32 %v5155, 16
      %v5189 = vshrl.u32 %v5159, 16
      %v5190 = vpack.i.b16 %v5189, %v5188
      %v5194 = vpack.i.b16 %v5167, %v5163
      %v5196 = vshrl.u32 %v5163, 16
      %v5197 = vshrl.u32 %v5167, 16
      %v5198 = vpack.i.b16 %v5197, %v5196
      %v5200 = vcombine.high %v5170, %v707
      %v5202 = vunpack.c.l.s4 1983009808
      %v5203 = vunpack.c.0.s8 %v5202
      %v5204 = vlaneseq
      %v5205 = vshrl.u32 %v5204, 7
      %v5206 = vsub.s32 %v5203, %v5205
      %v5207 = vrot.slane %v5170, %v5206
      %v5209 = vunpack.c.l.s4 1983009808
      %v5210 = vunpack.c.0.s8 %v5209
      %v5211 = vlaneseq
      %v5212 = vshrl.u32 %v5211, 7
      %v5213 = vsub.s32 %v5210, %v5212
      %v5214 = vrot.slane %v5200, %v5213
      %v5215 = vcombine.high %v5178, %v707
      %v5217 = vunpack.c.l.s4 1983009808
      %v5218 = vunpack.c.0.s8 %v5217
      %v5219 = vlaneseq
      %v5220 = vshrl.u32 %v5219, 7
      %v5221 = vsub.s32 %v5218, %v5220
      %v5222 = vrot.slane %v5178, %v5221
      %v5224 = vunpack.c.l.s4 1983009808
      %v5225 = vunpack.c.0.s8 %v5224
      %v5226 = vlaneseq
      %v5227 = vshrl.u32 %v5226, 7
      %v5228 = vsub.s32 %v5225, %v5227
      %v5229 = vrot.slane %v5215, %v5228
      %v5230 = vcombine.low %v5207, %v5222
      %v5231 = vcombine.high %v5207, %v5222
      %v5233 = vunpack.c.l.s4 1934713408
      %v5234 = vunpack.c.0.s8 %v5233
      %v5235 = vlaneseq
      %v5236 = vshrl.u32 %v5235, 7
      %v5237 = vsub.s32 %v5234, %v5236
      %v5238 = vrot.slane %v5230, %v5237
      %v5240 = vunpack.c.l.s4 1934713408
      %v5241 = vunpack.c.0.s8 %v5240
      %v5242 = vlaneseq
      %v5243 = vshrl.u32 %v5242, 7
      %v5244 = vsub.s32 %v5241, %v5243
      %v5245 = vrot.slane %v5231, %v5244
      %v5246 = vcombine.low %v5214, %v5229
      %v5247 = vcombine.high %v5214, %v5229
      %v5249 = vunpack.c.l.s4 1934713408
      %v5250 = vunpack.c.0.s8 %v5249
      %v5251 = vlaneseq
      %v5252 = vshrl.u32 %v5251, 7
      %v5253 = vsub.s32 %v5250, %v5252
      %v5254 = vrot.slane %v5246, %v5253
      %v5256 = vunpack.c.l.s4 1934713408
      %v5257 = vunpack.c.0.s8 %v5256
      %v5258 = vlaneseq
      %v5259 = vshrl.u32 %v5258, 7
      %v5260 = vsub.s32 %v5257, %v5259
      %v5261 = vrot.slane %v5247, %v5260
      %v5262 = vcombine.high %v5238, 0
      %v5263 = vcombine.high %v5245, 0
      %v5264 = vcombine.high %v5254, 0
      %v5265 = vcombine.high %v5261, 0
      %v5266 = vcombine.high %v5174, %v710
      %v5268 = vunpack.c.l.s4 1983009808
      %v5269 = vunpack.c.0.s8 %v5268
      %v5270 = vlaneseq
      %v5271 = vshrl.u32 %v5270, 7
      %v5272 = vsub.s32 %v5269, %v5271
      %v5273 = vrot.slane %v5174, %v5272
      %v5275 = vunpack.c.l.s4 1983009808
      %v5276 = vunpack.c.0.s8 %v5275
      %v5277 = vlaneseq
      %v5278 = vshrl.u32 %v5277, 7
      %v5279 = vsub.s32 %v5276, %v5278
      %v5280 = vrot.slane %v5266, %v5279
      %v5281 = vcombine.high %v5182, %v710
      %v5283 = vunpack.c.l.s4 1983009808
      %v5284 = vunpack.c.0.s8 %v5283
      %v5285 = vlaneseq
      %v5286 = vshrl.u32 %v5285, 7
      %v5287 = vsub.s32 %v5284, %v5286
      %v5288 = vrot.slane %v5182, %v5287
      %v5290 = vunpack.c.l.s4 1983009808
      %v5291 = vunpack.c.0.s8 %v5290
      %v5292 = vlaneseq
      %v5293 = vshrl.u32 %v5292, 7
      %v5294 = vsub.s32 %v5291, %v5293
      %v5295 = vrot.slane %v5281, %v5294
      %v5296 = vcombine.low %v5273, %v5288
      %v5297 = vcombine.high %v5273, %v5288
      %v5299 = vunpack.c.l.s4 1934713408
      %v5300 = vunpack.c.0.s8 %v5299
      %v5301 = vlaneseq
      %v5302 = vshrl.u32 %v5301, 7
      %v5303 = vsub.s32 %v5300, %v5302
      %v5304 = vrot.slane %v5296, %v5303
      %v5306 = vunpack.c.l.s4 1934713408
      %v5307 = vunpack.c.0.s8 %v5306
      %v5308 = vlaneseq
      %v5309 = vshrl.u32 %v5308, 7
      %v5310 = vsub.s32 %v5307, %v5309
      %v5311 = vrot.slane %v5297, %v5310
      %v5312 = vcombine.low %v5280, %v5295
      %v5313 = vcombine.high %v5280, %v5295
      %v5315 = vunpack.c.l.s4 1934713408
      %v5316 = vunpack.c.0.s8 %v5315
      %v5317 = vlaneseq
      %v5318 = vshrl.u32 %v5317, 7
      %v5319 = vsub.s32 %v5316, %v5318
      %v5320 = vrot.slane %v5312, %v5319
      %v5322 = vunpack.c.l.s4 1934713408
      %v5323 = vunpack.c.0.s8 %v5322
      %v5324 = vlaneseq
      %v5325 = vshrl.u32 %v5324, 7
      %v5326 = vsub.s32 %v5323, %v5325
      %v5327 = vrot.slane %v5313, %v5326
      %v5328 = vcombine.high %v5304, 0
      %v5329 = vcombine.high %v5311, 0
      %v5330 = vcombine.high %v5320, 0
      %v5331 = vcombine.high %v5327, 0
      %v5332 = vcombine.high %v5186, %v707
      %v5334 = vunpack.c.l.s4 1983009808
      %v5335 = vunpack.c.0.s8 %v5334
      %v5336 = vlaneseq
      %v5337 = vshrl.u32 %v5336, 7
      %v5338 = vsub.s32 %v5335, %v5337
      %v5339 = vrot.slane %v5186, %v5338
      %v5341 = vunpack.c.l.s4 1983009808
      %v5342 = vunpack.c.0.s8 %v5341
      %v5343 = vlaneseq
      %v5344 = vshrl.u32 %v5343, 7
      %v5345 = vsub.s32 %v5342, %v5344
      %v5346 = vrot.slane %v5332, %v5345
      %v5347 = vcombine.high %v5194, %v707
      %v5349 = vunpack.c.l.s4 1983009808
      %v5350 = vunpack.c.0.s8 %v5349
      %v5351 = vlaneseq
      %v5352 = vshrl.u32 %v5351, 7
      %v5353 = vsub.s32 %v5350, %v5352
      %v5354 = vrot.slane %v5194, %v5353
      %v5356 = vunpack.c.l.s4 1983009808
      %v5357 = vunpack.c.0.s8 %v5356
      %v5358 = vlaneseq
      %v5359 = vshrl.u32 %v5358, 7
      %v5360 = vsub.s32 %v5357, %v5359
      %v5361 = vrot.slane %v5347, %v5360
      %v5362 = vcombine.low %v5339, %v5354
      %v5363 = vcombine.high %v5339, %v5354
      %v5365 = vunpack.c.l.s4 1934713408
      %v5366 = vunpack.c.0.s8 %v5365
      %v5367 = vlaneseq
      %v5368 = vshrl.u32 %v5367, 7
      %v5369 = vsub.s32 %v5366, %v5368
      %v5370 = vrot.slane %v5362, %v5369
      %v5372 = vunpack.c.l.s4 1934713408
      %v5373 = vunpack.c.0.s8 %v5372
      %v5374 = vlaneseq
      %v5375 = vshrl.u32 %v5374, 7
      %v5376 = vsub.s32 %v5373, %v5375
      %v5377 = vrot.slane %v5363, %v5376
      %v5378 = vcombine.low %v5346, %v5361
      %v5379 = vcombine.high %v5346, %v5361
      %v5381 = vunpack.c.l.s4 1934713408
      %v5382 = vunpack.c.0.s8 %v5381
      %v5383 = vlaneseq
      %v5384 = vshrl.u32 %v5383, 7
      %v5385 = vsub.s32 %v5382, %v5384
      %v5386 = vrot.slane %v5378, %v5385
      %v5388 = vunpack.c.l.s4 1934713408
      %v5389 = vunpack.c.0.s8 %v5388
      %v5390 = vlaneseq
      %v5391 = vshrl.u32 %v5390, 7
      %v5392 = vsub.s32 %v5389, %v5391
      %v5393 = vrot.slane %v5379, %v5392
      %v5394 = vcombine.high %v5370, 0
      %v5395 = vcombine.high %v5377, 0
      %v5396 = vcombine.high %v5386, 0
      %v5397 = vcombine.high %v5393, 0
      %v5398 = vcombine.high %v5190, %v710
      %v5400 = vunpack.c.l.s4 1983009808
      %v5401 = vunpack.c.0.s8 %v5400
      %v5402 = vlaneseq
      %v5403 = vshrl.u32 %v5402, 7
      %v5404 = vsub.s32 %v5401, %v5403
      %v5405 = vrot.slane %v5190, %v5404
      %v5407 = vunpack.c.l.s4 1983009808
      %v5408 = vunpack.c.0.s8 %v5407
      %v5409 = vlaneseq
      %v5410 = vshrl.u32 %v5409, 7
      %v5411 = vsub.s32 %v5408, %v5410
      %v5412 = vrot.slane %v5398, %v5411
      %v5413 = vcombine.high %v5198, %v710
      %v5415 = vunpack.c.l.s4 1983009808
      %v5416 = vunpack.c.0.s8 %v5415
      %v5417 = vlaneseq
      %v5418 = vshrl.u32 %v5417, 7
      %v5419 = vsub.s32 %v5416, %v5418
      %v5420 = vrot.slane %v5198, %v5419
      %v5422 = vunpack.c.l.s4 1983009808
      %v5423 = vunpack.c.0.s8 %v5422
      %v5424 = vlaneseq
      %v5425 = vshrl.u32 %v5424, 7
      %v5426 = vsub.s32 %v5423, %v5425
      %v5427 = vrot.slane %v5413, %v5426
      %v5428 = vcombine.low %v5405, %v5420
      %v5429 = vcombine.high %v5405, %v5420
      %v5431 = vunpack.c.l.s4 1934713408
      %v5432 = vunpack.c.0.s8 %v5431
      %v5433 = vlaneseq
      %v5434 = vshrl.u32 %v5433, 7
      %v5435 = vsub.s32 %v5432, %v5434
      %v5436 = vrot.slane %v5428, %v5435
      %v5438 = vunpack.c.l.s4 1934713408
      %v5439 = vunpack.c.0.s8 %v5438
      %v5440 = vlaneseq
      %v5441 = vshrl.u32 %v5440, 7
      %v5442 = vsub.s32 %v5439, %v5441
      %v5443 = vrot.slane %v5429, %v5442
      %v5444 = vcombine.low %v5412, %v5427
      %v5445 = vcombine.high %v5412, %v5427
      %v5447 = vunpack.c.l.s4 1934713408
      %v5448 = vunpack.c.0.s8 %v5447
      %v5449 = vlaneseq
      %v5450 = vshrl.u32 %v5449, 7
      %v5451 = vsub.s32 %v5448, %v5450
      %v5452 = vrot.slane %v5444, %v5451
      %v5454 = vunpack.c.l.s4 1934713408
      %v5455 = vunpack.c.0.s8 %v5454
      %v5456 = vlaneseq
      %v5457 = vshrl.u32 %v5456, 7
      %v5458 = vsub.s32 %v5455, %v5457
      %v5459 = vrot.slane %v5445, %v5458
      %v5460 = vcombine.high %v5436, 0
      %v5461 = vcombine.high %v5443, 0
      %v5462 = vcombine.high %v5452, 0
      %v5463 = vcombine.high %v5459, 0
      %5465 = vrot.lane.b32.xlu0 %v5304, 32
      %v5466 = vpop.permute.xlu0 %5465
      %5468 = vrot.lane.b32.xlu0 %v5262, 64
      %v5469 = vpop.permute.xlu0 %5468
      %5471 = vrot.lane.b32.xlu0 %v5328, 96
      %v5472 = vpop.permute.xlu0 %5471
      %5474 = vrot.lane.b32.xlu0 %v5311, 32
      %v5475 = vpop.permute.xlu0 %5474
      %5477 = vrot.lane.b32.xlu0 %v5263, 64
      %v5478 = vpop.permute.xlu0 %5477
      %5480 = vrot.lane.b32.xlu0 %v5329, 96
      %v5481 = vpop.permute.xlu0 %5480
      %5483 = vrot.lane.b32.xlu0 %v5320, 32
      %v5484 = vpop.permute.xlu0 %5483
      %5486 = vrot.lane.b32.xlu0 %v5264, 64
      %v5487 = vpop.permute.xlu0 %5486
      %5489 = vrot.lane.b32.xlu0 %v5330, 96
      %v5490 = vpop.permute.xlu0 %5489
      %5492 = vrot.lane.b32.xlu0 %v5327, 32
      %v5493 = vpop.permute.xlu0 %5492
      %5495 = vrot.lane.b32.xlu0 %v5265, 64
      %v5496 = vpop.permute.xlu0 %5495
      %5498 = vrot.lane.b32.xlu0 %v5331, 96
      %v5499 = vpop.permute.xlu0 %5498
      %5501 = vrot.lane.b32.xlu0 %v5436, 32
      %v5502 = vpop.permute.xlu0 %5501
      %5504 = vrot.lane.b32.xlu0 %v5394, 64
      %v5505 = vpop.permute.xlu0 %5504
      %5507 = vrot.lane.b32.xlu0 %v5460, 96
      %v5508 = vpop.permute.xlu0 %5507
      %5510 = vrot.lane.b32.xlu0 %v5443, 32
      %v5511 = vpop.permute.xlu0 %5510
      %5513 = vrot.lane.b32.xlu0 %v5395, 64
      %v5514 = vpop.permute.xlu0 %5513
      %5516 = vrot.lane.b32.xlu0 %v5461, 96
      %v5517 = vpop.permute.xlu0 %5516
      %5519 = vrot.lane.b32.xlu0 %v5452, 32
      %v5520 = vpop.permute.xlu0 %5519
      %5522 = vrot.lane.b32.xlu0 %v5396, 64
      %v5523 = vpop.permute.xlu0 %5522
      %5525 = vrot.lane.b32.xlu0 %v5462, 96
      %v5526 = vpop.permute.xlu0 %5525
      %5528 = vrot.lane.b32.xlu0 %v5459, 32
      %v5529 = vpop.permute.xlu0 %5528
      %5531 = vrot.lane.b32.xlu0 %v5397, 64
      %v5532 = vpop.permute.xlu0 %5531
      %5534 = vrot.lane.b32.xlu0 %v5463, 96
      %v5535 = vpop.permute.xlu0 %5534
      %v5538 = vsel %vm1064, %v5238, %v5466
      %v5540 = vsel %vm1068, %v5538, %v5469
      %v5542 = vsel %vm1071, %v5540, %v5472
      %v5545 = vsel %vm1064, %v5245, %v5475
      %v5547 = vsel %vm1068, %v5545, %v5478
      %v5549 = vsel %vm1071, %v5547, %v5481
      %v5552 = vsel %vm1064, %v5254, %v5484
      %v5554 = vsel %vm1068, %v5552, %v5487
      %v5556 = vsel %vm1071, %v5554, %v5490
      %v5559 = vsel %vm1064, %v5261, %v5493
      %v5561 = vsel %vm1068, %v5559, %v5496
      %v5563 = vsel %vm1071, %v5561, %v5499
      %v5566 = vsel %vm1064, %v5370, %v5502
      %v5568 = vsel %vm1068, %v5566, %v5505
      %v5570 = vsel %vm1071, %v5568, %v5508
      %v5573 = vsel %vm1064, %v5377, %v5511
      %v5575 = vsel %vm1068, %v5573, %v5514
      %v5577 = vsel %vm1071, %v5575, %v5517
      %v5580 = vsel %vm1064, %v5386, %v5520
      %v5582 = vsel %vm1068, %v5580, %v5523
      %v5584 = vsel %vm1071, %v5582, %v5526
      %v5587 = vsel %vm1064, %v5393, %v5529
      %v5589 = vsel %vm1068, %v5587, %v5532
      %v5591 = vsel %vm1071, %v5589, %v5535
      %v5593 = vsel %vm1571, %v688, 0
      %v5595 = vsel %vm1575, %v5542, 0
      %v5597 = vsel %vm1575, %v5549, 0
      %v5599 = vsel %vm1575, %v5556, 0
      %v5601 = vsel %vm1575, %v5563, 0
      %v5603 = vsel %vm1575, %v5570, 0
      %v5605 = vsel %vm1575, %v5577, 0
      %v5607 = vsel %vm1575, %v5584, 0
      %v5609 = vsel %vm1575, %v5591, 0
      %5611 = vmatprep.subr.bf16.mxu0 %v5597
      %5612 = vmatpush1.bf16.msra.mxu0 %v5595
      %5613 = vmatprep.subr.bf16.mxu0 0
      %5614 = vmatpush1.bf16.msra.mxu0 0
      %5615 = vmatprep.subr.bf16.mxu0 0
      %5616 = vmatpush1.bf16.msra.mxu0 0
      %5617 = vmatprep.subr.bf16.mxu0 0
      %5618 = vmatpush1.bf16.msra.mxu0 0
      %5619 = vmatprep.subr.bf16.mxu0 0
      %5620 = vmatpush1.bf16.msra.mxu0 0
      %5621 = vmatprep.subr.bf16.mxu0 0
      %5622 = vmatpush1.bf16.msra.mxu0 0
      %5623 = vmatprep.subr.bf16.mxu0 0
      %5624 = vmatpush1.bf16.msra.mxu0 0
      %5625 = vmatprep.subr.bf16.mxu0 0
      %5626 = vmatpush1.bf16.msra.mxu0 0
      %5627 = vmatprep.subr.bf16.mxu0 0
      %5628 = vmatpush1.bf16.msra.mxu0 0
      %5629 = vmatprep.subr.bf16.mxu0 0
      %5630 = vmatpush1.bf16.msra.mxu0 0
      %5631 = vmatprep.subr.bf16.mxu0 0
      %5632 = vmatpush1.bf16.msra.mxu0 0
      %5633 = vmatprep.subr.bf16.mxu0 0
      %5634 = vmatpush1.bf16.msra.mxu0 0
      %5635 = vmatprep.subr.bf16.mxu0 0
      %5636 = vmatpush1.bf16.msra.mxu0 0
      %5637 = vmatprep.subr.bf16.mxu0 0
      %5638 = vmatpush1.bf16.msra.mxu0 0
      %5639 = vmatprep.subr.bf16.mxu0 0
      %5640 = vmatpush1.bf16.msra.mxu0 0
      %5641 = vmatprep.subr.bf16.mxu0 0
      %5642 = vmatpush1.bf16.msra.mxu0 0
      %5643 = vmatprep.mubr.bf16.mxu0 0
      %5644 = vmatmul.mubr.bf16.gmra.mrb[0].mxu0 %v5593
      %v5645 = vpop.f32.mrb[0].mxu0
      %v5646 = vadd.f32 0.0, %v5645
      %v5647 = vpop.f32.mrb[0].mxu0
      %v5648 = vadd.f32 0.0, %v5647
      %v5649 = vpop.f32.mrb[0].mxu0
      %v5650 = vpop.f32.mrb[0].mxu0
      %5651 = vdwg.mxu0
      %5652 = vmatprep.subr.bf16.mxu0 %v5601
      %5653 = vmatpush1.bf16.msra.mxu0 %v5599
      %5654 = vmatprep.subr.bf16.mxu0 0
      %5655 = vmatpush1.bf16.msra.mxu0 0
      %5656 = vmatprep.subr.bf16.mxu0 0
      %5657 = vmatpush1.bf16.msra.mxu0 0
      %5658 = vmatprep.subr.bf16.mxu0 0
      %5659 = vmatpush1.bf16.msra.mxu0 0
      %5660 = vmatprep.subr.bf16.mxu0 0
      %5661 = vmatpush1.bf16.msra.mxu0 0
      %5662 = vmatprep.subr.bf16.mxu0 0
      %5663 = vmatpush1.bf16.msra.mxu0 0
      %5664 = vmatprep.subr.bf16.mxu0 0
      %5665 = vmatpush1.bf16.msra.mxu0 0
      %5666 = vmatprep.subr.bf16.mxu0 0
      %5667 = vmatpush1.bf16.msra.mxu0 0
      %5668 = vmatprep.subr.bf16.mxu0 0
      %5669 = vmatpush1.bf16.msra.mxu0 0
      %5670 = vmatprep.subr.bf16.mxu0 0
      %5671 = vmatpush1.bf16.msra.mxu0 0
      %5672 = vmatprep.subr.bf16.mxu0 0
      %5673 = vmatpush1.bf16.msra.mxu0 0
      %5674 = vmatprep.subr.bf16.mxu0 0
      %5675 = vmatpush1.bf16.msra.mxu0 0
      %5676 = vmatprep.subr.bf16.mxu0 0
      %5677 = vmatpush1.bf16.msra.mxu0 0
      %5678 = vmatprep.subr.bf16.mxu0 0
      %5679 = vmatpush1.bf16.msra.mxu0 0
      %5680 = vmatprep.subr.bf16.mxu0 0
      %5681 = vmatpush1.bf16.msra.mxu0 0
      %5682 = vmatprep.subr.bf16.mxu0 0
      %5683 = vmatpush1.bf16.msra.mxu0 0
      %5684 = vmatprep.mubr.bf16.mxu0 0
      %5685 = vmatmul.mubr.bf16.gmra.mrb[0].mxu0 %v5593
      %v5686 = vpop.f32.mrb[0].mxu0
      %v5687 = vadd.f32 0.0, %v5686
      %v5688 = vpop.f32.mrb[0].mxu0
      %v5689 = vadd.f32 0.0, %v5688
      %v5690 = vpop.f32.mrb[0].mxu0
      %v5691 = vpop.f32.mrb[0].mxu0
      %5692 = vdwg.mxu0
      %5693 = vmatprep.subr.bf16.mxu0 %v5605
      %5694 = vmatpush1.bf16.msra.mxu0 %v5603
      %5695 = vmatprep.subr.bf16.mxu0 0
      %5696 = vmatpush1.bf16.msra.mxu0 0
      %5697 = vmatprep.subr.bf16.mxu0 0
      %5698 = vmatpush1.bf16.msra.mxu0 0
      %5699 = vmatprep.subr.bf16.mxu0 0
      %5700 = vmatpush1.bf16.msra.mxu0 0
      %5701 = vmatprep.subr.bf16.mxu0 0
      %5702 = vmatpush1.bf16.msra.mxu0 0
      %5703 = vmatprep.subr.bf16.mxu0 0
      %5704 = vmatpush1.bf16.msra.mxu0 0
      %5705 = vmatprep.subr.bf16.mxu0 0
      %5706 = vmatpush1.bf16.msra.mxu0 0
      %5707 = vmatprep.subr.bf16.mxu0 0
      %5708 = vmatpush1.bf16.msra.mxu0 0
      %5709 = vmatprep.subr.bf16.mxu0 0
      %5710 = vmatpush1.bf16.msra.mxu0 0
      %5711 = vmatprep.subr.bf16.mxu0 0
      %5712 = vmatpush1.bf16.msra.mxu0 0
      %5713 = vmatprep.subr.bf16.mxu0 0
      %5714 = vmatpush1.bf16.msra.mxu0 0
      %5715 = vmatprep.subr.bf16.mxu0 0
      %5716 = vmatpush1.bf16.msra.mxu0 0
      %5717 = vmatprep.subr.bf16.mxu0 0
      %5718 = vmatpush1.bf16.msra.mxu0 0
      %5719 = vmatprep.subr.bf16.mxu0 0
      %5720 = vmatpush1.bf16.msra.mxu0 0
      %5721 = vmatprep.subr.bf16.mxu0 0
      %5722 = vmatpush1.bf16.msra.mxu0 0
      %5723 = vmatprep.subr.bf16.mxu0 0
      %5724 = vmatpush1.bf16.msra.mxu0 0
      %5725 = vmatprep.mubr.bf16.mxu0 0
      %5726 = vmatmul.mubr.bf16.gmra.mrb[0].mxu0 %v5593
      %v5727 = vpop.f32.mrb[0].mxu0
      %v5728 = vadd.f32 0.0, %v5727
      %v5729 = vpop.f32.mrb[0].mxu0
      %v5730 = vadd.f32 0.0, %v5729
      %v5731 = vpop.f32.mrb[0].mxu0
      %v5732 = vpop.f32.mrb[0].mxu0
      %5733 = vdwg.mxu0
      %5734 = vmatprep.subr.bf16.mxu0 %v5609
      %5735 = vmatpush1.bf16.msra.mxu0 %v5607
      %5736 = vmatprep.subr.bf16.mxu0 0
      %5737 = vmatpush1.bf16.msra.mxu0 0
      %5738 = vmatprep.subr.bf16.mxu0 0
      %5739 = vmatpush1.bf16.msra.mxu0 0
      %5740 = vmatprep.subr.bf16.mxu0 0
      %5741 = vmatpush1.bf16.msra.mxu0 0
      %5742 = vmatprep.subr.bf16.mxu0 0
      %5743 = vmatpush1.bf16.msra.mxu0 0
      %5744 = vmatprep.subr.bf16.mxu0 0
      %5745 = vmatpush1.bf16.msra.mxu0 0
      %5746 = vmatprep.subr.bf16.mxu0 0
      %5747 = vmatpush1.bf16.msra.mxu0 0
      %5748 = vmatprep.subr.bf16.mxu0 0
      %5749 = vmatpush1.bf16.msra.mxu0 0
      %5750 = vmatprep.subr.bf16.mxu0 0
      %5751 = vmatpush1.bf16.msra.mxu0 0
      %5752 = vmatprep.subr.bf16.mxu0 0
      %5753 = vmatpush1.bf16.msra.mxu0 0
      %5754 = vmatprep.subr.bf16.mxu0 0
      %5755 = vmatpush1.bf16.msra.mxu0 0
      %5756 = vmatprep.subr.bf16.mxu0 0
      %5757 = vmatpush1.bf16.msra.mxu0 0
      %5758 = vmatprep.subr.bf16.mxu0 0
      %5759 = vmatpush1.bf16.msra.mxu0 0
      %5760 = vmatprep.subr.bf16.mxu0 0
      %5761 = vmatpush1.bf16.msra.mxu0 0
      %5762 = vmatprep.subr.bf16.mxu0 0
      %5763 = vmatpush1.bf16.msra.mxu0 0
      %5764 = vmatprep.subr.bf16.mxu0 0
      %5765 = vmatpush1.bf16.msra.mxu0 0
      %5766 = vmatprep.mubr.bf16.mxu0 0
      %5767 = vmatmul.mubr.bf16.gmra.mrb[0].mxu0 %v5593
      %v5768 = vpop.f32.mrb[0].mxu0
      %v5769 = vadd.f32 0.0, %v5768
      %v5770 = vpop.f32.mrb[0].mxu0
      %v5771 = vadd.f32 0.0, %v5770
      %v5772 = vpop.f32.mrb[0].mxu0
      %v5773 = vpop.f32.mrb[0].mxu0
      %5774 = vdwg.mxu0
      %v5775 = vadd.f32 %v5144, %v5646
      %v5776 = vadd.f32 %v5145, %v5648
      %v5777 = vadd.f32 %v5146, %v5687
      %v5778 = vadd.f32 %v5147, %v5689
      %v5779 = vadd.f32 %v5148, %v5728
      %v5780 = vadd.f32 %v5149, %v5730
      %v5781 = vadd.f32 %v5150, %v5769
      %v5782 = vadd.f32 %v5151, %v5771
      %5783 = vrot.lane.b32.xlu0 %v4519, 126
      %v5784 = vpop.permute.xlu0 %5783
      %5785 = vrot.lane.b32.xlu0 %v4521, 126
      %v5786 = vpop.permute.xlu0 %5785
      %5787 = vrot.lane.b32.xlu0 %v4524, 126
      %v5788 = vpop.permute.xlu0 %5787
      %5789 = vrot.lane.b32.xlu0 %v4526, 126
      %v5790 = vpop.permute.xlu0 %5789
      %5791 = vrot.lane.b32.xlu0 %v4529, 126
      %v5792 = vpop.permute.xlu0 %5791
      %5793 = vrot.lane.b32.xlu0 %v4531, 126
      %v5794 = vpop.permute.xlu0 %5793
      %5795 = vrot.lane.b32.xlu0 %v4534, 126
      %v5796 = vpop.permute.xlu0 %5795
      %5797 = vrot.lane.b32.xlu0 %v4536, 126
      %v5798 = vpop.permute.xlu0 %5797
      %v5801 = vpack.i.b16 %v5788, %v5784
      %v5803 = vshrl.u32 %v5784, 16
      %v5804 = vshrl.u32 %v5788, 16
      %v5805 = vpack.i.b16 %v5804, %v5803
      %v5809 = vpack.i.b16 %v5796, %v5792
      %v5811 = vshrl.u32 %v5792, 16
      %v5812 = vshrl.u32 %v5796, 16
      %v5813 = vpack.i.b16 %v5812, %v5811
      %v5817 = vpack.i.b16 %v5790, %v5786
      %v5819 = vshrl.u32 %v5786, 16
      %v5820 = vshrl.u32 %v5790, 16
      %v5821 = vpack.i.b16 %v5820, %v5819
      %v5825 = vpack.i.b16 %v5798, %v5794
      %v5827 = vshrl.u32 %v5794, 16
      %v5828 = vshrl.u32 %v5798, 16
      %v5829 = vpack.i.b16 %v5828, %v5827
      %v5831 = vcombine.high %v5801, %v707
      %v5833 = vunpack.c.l.s4 1983009808
      %v5834 = vunpack.c.0.s8 %v5833
      %v5835 = vlaneseq
      %v5836 = vshrl.u32 %v5835, 7
      %v5837 = vsub.s32 %v5834, %v5836
      %v5838 = vrot.slane %v5801, %v5837
      %v5840 = vunpack.c.l.s4 1983009808
      %v5841 = vunpack.c.0.s8 %v5840
      %v5842 = vlaneseq
      %v5843 = vshrl.u32 %v5842, 7
      %v5844 = vsub.s32 %v5841, %v5843
      %v5845 = vrot.slane %v5831, %v5844
      %v5846 = vcombine.high %v5809, %v707
      %v5848 = vunpack.c.l.s4 1983009808
      %v5849 = vunpack.c.0.s8 %v5848
      %v5850 = vlaneseq
      %v5851 = vshrl.u32 %v5850, 7
      %v5852 = vsub.s32 %v5849, %v5851
      %v5853 = vrot.slane %v5809, %v5852
      %v5855 = vunpack.c.l.s4 1983009808
      %v5856 = vunpack.c.0.s8 %v5855
      %v5857 = vlaneseq
      %v5858 = vshrl.u32 %v5857, 7
      %v5859 = vsub.s32 %v5856, %v5858
      %v5860 = vrot.slane %v5846, %v5859
      %v5861 = vcombine.low %v5838, %v5853
      %v5862 = vcombine.high %v5838, %v5853
      %v5864 = vunpack.c.l.s4 1934713408
      %v5865 = vunpack.c.0.s8 %v5864
      %v5866 = vlaneseq
      %v5867 = vshrl.u32 %v5866, 7
      %v5868 = vsub.s32 %v5865, %v5867
      %v5869 = vrot.slane %v5861, %v5868
      %v5871 = vunpack.c.l.s4 1934713408
      %v5872 = vunpack.c.0.s8 %v5871
      %v5873 = vlaneseq
      %v5874 = vshrl.u32 %v5873, 7
      %v5875 = vsub.s32 %v5872, %v5874
      %v5876 = vrot.slane %v5862, %v5875
      %v5877 = vcombine.low %v5845, %v5860
      %v5878 = vcombine.high %v5845, %v5860
      %v5880 = vunpack.c.l.s4 1934713408
      %v5881 = vunpack.c.0.s8 %v5880
      %v5882 = vlaneseq
      %v5883 = vshrl.u32 %v5882, 7
      %v5884 = vsub.s32 %v5881, %v5883
      %v5885 = vrot.slane %v5877, %v5884
      %v5887 = vunpack.c.l.s4 1934713408
      %v5888 = vunpack.c.0.s8 %v5887
      %v5889 = vlaneseq
      %v5890 = vshrl.u32 %v5889, 7
      %v5891 = vsub.s32 %v5888, %v5890
      %v5892 = vrot.slane %v5878, %v5891
      %v5893 = vcombine.high %v5869, 0
      %v5894 = vcombine.high %v5876, 0
      %v5895 = vcombine.high %v5885, 0
      %v5896 = vcombine.high %v5892, 0
      %v5897 = vcombine.high %v5805, %v710
      %v5899 = vunpack.c.l.s4 1983009808
      %v5900 = vunpack.c.0.s8 %v5899
      %v5901 = vlaneseq
      %v5902 = vshrl.u32 %v5901, 7
      %v5903 = vsub.s32 %v5900, %v5902
      %v5904 = vrot.slane %v5805, %v5903
      %v5906 = vunpack.c.l.s4 1983009808
      %v5907 = vunpack.c.0.s8 %v5906
      %v5908 = vlaneseq
      %v5909 = vshrl.u32 %v5908, 7
      %v5910 = vsub.s32 %v5907, %v5909
      %v5911 = vrot.slane %v5897, %v5910
      %v5912 = vcombine.high %v5813, %v710
      %v5914 = vunpack.c.l.s4 1983009808
      %v5915 = vunpack.c.0.s8 %v5914
      %v5916 = vlaneseq
      %v5917 = vshrl.u32 %v5916, 7
      %v5918 = vsub.s32 %v5915, %v5917
      %v5919 = vrot.slane %v5813, %v5918
      %v5921 = vunpack.c.l.s4 1983009808
      %v5922 = vunpack.c.0.s8 %v5921
      %v5923 = vlaneseq
      %v5924 = vshrl.u32 %v5923, 7
      %v5925 = vsub.s32 %v5922, %v5924
      %v5926 = vrot.slane %v5912, %v5925
      %v5927 = vcombine.low %v5904, %v5919
      %v5928 = vcombine.high %v5904, %v5919
      %v5930 = vunpack.c.l.s4 1934713408
      %v5931 = vunpack.c.0.s8 %v5930
      %v5932 = vlaneseq
      %v5933 = vshrl.u32 %v5932, 7
      %v5934 = vsub.s32 %v5931, %v5933
      %v5935 = vrot.slane %v5927, %v5934
      %v5937 = vunpack.c.l.s4 1934713408
      %v5938 = vunpack.c.0.s8 %v5937
      %v5939 = vlaneseq
      %v5940 = vshrl.u32 %v5939, 7
      %v5941 = vsub.s32 %v5938, %v5940
      %v5942 = vrot.slane %v5928, %v5941
      %v5943 = vcombine.low %v5911, %v5926
      %v5944 = vcombine.high %v5911, %v5926
      %v5946 = vunpack.c.l.s4 1934713408
      %v5947 = vunpack.c.0.s8 %v5946
      %v5948 = vlaneseq
      %v5949 = vshrl.u32 %v5948, 7
      %v5950 = vsub.s32 %v5947, %v5949
      %v5951 = vrot.slane %v5943, %v5950
      %v5953 = vunpack.c.l.s4 1934713408
      %v5954 = vunpack.c.0.s8 %v5953
      %v5955 = vlaneseq
      %v5956 = vshrl.u32 %v5955, 7
      %v5957 = vsub.s32 %v5954, %v5956
      %v5958 = vrot.slane %v5944, %v5957
      %v5959 = vcombine.high %v5935, 0
      %v5960 = vcombine.high %v5942, 0
      %v5961 = vcombine.high %v5951, 0
      %v5962 = vcombine.high %v5958, 0
      %v5963 = vcombine.high %v5817, %v707
      %v5965 = vunpack.c.l.s4 1983009808
      %v5966 = vunpack.c.0.s8 %v5965
      %v5967 = vlaneseq
      %v5968 = vshrl.u32 %v5967, 7
      %v5969 = vsub.s32 %v5966, %v5968
      %v5970 = vrot.slane %v5817, %v5969
      %v5972 = vunpack.c.l.s4 1983009808
      %v5973 = vunpack.c.0.s8 %v5972
      %v5974 = vlaneseq
      %v5975 = vshrl.u32 %v5974, 7
      %v5976 = vsub.s32 %v5973, %v5975
      %v5977 = vrot.slane %v5963, %v5976
      %v5978 = vcombine.high %v5825, %v707
      %v5980 = vunpack.c.l.s4 1983009808
      %v5981 = vunpack.c.0.s8 %v5980
      %v5982 = vlaneseq
      %v5983 = vshrl.u32 %v5982, 7
      %v5984 = vsub.s32 %v5981, %v5983
      %v5985 = vrot.slane %v5825, %v5984
      %v5987 = vunpack.c.l.s4 1983009808
      %v5988 = vunpack.c.0.s8 %v5987
      %v5989 = vlaneseq
      %v5990 = vshrl.u32 %v5989, 7
      %v5991 = vsub.s32 %v5988, %v5990
      %v5992 = vrot.slane %v5978, %v5991
      %v5993 = vcombine.low %v5970, %v5985
      %v5994 = vcombine.high %v5970, %v5985
      %v5996 = vunpack.c.l.s4 1934713408
      %v5997 = vunpack.c.0.s8 %v5996
      %v5998 = vlaneseq
      %v5999 = vshrl.u32 %v5998, 7
      %v6000 = vsub.s32 %v5997, %v5999
      %v6001 = vrot.slane %v5993, %v6000
      %v6003 = vunpack.c.l.s4 1934713408
      %v6004 = vunpack.c.0.s8 %v6003
      %v6005 = vlaneseq
      %v6006 = vshrl.u32 %v6005, 7
      %v6007 = vsub.s32 %v6004, %v6006
      %v6008 = vrot.slane %v5994, %v6007
      %v6009 = vcombine.low %v5977, %v5992
      %v6010 = vcombine.high %v5977, %v5992
      %v6012 = vunpack.c.l.s4 1934713408
      %v6013 = vunpack.c.0.s8 %v6012
      %v6014 = vlaneseq
      %v6015 = vshrl.u32 %v6014, 7
      %v6016 = vsub.s32 %v6013, %v6015
      %v6017 = vrot.slane %v6009, %v6016
      %v6019 = vunpack.c.l.s4 1934713408
      %v6020 = vunpack.c.0.s8 %v6019
      %v6021 = vlaneseq
      %v6022 = vshrl.u32 %v6021, 7
      %v6023 = vsub.s32 %v6020, %v6022
      %v6024 = vrot.slane %v6010, %v6023
      %v6025 = vcombine.high %v6001, 0
      %v6026 = vcombine.high %v6008, 0
      %v6027 = vcombine.high %v6017, 0
      %v6028 = vcombine.high %v6024, 0
      %v6029 = vcombine.high %v5821, %v710
      %v6031 = vunpack.c.l.s4 1983009808
      %v6032 = vunpack.c.0.s8 %v6031
      %v6033 = vlaneseq
      %v6034 = vshrl.u32 %v6033, 7
      %v6035 = vsub.s32 %v6032, %v6034
      %v6036 = vrot.slane %v5821, %v6035
      %v6038 = vunpack.c.l.s4 1983009808
      %v6039 = vunpack.c.0.s8 %v6038
      %v6040 = vlaneseq
      %v6041 = vshrl.u32 %v6040, 7
      %v6042 = vsub.s32 %v6039, %v6041
      %v6043 = vrot.slane %v6029, %v6042
      %v6044 = vcombine.high %v5829, %v710
      %v6046 = vunpack.c.l.s4 1983009808
      %v6047 = vunpack.c.0.s8 %v6046
      %v6048 = vlaneseq
      %v6049 = vshrl.u32 %v6048, 7
      %v6050 = vsub.s32 %v6047, %v6049
      %v6051 = vrot.slane %v5829, %v6050
      %v6053 = vunpack.c.l.s4 1983009808
      %v6054 = vunpack.c.0.s8 %v6053
      %v6055 = vlaneseq
      %v6056 = vshrl.u32 %v6055, 7
      %v6057 = vsub.s32 %v6054, %v6056
      %v6058 = vrot.slane %v6044, %v6057
      %v6059 = vcombine.low %v6036, %v6051
      %v6060 = vcombine.high %v6036, %v6051
      %v6062 = vunpack.c.l.s4 1934713408
      %v6063 = vunpack.c.0.s8 %v6062
      %v6064 = vlaneseq
      %v6065 = vshrl.u32 %v6064, 7
      %v6066 = vsub.s32 %v6063, %v6065
      %v6067 = vrot.slane %v6059, %v6066
      %v6069 = vunpack.c.l.s4 1934713408
      %v6070 = vunpack.c.0.s8 %v6069
      %v6071 = vlaneseq
      %v6072 = vshrl.u32 %v6071, 7
      %v6073 = vsub.s32 %v6070, %v6072
      %v6074 = vrot.slane %v6060, %v6073
      %v6075 = vcombine.low %v6043, %v6058
      %v6076 = vcombine.high %v6043, %v6058
      %v6078 = vunpack.c.l.s4 1934713408
      %v6079 = vunpack.c.0.s8 %v6078
      %v6080 = vlaneseq
      %v6081 = vshrl.u32 %v6080, 7
      %v6082 = vsub.s32 %v6079, %v6081
      %v6083 = vrot.slane %v6075, %v6082
      %v6085 = vunpack.c.l.s4 1934713408
      %v6086 = vunpack.c.0.s8 %v6085
      %v6087 = vlaneseq
      %v6088 = vshrl.u32 %v6087, 7
      %v6089 = vsub.s32 %v6086, %v6088
      %v6090 = vrot.slane %v6076, %v6089
      %v6091 = vcombine.high %v6067, 0
      %v6092 = vcombine.high %v6074, 0
      %v6093 = vcombine.high %v6083, 0
      %v6094 = vcombine.high %v6090, 0
      %6096 = vrot.lane.b32.xlu0 %v5935, 32
      %v6097 = vpop.permute.xlu0 %6096
      %6099 = vrot.lane.b32.xlu0 %v5893, 64
      %v6100 = vpop.permute.xlu0 %6099
      %6102 = vrot.lane.b32.xlu0 %v5959, 96
      %v6103 = vpop.permute.xlu0 %6102
      %6105 = vrot.lane.b32.xlu0 %v5942, 32
      %v6106 = vpop.permute.xlu0 %6105
      %6108 = vrot.lane.b32.xlu0 %v5894, 64
      %v6109 = vpop.permute.xlu0 %6108
      %6111 = vrot.lane.b32.xlu0 %v5960, 96
      %v6112 = vpop.permute.xlu0 %6111
      %6114 = vrot.lane.b32.xlu0 %v5951, 32
      %v6115 = vpop.permute.xlu0 %6114
      %6117 = vrot.lane.b32.xlu0 %v5895, 64
      %v6118 = vpop.permute.xlu0 %6117
      %6120 = vrot.lane.b32.xlu0 %v5961, 96
      %v6121 = vpop.permute.xlu0 %6120
      %6123 = vrot.lane.b32.xlu0 %v5958, 32
      %v6124 = vpop.permute.xlu0 %6123
      %6126 = vrot.lane.b32.xlu0 %v5896, 64
      %v6127 = vpop.permute.xlu0 %6126
      %6129 = vrot.lane.b32.xlu0 %v5962, 96
      %v6130 = vpop.permute.xlu0 %6129
      %6132 = vrot.lane.b32.xlu0 %v6067, 32
      %v6133 = vpop.permute.xlu0 %6132
      %6135 = vrot.lane.b32.xlu0 %v6025, 64
      %v6136 = vpop.permute.xlu0 %6135
      %6138 = vrot.lane.b32.xlu0 %v6091, 96
      %v6139 = vpop.permute.xlu0 %6138
      %6141 = vrot.lane.b32.xlu0 %v6074, 32
      %v6142 = vpop.permute.xlu0 %6141
      %6144 = vrot.lane.b32.xlu0 %v6026, 64
      %v6145 = vpop.permute.xlu0 %6144
      %6147 = vrot.lane.b32.xlu0 %v6092, 96
      %v6148 = vpop.permute.xlu0 %6147
      %6150 = vrot.lane.b32.xlu0 %v6083, 32
      %v6151 = vpop.permute.xlu0 %6150
      %6153 = vrot.lane.b32.xlu0 %v6027, 64
      %v6154 = vpop.permute.xlu0 %6153
      %6156 = vrot.lane.b32.xlu0 %v6093, 96
      %v6157 = vpop.permute.xlu0 %6156
      %6159 = vrot.lane.b32.xlu0 %v6090, 32
      %v6160 = vpop.permute.xlu0 %6159
      %6162 = vrot.lane.b32.xlu0 %v6028, 64
      %v6163 = vpop.permute.xlu0 %6162
      %6165 = vrot.lane.b32.xlu0 %v6094, 96
      %v6166 = vpop.permute.xlu0 %6165
      %v6169 = vsel %vm1064, %v5869, %v6097
      %v6171 = vsel %vm1068, %v6169, %v6100
      %v6173 = vsel %vm1071, %v6171, %v6103
      %v6176 = vsel %vm1064, %v5876, %v6106
      %v6178 = vsel %vm1068, %v6176, %v6109
      %v6180 = vsel %vm1071, %v6178, %v6112
      %v6183 = vsel %vm1064, %v5885, %v6115
      %v6185 = vsel %vm1068, %v6183, %v6118
      %v6187 = vsel %vm1071, %v6185, %v6121
      %v6190 = vsel %vm1064, %v5892, %v6124
      %v6192 = vsel %vm1068, %v6190, %v6127
      %v6194 = vsel %vm1071, %v6192, %v6130
      %v6197 = vsel %vm1064, %v6001, %v6133
      %v6199 = vsel %vm1068, %v6197, %v6136
      %v6201 = vsel %vm1071, %v6199, %v6139
      %v6204 = vsel %vm1064, %v6008, %v6142
      %v6206 = vsel %vm1068, %v6204, %v6145
      %v6208 = vsel %vm1071, %v6206, %v6148
      %v6211 = vsel %vm1064, %v6017, %v6151
      %v6213 = vsel %vm1068, %v6211, %v6154
      %v6215 = vsel %vm1071, %v6213, %v6157
      %v6218 = vsel %vm1064, %v6024, %v6160
      %v6220 = vsel %vm1068, %v6218, %v6163
      %v6222 = vsel %vm1071, %v6220, %v6166
      %v6224 = vsel %vm1571, %v689, 0
      %v6226 = vsel %vm1575, %v6173, 0
      %v6228 = vsel %vm1575, %v6180, 0
      %v6230 = vsel %vm1575, %v6187, 0
      %v6232 = vsel %vm1575, %v6194, 0
      %v6234 = vsel %vm1575, %v6201, 0
      %v6236 = vsel %vm1575, %v6208, 0
      %v6238 = vsel %vm1575, %v6215, 0
      %v6240 = vsel %vm1575, %v6222, 0
      %6242 = vmatprep.subr.bf16.mxu0 %v6228
      %6243 = vmatpush1.bf16.msra.mxu0 %v6226
      %6244 = vmatprep.subr.bf16.mxu0 0
      %6245 = vmatpush1.bf16.msra.mxu0 0
      %6246 = vmatprep.subr.bf16.mxu0 0
      %6247 = vmatpush1.bf16.msra.mxu0 0
      %6248 = vmatprep.subr.bf16.mxu0 0
      %6249 = vmatpush1.bf16.msra.mxu0 0
      %6250 = vmatprep.subr.bf16.mxu0 0
      %6251 = vmatpush1.bf16.msra.mxu0 0
      %6252 = vmatprep.subr.bf16.mxu0 0
      %6253 = vmatpush1.bf16.msra.mxu0 0
      %6254 = vmatprep.subr.bf16.mxu0 0
      %6255 = vmatpush1.bf16.msra.mxu0 0
      %6256 = vmatprep.subr.bf16.mxu0 0
      %6257 = vmatpush1.bf16.msra.mxu0 0
      %6258 = vmatprep.subr.bf16.mxu0 0
      %6259 = vmatpush1.bf16.msra.mxu0 0
      %6260 = vmatprep.subr.bf16.mxu0 0
      %6261 = vmatpush1.bf16.msra.mxu0 0
      %6262 = vmatprep.subr.bf16.mxu0 0
      %6263 = vmatpush1.bf16.msra.mxu0 0
      %6264 = vmatprep.subr.bf16.mxu0 0
      %6265 = vmatpush1.bf16.msra.mxu0 0
      %6266 = vmatprep.subr.bf16.mxu0 0
      %6267 = vmatpush1.bf16.msra.mxu0 0
      %6268 = vmatprep.subr.bf16.mxu0 0
      %6269 = vmatpush1.bf16.msra.mxu0 0
      %6270 = vmatprep.subr.bf16.mxu0 0
      %6271 = vmatpush1.bf16.msra.mxu0 0
      %6272 = vmatprep.subr.bf16.mxu0 0
      %6273 = vmatpush1.bf16.msra.mxu0 0
      %6274 = vmatprep.mubr.bf16.mxu0 0
      %6275 = vmatmul.mubr.bf16.gmra.mrb[0].mxu0 %v6224
      %v6276 = vpop.f32.mrb[0].mxu0
      %v6277 = vadd.f32 0.0, %v6276
      %v6278 = vpop.f32.mrb[0].mxu0
      %v6279 = vadd.f32 0.0, %v6278
      %v6280 = vpop.f32.mrb[0].mxu0
      %v6281 = vpop.f32.mrb[0].mxu0
      %6282 = vdwg.mxu0
      %6283 = vmatprep.subr.bf16.mxu0 %v6232
      %6284 = vmatpush1.bf16.msra.mxu0 %v6230
      %6285 = vmatprep.subr.bf16.mxu0 0
      %6286 = vmatpush1.bf16.msra.mxu0 0
      %6287 = vmatprep.subr.bf16.mxu0 0
      %6288 = vmatpush1.bf16.msra.mxu0 0
      %6289 = vmatprep.subr.bf16.mxu0 0
      %6290 = vmatpush1.bf16.msra.mxu0 0
      %6291 = vmatprep.subr.bf16.mxu0 0
      %6292 = vmatpush1.bf16.msra.mxu0 0
      %6293 = vmatprep.subr.bf16.mxu0 0
      %6294 = vmatpush1.bf16.msra.mxu0 0
      %6295 = vmatprep.subr.bf16.mxu0 0
      %6296 = vmatpush1.bf16.msra.mxu0 0
      %6297 = vmatprep.subr.bf16.mxu0 0
      %6298 = vmatpush1.bf16.msra.mxu0 0
      %6299 = vmatprep.subr.bf16.mxu0 0
      %6300 = vmatpush1.bf16.msra.mxu0 0
      %6301 = vmatprep.subr.bf16.mxu0 0
      %6302 = vmatpush1.bf16.msra.mxu0 0
      %6303 = vmatprep.subr.bf16.mxu0 0
      %6304 = vmatpush1.bf16.msra.mxu0 0
      %6305 = vmatprep.subr.bf16.mxu0 0
      %6306 = vmatpush1.bf16.msra.mxu0 0
      %6307 = vmatprep.subr.bf16.mxu0 0
      %6308 = vmatpush1.bf16.msra.mxu0 0
      %6309 = vmatprep.subr.bf16.mxu0 0
      %6310 = vmatpush1.bf16.msra.mxu0 0
      %6311 = vmatprep.subr.bf16.mxu0 0
      %6312 = vmatpush1.bf16.msra.mxu0 0
      %6313 = vmatprep.subr.bf16.mxu0 0
      %6314 = vmatpush1.bf16.msra.mxu0 0
      %6315 = vmatprep.mubr.bf16.mxu0 0
      %6316 = vmatmul.mubr.bf16.gmra.mrb[0].mxu0 %v6224
      %v6317 = vpop.f32.mrb[0].mxu0
      %v6318 = vadd.f32 0.0, %v6317
      %v6319 = vpop.f32.mrb[0].mxu0
      %v6320 = vadd.f32 0.0, %v6319
      %v6321 = vpop.f32.mrb[0].mxu0
      %v6322 = vpop.f32.mrb[0].mxu0
      %6323 = vdwg.mxu0
      %6324 = vmatprep.subr.bf16.mxu0 %v6236
      %6325 = vmatpush1.bf16.msra.mxu0 %v6234
      %6326 = vmatprep.subr.bf16.mxu0 0
      %6327 = vmatpush1.bf16.msra.mxu0 0
      %6328 = vmatprep.subr.bf16.mxu0 0
      %6329 = vmatpush1.bf16.msra.mxu0 0
      %6330 = vmatprep.subr.bf16.mxu0 0
      %6331 = vmatpush1.bf16.msra.mxu0 0
      %6332 = vmatprep.subr.bf16.mxu0 0
      %6333 = vmatpush1.bf16.msra.mxu0 0
      %6334 = vmatprep.subr.bf16.mxu0 0
      %6335 = vmatpush1.bf16.msra.mxu0 0
      %6336 = vmatprep.subr.bf16.mxu0 0
      %6337 = vmatpush1.bf16.msra.mxu0 0
      %6338 = vmatprep.subr.bf16.mxu0 0
      %6339 = vmatpush1.bf16.msra.mxu0 0
      %6340 = vmatprep.subr.bf16.mxu0 0
      %6341 = vmatpush1.bf16.msra.mxu0 0
      %6342 = vmatprep.subr.bf16.mxu0 0
      %6343 = vmatpush1.bf16.msra.mxu0 0
      %6344 = vmatprep.subr.bf16.mxu0 0
      %6345 = vmatpush1.bf16.msra.mxu0 0
      %6346 = vmatprep.subr.bf16.mxu0 0
      %6347 = vmatpush1.bf16.msra.mxu0 0
      %6348 = vmatprep.subr.bf16.mxu0 0
      %6349 = vmatpush1.bf16.msra.mxu0 0
      %6350 = vmatprep.subr.bf16.mxu0 0
      %6351 = vmatpush1.bf16.msra.mxu0 0
      %6352 = vmatprep.subr.bf16.mxu0 0
      %6353 = vmatpush1.bf16.msra.mxu0 0
      %6354 = vmatprep.subr.bf16.mxu0 0
      %6355 = vmatpush1.bf16.msra.mxu0 0
      %6356 = vmatprep.mubr.bf16.mxu0 0
      %6357 = vmatmul.mubr.bf16.gmra.mrb[0].mxu0 %v6224
      %v6358 = vpop.f32.mrb[0].mxu0
      %v6359 = vadd.f32 0.0, %v6358
      %v6360 = vpop.f32.mrb[0].mxu0
      %v6361 = vadd.f32 0.0, %v6360
      %v6362 = vpop.f32.mrb[0].mxu0
      %v6363 = vpop.f32.mrb[0].mxu0
      %6364 = vdwg.mxu0
      %6365 = vmatprep.subr.bf16.mxu0 %v6240
      %6366 = vmatpush1.bf16.msra.mxu0 %v6238
      %6367 = vmatprep.subr.bf16.mxu0 0
      %6368 = vmatpush1.bf16.msra.mxu0 0
      %6369 = vmatprep.subr.bf16.mxu0 0
      %6370 = vmatpush1.bf16.msra.mxu0 0
      %6371 = vmatprep.subr.bf16.mxu0 0
      %6372 = vmatpush1.bf16.msra.mxu0 0
      %6373 = vmatprep.subr.bf16.mxu0 0
      %6374 = vmatpush1.bf16.msra.mxu0 0
      %6375 = vmatprep.subr.bf16.mxu0 0
      %6376 = vmatpush1.bf16.msra.mxu0 0
      %6377 = vmatprep.subr.bf16.mxu0 0
      %6378 = vmatpush1.bf16.msra.mxu0 0
      %6379 = vmatprep.subr.bf16.mxu0 0
      %6380 = vmatpush1.bf16.msra.mxu0 0
      %6381 = vmatprep.subr.bf16.mxu0 0
      %6382 = vmatpush1.bf16.msra.mxu0 0
      %6383 = vmatprep.subr.bf16.mxu0 0
      %6384 = vmatpush1.bf16.msra.mxu0 0
      %6385 = vmatprep.subr.bf16.mxu0 0
      %6386 = vmatpush1.bf16.msra.mxu0 0
      %6387 = vmatprep.subr.bf16.mxu0 0
      %6388 = vmatpush1.bf16.msra.mxu0 0
      %6389 = vmatprep.subr.bf16.mxu0 0
      %6390 = vmatpush1.bf16.msra.mxu0 0
      %6391 = vmatprep.subr.bf16.mxu0 0
      %6392 = vmatpush1.bf16.msra.mxu0 0
      %6393 = vmatprep.subr.bf16.mxu0 0
      %6394 = vmatpush1.bf16.msra.mxu0 0
      %6395 = vmatprep.subr.bf16.mxu0 0
      %6396 = vmatpush1.bf16.msra.mxu0 0
      %6397 = vmatprep.mubr.bf16.mxu0 0
      %6398 = vmatmul.mubr.bf16.gmra.mrb[0].mxu0 %v6224
      %v6399 = vpop.f32.mrb[0].mxu0
      %v6400 = vadd.f32 0.0, %v6399
      %v6401 = vpop.f32.mrb[0].mxu0
      %v6402 = vadd.f32 0.0, %v6401
      %v6403 = vpop.f32.mrb[0].mxu0
      %v6404 = vpop.f32.mrb[0].mxu0
      %6405 = vdwg.mxu0
      %v6406 = vadd.f32 %v5775, %v6277
      %v6407 = vadd.f32 %v5776, %v6279
      %v6408 = vadd.f32 %v5777, %v6318
      %v6409 = vadd.f32 %v5778, %v6320
      %v6410 = vadd.f32 %v5779, %v6359
      %v6411 = vadd.f32 %v5780, %v6361
      %v6412 = vadd.f32 %v5781, %v6400
      %v6413 = vadd.f32 %v5782, %v6402
      %v6414 = vadd.f32 %v6406, %v6407
      %v6415 = vadd.f32 %v6414, %v6408
      %v6416 = vadd.f32 %v6415, %v6409
      %v6417 = vadd.f32 %v6416, %v6410
      %v6418 = vadd.f32 %v6417, %v6411
      %v6419 = vadd.f32 %v6418, %v6412
      %v6420 = vadd.f32 %v6419, %v6413
      %6421 = vadd.xlane.f32.xlu0 %v6420
      %v6422 = vpop.xlane.xlu0 %6421
      %v6423 = vrcp.pop 1024.0
      %v6424 = vmul.f32 %v6422, %v6423
      %v6425 = vsub.f32 %v6406, %v6424
      %v6426 = vsub.f32 %v6407, %v6424
      %v6427 = vsub.f32 %v6408, %v6424
      %v6428 = vsub.f32 %v6409, %v6424
      %v6429 = vsub.f32 %v6410, %v6424
      %v6430 = vsub.f32 %v6411, %v6424
      %v6431 = vsub.f32 %v6412, %v6424
      %v6432 = vsub.f32 %v6413, %v6424
      %vm6433 = vcmask 7168
      %6434 = vst.msk [vmem:[%s229] sm:$0xff] %vm6433, %v6424
      %v6435 = vmul.f32 %v6425, %v6425
      %v6436 = vmul.f32 %v6426, %v6426
      %v6437 = vmul.f32 %v6427, %v6427
      %v6438 = vmul.f32 %v6428, %v6428
      %v6439 = vmul.f32 %v6429, %v6429
      %v6440 = vmul.f32 %v6430, %v6430
      %v6441 = vmul.f32 %v6431, %v6431
      %v6442 = vmul.f32 %v6432, %v6432
      %v6443 = vadd.f32 %v6435, %v6436
      %v6444 = vadd.f32 %v6443, %v6437
      %v6445 = vadd.f32 %v6444, %v6438
      %v6446 = vadd.f32 %v6445, %v6439
      %v6447 = vadd.f32 %v6446, %v6440
      %v6448 = vadd.f32 %v6447, %v6441
      %v6449 = vadd.f32 %v6448, %v6442
      %6450 = vadd.xlane.f32.xlu0 %v6449
      %v6451 = vpop.xlane.xlu0 %6450
      %6452 = vst.msk [vmem:[%s233] sm:$0xff] %vm6433, %v6451
      %p6453 = scmp.lt.s32.totalorder %s17, 1
      %s6454 = scalar_select %p6453, %s17, 1
      %s6455 = smul.addr %s6454, 8
      %s6456 = scalar_lea.vmem %s4, %s6455
      %p6457 = scmp.lt.s32.totalorder %s17, 1
      %s6458 = scalar_select %p6457, %s17, 1
      %s6459 = smul.addr %s6458, 8
      %s6460 = scalar_lea.vmem %s5, %s6459
      // Predicated region
      $region37: #{tpu_custom_call.1} parent=35 // pred_check
        %p6461 = pneg %p124
      $region38: #{tpu_custom_call.1} parent=35 // pred_check_branch
        %6463 = sbr.rel (%p6461) target = $region40
      $region39: #{tpu_custom_call.1} parent=35 // pred_region
        _
      $region40: #{tpu_custom_call.1} parent=35 // pred_fallthru
        _
      // Predicated region
      $region41: #{tpu_custom_call.1} parent=35 // pred_check
        %p6464 = pneg %p150
      $region42: #{tpu_custom_call.1} parent=35 // pred_check_branch
        %6466 = sbr.rel (%p6464) target = $region44
      $region43: #{tpu_custom_call.1} parent=35 // pred_region
        _
      $region44: #{tpu_custom_call.1} parent=35 // pred_fallthru
        _
    $region36: #{tpu_custom_call.1} parent=5 // pred_fallthru
      _
    %p6467 = scmp.le.s32.totalorder 2, %s12
    // Predicated region
    $region45: #{tpu_custom_call.1} parent=5 // pred_check
      %p6468 = pneg %p6467
    $region46: #{tpu_custom_call.1} parent=5 // pred_check_branch
      %6470 = sbr.rel (%p6468) target = $region48
    $region47: #{tpu_custom_call.1} parent=5 // pred_region
      %s6471 = ssub.s32 %s12, 2
      // Predicated region
      $region49: #{tpu_custom_call.1} parent=47 // pred_check
        %p6472 = pneg %p130
      $region50: #{tpu_custom_call.1} parent=47 // pred_check_branch
        %6474 = sbr.rel (%p6472) target = $region52
      $region51: #{tpu_custom_call.1} parent=47 // pred_region
        %p6475 = scmp.lt.s32.totalorder %s18, 1
        %s6476 = scalar_select %p6475, %s18, 1
        %s6477 = smul.addr %s6476, 8
        %s6478 = scalar_lea.vmem %s4, %s6477
      $region52: #{tpu_custom_call.1} parent=47 // pred_fallthru
        _
      // Predicated region
      $region53: #{tpu_custom_call.1} parent=47 // pred_check
        %p6479 = pneg %p156
      $region54: #{tpu_custom_call.1} parent=47 // pred_check_branch
        %6481 = sbr.rel (%p6479) target = $region56
      $region55: #{tpu_custom_call.1} parent=47 // pred_region
        %p6482 = scmp.lt.s32.totalorder %s18, 1
        %s6483 = scalar_select %p6482, %s18, 1
        %s6484 = smul.addr %s6483, 8
        %s6485 = scalar_lea.vmem %s5, %s6484
      $region56: #{tpu_custom_call.1} parent=47 // pred_fallthru
        _
    $region48: #{tpu_custom_call.1} parent=5 // pred_fallthru
      _
  $region6: #{tpu_custom_call.1} parent=0 // loop_footer
    %s16 = sadd.s32 1, %s12
  $region7: #{tpu_custom_call.1} parent=0 // loop_footer_branch
    %11 = sbr.rel target = $region3
  $region8: #{tpu_custom_call.1} parent=0 // loop_exit
    _

</llo_original>
